<compile_context>
chip_gen: v7x
topology: tpu7x:2x2x1
jax: 0.10.0
libtpu: 0.0.40
codegen_flags: <defaults>
</compile_context>

<pallas_src>
import math

import jax
import jax.numpy as jnp
from jax.experimental import pallas as pl
from jax.experimental.pallas import tpu as pltpu

TM = 512  # batch rows per grid step


def actor_kernel(x_ref, w1_ref, b1_ref, w2_ref, b2_ref, w3_ref, b3_ref,
                 w4_ref, b4_ref, o_ref):
    # fc1 + relu  (MXU, bf16 inputs, f32 accumulate)
    h = jnp.dot(x_ref[...].astype(jnp.bfloat16), w1_ref[...],
                preferred_element_type=jnp.float32)
    h = jnp.maximum(h + b1_ref[...], 0.0)
    # fc2 + relu
    h = jnp.dot(h.astype(jnp.bfloat16), w2_ref[...],
                preferred_element_type=jnp.float32)
    h = jnp.maximum(h + b2_ref[...], 0.0)
    # fc3 + relu
    h = jnp.dot(h.astype(jnp.bfloat16), w3_ref[...],
                preferred_element_type=jnp.float32)
    h = jnp.maximum(h + b3_ref[...], 0.0)
    # fc4 (N=1): VPU multiply + lane reduction instead of an N=1 MXU matmul.
    w4_row = w4_ref[...].astype(jnp.float32)                      # (1, 128)
    pre = jnp.sum(h * w4_row, axis=-1, keepdims=True) + b4_ref[...]  # (TM, 1)
    o_ref[...] = jnp.tanh(pre)


def actor_forward(x, params):
    (w1, b1, w2, b2, w3, b3, w4, b4) = params
    B = x.shape[0]
    nt = pl.cdiv(B, TM)
    b_pad = nt * TM
    if b_pad != B:
        x = jnp.pad(x, ((0, b_pad - B), (0, 0)))

    flops = 2 * b_pad * (10 * 512 + 512 * 512 + 512 * 128 + 128)
    bytes_accessed = int(x.size * 4
                         + sum(int(p.size) * p.dtype.itemsize for p in params)
                         + b_pad * 4)

    const = lambda i: (0, 0)  # weights/biases: same block every step -> resident
    out = pl.pallas_call(
        actor_kernel,
        out_shape=jax.ShapeDtypeStruct((b_pad, 1), jnp.float32),
        grid=(nt,),
        in_specs=[
            pl.BlockSpec((TM, 10), lambda i: (i, 0)),   # x tile
            pl.BlockSpec((10, 512), const),             # w1
            pl.BlockSpec((1, 512), const),              # b1
            pl.BlockSpec((512, 512), const),            # w2
            pl.BlockSpec((1, 512), const),              # b2
            pl.BlockSpec((512, 128), const),            # w3
            pl.BlockSpec((1, 128), const),              # b3
            pl.BlockSpec((1, 128), const),              # w4 (row form)
            pl.BlockSpec((1, 1), const),                # b4
        ],
        out_specs=pl.BlockSpec((TM, 1), lambda i: (i, 0)),
        compiler_params=pltpu.CompilerParams(
            dimension_semantics=("parallel",)),
        cost_estimate=pl.CostEstimate(
            flops=flops, transcendentals=b_pad, bytes_accessed=bytes_accessed),
    )(x, w1, b1, w2, b2, w3, b3, w4, b4)
    return out[:B]


def kaiming_uniform(key, fan_in, fan_out):
    # matches torch.nn.init.kaiming_uniform_ defaults (a=0, fan_in, leaky_relu)
    gain = math.sqrt(2.0)
    bound = gain * math.sqrt(3.0 / fan_in)
    # stored as (in, out); PyTorch weight is (out, in) with same fan_in stats
    return jax.random.uniform(key, (fan_in, fan_out), jnp.float32,
                              minval=-bound, maxval=bound)


def xavier_uniform(key, fan_in, fan_out):
    bound = math.sqrt(6.0 / (fan_in + fan_out))
    return jax.random.uniform(key, (fan_in, fan_out), jnp.float32,
                              minval=-bound, maxval=bound)


def init_params(key):
    k1, k2, k3, k4 = jax.random.split(key, 4)
    # Weights stored transposed (in, out) and in bf16; biases in f32.
    w1 = kaiming_uniform(k1, 10, 512).astype(jnp.bfloat16)
    b1 = jnp.zeros((1, 512), jnp.float32)
    w2 = kaiming_uniform(k2, 512, 512).astype(jnp.bfloat16)
    b2 = jnp.zeros((1, 512), jnp.float32)
    w3 = kaiming_uniform(k3, 512, 128).astype(jnp.bfloat16)
    b3 = jnp.zeros((1, 128), jnp.float32)
    # fc4 kept as a (1, 128) row for the in-kernel VPU reduction.
    w4 = xavier_uniform(k4, 128, 1).reshape(1, 128).astype(jnp.bfloat16)
    b4 = jnp.zeros((1, 1), jnp.float32)
    return (w1, b1, w2, b2, w3, b3, w4, b4)


if __name__ == "__main__":
    key = jax.random.PRNGKey(0)
    pkey, xkey = jax.random.split(key)
    params = init_params(pkey)

    B = 8
    x = jax.random.normal(xkey, (B, 10), jnp.float32)

    out = actor_forward(x, params)
    jax.block_until_ready(out)

    # sanity check against a plain-JAX f32 reference (bf16 weights upcast);
    # tolerance loosened for bf16 activation rounding inside the kernel.
    w1, b1, w2, b2, w3, b3, w4, b4 = params
    ref = jnp.maximum(x @ w1.astype(jnp.float32) + b1, 0)
    ref = jnp.maximum(ref @ w2.astype(jnp.float32) + b2, 0)
    ref = jnp.maximum(ref @ w3.astype(jnp.float32) + b3, 0)
    ref = jnp.tanh(ref @ w4.astype(jnp.float32).T + b4)
    assert out.shape == (B, 1)
    assert jnp.allclose(out, ref, atol=2e-2), "mismatch vs reference"

    print("KERNEL_OK")
</pallas_src>

<mosaic_0001>
module attributes {stable_mosaic.version = 11 : i64} {
  func.func @actor_kernel(%arg0: i32, %arg1: memref<512x10xf32, #tpu.memory_space<vmem>>, %arg2: memref<10x512xbf16, #tpu.memory_space<vmem>>, %arg3: memref<1x512xf32, #tpu.memory_space<vmem>>, %arg4: memref<512x512xbf16, #tpu.memory_space<vmem>>, %arg5: memref<1x512xf32, #tpu.memory_space<vmem>>, %arg6: memref<512x128xbf16, #tpu.memory_space<vmem>>, %arg7: memref<1x128xf32, #tpu.memory_space<vmem>>, %arg8: memref<1x128xbf16, #tpu.memory_space<vmem>>, %arg9: memref<1x1xf32, #tpu.memory_space<vmem>>, %arg10: memref<512x1xf32, #tpu.memory_space<vmem>>) attributes {dimension_semantics = [#tpu.dimension_semantics<parallel>], iteration_bounds = array<i64: 1>, scalar_prefetch = 0 : i64, scratch_operands = 0 : i64, tpu.core_type = #tpu.core_type<tc>, window_params = [{transform_indices = @transform_0, window_bounds = array<i64: 512, 10>}, {pipeline_mode = #tpu.pipeline_mode<synchronous>, transform_indices = @transform_1, window_bounds = array<i64: 10, 512>}, {pipeline_mode = #tpu.pipeline_mode<synchronous>, transform_indices = @transform_2, window_bounds = array<i64: 1, 512>}, {pipeline_mode = #tpu.pipeline_mode<synchronous>, transform_indices = @transform_3, window_bounds = array<i64: 512, 512>}, {pipeline_mode = #tpu.pipeline_mode<synchronous>, transform_indices = @transform_4, window_bounds = array<i64: 1, 512>}, {pipeline_mode = #tpu.pipeline_mode<synchronous>, transform_indices = @transform_5, window_bounds = array<i64: 512, 128>}, {pipeline_mode = #tpu.pipeline_mode<synchronous>, transform_indices = @transform_6, window_bounds = array<i64: 1, 128>}, {pipeline_mode = #tpu.pipeline_mode<synchronous>, transform_indices = @transform_7, window_bounds = array<i64: 1, 128>}, {pipeline_mode = #tpu.pipeline_mode<synchronous>, transform_indices = @transform_8, window_bounds = array<i64: 1, 1>}, {transform_indices = @transform_9, window_bounds = array<i64: 512, 1>}]} {
    %c0 = arith.constant 0 : index
    %c0_0 = arith.constant 0 : index
    %0 = vector.load %arg1[%c0, %c0_0] : memref<512x10xf32, #tpu.memory_space<vmem>>, vector<512x10xf32>
    %1 = arith.truncf %0 : vector<512x10xf32> to vector<512x10xbf16>
    %c0_1 = arith.constant 0 : index
    %c0_2 = arith.constant 0 : index
    %2 = vector.load %arg2[%c0_1, %c0_2] : memref<10x512xbf16, #tpu.memory_space<vmem>>, vector<10x512xbf16>
    %cst = arith.constant dense<0.000000e+00> : vector<512x512xf32>
    %3 = tpu.matmul %1, %2, %cst {dimension_numbers = #tpu.dot_dimension_numbers<[1], [0], [0], [1], [0, 0, 1, 1], [], []>} : vector<512x10xbf16>, vector<10x512xbf16>, vector<512x512xf32> -> vector<512x512xf32>
    %c0_3 = arith.constant 0 : index
    %c0_4 = arith.constant 0 : index
    %4 = vector.load %arg3[%c0_3, %c0_4] : memref<1x512xf32, #tpu.memory_space<vmem>>, vector<1x512xf32>
    %5 = vector.broadcast %4 : vector<1x512xf32> to vector<512x512xf32>
    %6 = arith.addf %3, %5 : vector<512x512xf32>
    %cst_5 = arith.constant 0.000000e+00 : f32
    %7 = vector.broadcast %cst_5 : f32 to vector<512x512xf32>
    %8 = arith.maximumf %6, %7 : vector<512x512xf32>
    %9 = arith.truncf %8 : vector<512x512xf32> to vector<512x512xbf16>
    %c0_6 = arith.constant 0 : index
    %c0_7 = arith.constant 0 : index
    %10 = vector.load %arg4[%c0_6, %c0_7] : memref<512x512xbf16, #tpu.memory_space<vmem>>, vector<512x512xbf16>
    %cst_8 = arith.constant dense<0.000000e+00> : vector<512x512xf32>
    %11 = tpu.matmul %9, %10, %cst_8 {dimension_numbers = #tpu.dot_dimension_numbers<[1], [0], [0], [1], [0, 0, 1, 1], [], []>} : vector<512x512xbf16>, vector<512x512xbf16>, vector<512x512xf32> -> vector<512x512xf32>
    %c0_9 = arith.constant 0 : index
    %c0_10 = arith.constant 0 : index
    %12 = vector.load %arg5[%c0_9, %c0_10] : memref<1x512xf32, #tpu.memory_space<vmem>>, vector<1x512xf32>
    %13 = vector.broadcast %12 : vector<1x512xf32> to vector<512x512xf32>
    %14 = arith.addf %11, %13 : vector<512x512xf32>
    %cst_11 = arith.constant 0.000000e+00 : f32
    %15 = vector.broadcast %cst_11 : f32 to vector<512x512xf32>
    %16 = arith.maximumf %14, %15 : vector<512x512xf32>
    %17 = arith.truncf %16 : vector<512x512xf32> to vector<512x512xbf16>
    %c0_12 = arith.constant 0 : index
    %c0_13 = arith.constant 0 : index
    %18 = vector.load %arg6[%c0_12, %c0_13] : memref<512x128xbf16, #tpu.memory_space<vmem>>, vector<512x128xbf16>
    %cst_14 = arith.constant dense<0.000000e+00> : vector<512x128xf32>
    %19 = tpu.matmul %17, %18, %cst_14 {dimension_numbers = #tpu.dot_dimension_numbers<[1], [0], [0], [1], [0, 0, 1, 1], [], []>} : vector<512x512xbf16>, vector<512x128xbf16>, vector<512x128xf32> -> vector<512x128xf32>
    %c0_15 = arith.constant 0 : index
    %c0_16 = arith.constant 0 : index
    %20 = vector.load %arg7[%c0_15, %c0_16] : memref<1x128xf32, #tpu.memory_space<vmem>>, vector<1x128xf32>
    %21 = vector.broadcast %20 : vector<1x128xf32> to vector<512x128xf32>
    %22 = arith.addf %19, %21 : vector<512x128xf32>
    %cst_17 = arith.constant 0.000000e+00 : f32
    %23 = vector.broadcast %cst_17 : f32 to vector<512x128xf32>
    %24 = arith.maximumf %22, %23 : vector<512x128xf32>
    %c0_18 = arith.constant 0 : index
    %c0_19 = arith.constant 0 : index
    %25 = vector.load %arg8[%c0_18, %c0_19] : memref<1x128xbf16, #tpu.memory_space<vmem>>, vector<1x128xbf16>
    %26 = arith.extf %25 : vector<1x128xbf16> to vector<1x128xf32>
    %27 = vector.broadcast %26 : vector<1x128xf32> to vector<512x128xf32>
    %28 = arith.mulf %24, %27 : vector<512x128xf32>
    %cst_20 = arith.constant dense<0.000000e+00> : vector<512xf32>
    %29 = vector.multi_reduction <add>, %28, %cst_20 [1] : vector<512x128xf32> to vector<512xf32>
    %30 = vector.shape_cast %29 : vector<512xf32> to vector<512x1xf32>
    %c0_21 = arith.constant 0 : index
    %c0_22 = arith.constant 0 : index
    %31 = vector.load %arg9[%c0_21, %c0_22] : memref<1x1xf32, #tpu.memory_space<vmem>>, vector<1x1xf32>
    %32 = vector.broadcast %31 : vector<1x1xf32> to vector<512x1xf32>
    %33 = arith.addf %30, %32 : vector<512x1xf32>
    %34 = math.tanh %33 : vector<512x1xf32>
    %c0_23 = arith.constant 0 : index
    %c0_24 = arith.constant 0 : index
    %35 = vector.load %arg10[%c0_23, %c0_24] : memref<512x1xf32, #tpu.memory_space<vmem>>, vector<512x1xf32>
    tpu.vector_store %arg10[%c0_23, %c0_24], %34 {strides = array<i32>} : memref<512x1xf32, #tpu.memory_space<vmem>>, vector<512x1xf32>,
    return
  }
  func.func @transform_0(%arg0: i32) -> (i32, i32) {
    %c0_i32 = arith.constant 0 : i32
    %c0_i32_0 = arith.constant 0 : i32
    return %arg0, %c0_i32 : i32, i32
  }
  func.func @transform_1(%arg0: i32) -> (i32, i32) {
    %c0_i32 = arith.constant 0 : i32
    %c0_i32_0 = arith.constant 0 : i32
    %c0_i32_1 = arith.constant 0 : i32
    return %c0_i32, %c0_i32_0 : i32, i32
  }
  func.func @transform_2(%arg0: i32) -> (i32, i32) {
    %c0_i32 = arith.constant 0 : i32
    %c0_i32_0 = arith.constant 0 : i32
    %c0_i32_1 = arith.constant 0 : i32
    return %c0_i32, %c0_i32_0 : i32, i32
  }
  func.func @transform_3(%arg0: i32) -> (i32, i32) {
    %c0_i32 = arith.constant 0 : i32
    %c0_i32_0 = arith.constant 0 : i32
    %c0_i32_1 = arith.constant 0 : i32
    return %c0_i32, %c0_i32_0 : i32, i32
  }
  func.func @transform_4(%arg0: i32) -> (i32, i32) {
    %c0_i32 = arith.constant 0 : i32
    %c0_i32_0 = arith.constant 0 : i32
    %c0_i32_1 = arith.constant 0 : i32
    return %c0_i32, %c0_i32_0 : i32, i32
  }
  func.func @transform_5(%arg0: i32) -> (i32, i32) {
    %c0_i32 = arith.constant 0 : i32
    %c0_i32_0 = arith.constant 0 : i32
    %c0_i32_1 = arith.constant 0 : i32
    return %c0_i32, %c0_i32_0 : i32, i32
  }
  func.func @transform_6(%arg0: i32) -> (i32, i32) {
    %c0_i32 = arith.constant 0 : i32
    %c0_i32_0 = arith.constant 0 : i32
    %c0_i32_1 = arith.constant 0 : i32
    return %c0_i32, %c0_i32_0 : i32, i32
  }
  func.func @transform_7(%arg0: i32) -> (i32, i32) {
    %c0_i32 = arith.constant 0 : i32
    %c0_i32_0 = arith.constant 0 : i32
    %c0_i32_1 = arith.constant 0 : i32
    return %c0_i32, %c0_i32_0 : i32, i32
  }
  func.func @transform_8(%arg0: i32) -> (i32, i32) {
    %c0_i32 = arith.constant 0 : i32
    %c0_i32_0 = arith.constant 0 : i32
    %c0_i32_1 = arith.constant 0 : i32
    return %c0_i32, %c0_i32_0 : i32, i32
  }
  func.func @transform_9(%arg0: i32) -> (i32, i32) {
    %c0_i32 = arith.constant 0 : i32
    %c0_i32_0 = arith.constant 0 : i32
    return %arg0, %c0_i32 : i32, i32
  }
}

</mosaic_0001>

<llo_original>
// kernel: tpu_custom_call.1
$region0: #{tpu_custom_call.1}
  #allocation0 [shape = 'u32[]', space=smem, size = 0x4, offset = 0x4, fixed_abs, tag = 'smem constant byte address 0x4 - core index']
  #allocation1 [shape = 'u32[144,128]{1,0:T(1,128)}', space=vmem, size = 0x12000, scoped, tag = 'internal scratch']
  #allocation2 [shape = 'f32[1,1]{1,0:T(1,128)S(1)}', space=vmem, size = 0x200, scoped, tag = 'scoped memory for tpu_custom_call.1']
  %s0 = inlined_call_operand.vmem [shape: f32[512,10], index: 0, kind: input, shape index: {}]
  %s1 = inlined_call_operand.vmem [shape: bf16[10,512], index: 1, kind: input, shape index: {}]
  %s2 = inlined_call_operand.vmem [shape: f32[1,512], index: 2, kind: input, shape index: {}]
  %s3 = inlined_call_operand.hbm [shape: bf16[512,512], index: 3, kind: input, shape index: {}]
  %s4 = inlined_call_operand.vmem [shape: f32[1,512], index: 4, kind: input, shape index: {}]
  %s5 = inlined_call_operand.vmem [shape: bf16[512,128], index: 5, kind: input, shape index: {}]
  %s6 = inlined_call_operand.vmem [shape: f32[1,128], index: 6, kind: input, shape index: {}]
  %s7 = inlined_call_operand.vmem [shape: bf16[1,128], index: 7, kind: input, shape index: {}]
  %s8 = inlined_call_operand.<no memory space> [shape: f32[1,1], index: 8, kind: input, shape index: {}]
  %s9 = inlined_call_operand.vmem [shape: f32[512,1], index: 9, kind: output, shape index: {}]
  %s10 = sld [smem:[#allocation0]]
  $region50: #{tpu_custom_call.1} parent=0
    _
  %s12 = ssub.s32 1, %s10
  %s13 = scalar_select 0, %s12, %s10
  %v14 = vstv %s8
  %15 = vst [vmem:[#allocation2] sm:$0x1] %v14
  $region1: #{tpu_custom_call.1} parent=0
    #allocation3 [shape = 'u8[524288]{0}', space=vmem, size = 0x80000, scoped, tag = 'input window, operand 3, single buffered']
    #allocation4 [shape = 's32[1]{0}', space=sflag, size = 0x4, scoped, tag = 'scoped memory for tpu_custom_call.1']
    %16 = vsyncpa [#allocation4], 0
    // Predicated region
    $region2: #{tpu_custom_call.1} parent=1 // pred_check
      _
    $region3: #{tpu_custom_call.1} parent=1 // pred_check_branch
      %18 = sbr.rel (0) target = $region5
    $region4: #{tpu_custom_call.1} parent=1 // pred_region
      _
    $region5: #{tpu_custom_call.1} parent=1 // pred_fallthru
      _
    // Predicated region
    $region6: #{tpu_custom_call.1} parent=1 // pred_check
      _
    $region7: #{tpu_custom_call.1} parent=1 // pred_check_branch
      %20 = sbr.rel (0) target = $region9
    $region8: #{tpu_custom_call.1} parent=1 // pred_region
      _
    $region9: #{tpu_custom_call.1} parent=1 // pred_fallthru
      _
    // Predicated region
    $region10: #{tpu_custom_call.1} parent=1 // pred_check
      _
    $region11: #{tpu_custom_call.1} parent=1 // pred_check_branch
      %22 = sbr.rel (0) target = $region13
    $region12: #{tpu_custom_call.1} parent=1 // pred_region
      _
    $region13: #{tpu_custom_call.1} parent=1 // pred_fallthru
      _
    // Predicated region
    $region14: #{tpu_custom_call.1} parent=1 // pred_check
      _
    $region15: #{tpu_custom_call.1} parent=1 // pred_check_branch
      %24 = sbr.rel (0) target = $region17
    $region16: #{tpu_custom_call.1} parent=1 // pred_region
      %s26 = ssub.s32 16384, 16384
      %27 = vsyncadd [#allocation4], %s26
      %s28 = sshll.u32 [#allocation3], 4
      %s29 = int_to_ptr.vmem [resolvable:$true] %s28
      %34 = dma.hbm_to_vmem [thread:$0]  %s3, 16384, %s29, [#allocation4], 256, 256, 16
    $region17: #{tpu_custom_call.1} parent=1 // pred_fallthru
      _
    // Predicated region
    $region18: #{tpu_custom_call.1} parent=1 // pred_check
      _
    $region19: #{tpu_custom_call.1} parent=1 // pred_check_branch
      %36 = sbr.rel (0) target = $region21
    $region20: #{tpu_custom_call.1} parent=1 // pred_region
      _
    $region21: #{tpu_custom_call.1} parent=1 // pred_fallthru
      _
    // Predicated region
    $region22: #{tpu_custom_call.1} parent=1 // pred_check
      _
    $region23: #{tpu_custom_call.1} parent=1 // pred_check_branch
      %38 = sbr.rel (0) target = $region25
    $region24: #{tpu_custom_call.1} parent=1 // pred_region
      _
    $region25: #{tpu_custom_call.1} parent=1 // pred_fallthru
      _
    // Predicated region
    $region26: #{tpu_custom_call.1} parent=1 // pred_check
      _
    $region27: #{tpu_custom_call.1} parent=1 // pred_check_branch
      %40 = sbr.rel (0) target = $region29
    $region28: #{tpu_custom_call.1} parent=1 // pred_region
      _
    $region29: #{tpu_custom_call.1} parent=1 // pred_fallthru
      _
    // Predicated region
    $region30: #{tpu_custom_call.1} parent=1 // pred_check
      _
    $region31: #{tpu_custom_call.1} parent=1 // pred_check_branch
      %42 = sbr.rel (0) target = $region33
    $region32: #{tpu_custom_call.1} parent=1 // pred_region
      _
    $region33: #{tpu_custom_call.1} parent=1 // pred_fallthru
      _
    // Predicated region
    $region34: #{tpu_custom_call.1} parent=1 // pred_check
      _
    $region35: #{tpu_custom_call.1} parent=1 // pred_check_branch
      %44 = sbr.rel (0) target = $region37
    $region36: #{tpu_custom_call.1} parent=1 // pred_region
      _
    $region37: #{tpu_custom_call.1} parent=1 // pred_fallthru
      _
    // Predicated region
    $region38: #{tpu_custom_call.1} parent=1 // pred_check
      _
    $region39: #{tpu_custom_call.1} parent=1 // pred_check_branch
      %46 = sbr.rel (0) target = $region41
    $region40: #{tpu_custom_call.1} parent=1 // pred_region
      %47 = dma.done [#allocation4], 16384
    $region41: #{tpu_custom_call.1} parent=1 // pred_fallthru
      _
    %v49 = vld [vmem:[%s0] sm:$0xff]
    %v50 = vld [vmem:[%s0 + $0x8] sm:$0xff]
    %v51 = vld [vmem:[%s0 + $0x10] sm:$0xff]
    %v52 = vld [vmem:[%s0 + $0x18] sm:$0xff]
    %v53 = vld [vmem:[%s0 + $0x20] sm:$0xff]
    %v54 = vld [vmem:[%s0 + $0x28] sm:$0xff]
    %v55 = vld [vmem:[%s0 + $0x30] sm:$0xff]
    %v56 = vld [vmem:[%s0 + $0x38] sm:$0xff]
    %v57 = vld [vmem:[%s0 + $0x40] sm:$0xff]
    %v58 = vld [vmem:[%s0 + $0x48] sm:$0xff]
    %v59 = vld [vmem:[%s0 + $0x50] sm:$0xff]
    %v60 = vld [vmem:[%s0 + $0x58] sm:$0xff]
    %v61 = vld [vmem:[%s0 + $0x60] sm:$0xff]
    %v62 = vld [vmem:[%s0 + $0x68] sm:$0xff]
    %v63 = vld [vmem:[%s0 + $0x70] sm:$0xff]
    %v64 = vld [vmem:[%s0 + $0x78] sm:$0xff]
    %v65 = vld [vmem:[%s0 + $0x80] sm:$0xff]
    %v66 = vld [vmem:[%s0 + $0x88] sm:$0xff]
    %v67 = vld [vmem:[%s0 + $0x90] sm:$0xff]
    %v68 = vld [vmem:[%s0 + $0x98] sm:$0xff]
    %v69 = vld [vmem:[%s0 + $0xa0] sm:$0xff]
    %v70 = vld [vmem:[%s0 + $0xa8] sm:$0xff]
    %v71 = vld [vmem:[%s0 + $0xb0] sm:$0xff]
    %v72 = vld [vmem:[%s0 + $0xb8] sm:$0xff]
    %v73 = vld [vmem:[%s0 + $0xc0] sm:$0xff]
    %v74 = vld [vmem:[%s0 + $0xc8] sm:$0xff]
    %v75 = vld [vmem:[%s0 + $0xd0] sm:$0xff]
    %v76 = vld [vmem:[%s0 + $0xd8] sm:$0xff]
    %v77 = vld [vmem:[%s0 + $0xe0] sm:$0xff]
    %v78 = vld [vmem:[%s0 + $0xe8] sm:$0xff]
    %v79 = vld [vmem:[%s0 + $0xf0] sm:$0xff]
    %v80 = vld [vmem:[%s0 + $0xf8] sm:$0xff]
    %v81 = vld [vmem:[%s0 + $0x100] sm:$0xff]
    %v82 = vld [vmem:[%s0 + $0x108] sm:$0xff]
    %v83 = vld [vmem:[%s0 + $0x110] sm:$0xff]
    %v84 = vld [vmem:[%s0 + $0x118] sm:$0xff]
    %v85 = vld [vmem:[%s0 + $0x120] sm:$0xff]
    %v86 = vld [vmem:[%s0 + $0x128] sm:$0xff]
    %v87 = vld [vmem:[%s0 + $0x130] sm:$0xff]
    %v88 = vld [vmem:[%s0 + $0x138] sm:$0xff]
    %v89 = vld [vmem:[%s0 + $0x140] sm:$0xff]
    %v90 = vld [vmem:[%s0 + $0x148] sm:$0xff]
    %v91 = vld [vmem:[%s0 + $0x150] sm:$0xff]
    %v92 = vld [vmem:[%s0 + $0x158] sm:$0xff]
    %v93 = vld [vmem:[%s0 + $0x160] sm:$0xff]
    %v94 = vld [vmem:[%s0 + $0x168] sm:$0xff]
    %v95 = vld [vmem:[%s0 + $0x170] sm:$0xff]
    %v96 = vld [vmem:[%s0 + $0x178] sm:$0xff]
    %v97 = vld [vmem:[%s0 + $0x180] sm:$0xff]
    %v98 = vld [vmem:[%s0 + $0x188] sm:$0xff]
    %v99 = vld [vmem:[%s0 + $0x190] sm:$0xff]
    %v100 = vld [vmem:[%s0 + $0x198] sm:$0xff]
    %v101 = vld [vmem:[%s0 + $0x1a0] sm:$0xff]
    %v102 = vld [vmem:[%s0 + $0x1a8] sm:$0xff]
    %v103 = vld [vmem:[%s0 + $0x1b0] sm:$0xff]
    %v104 = vld [vmem:[%s0 + $0x1b8] sm:$0xff]
    %v105 = vld [vmem:[%s0 + $0x1c0] sm:$0xff]
    %v106 = vld [vmem:[%s0 + $0x1c8] sm:$0xff]
    %v107 = vld [vmem:[%s0 + $0x1d0] sm:$0xff]
    %v108 = vld [vmem:[%s0 + $0x1d8] sm:$0xff]
    %v109 = vld [vmem:[%s0 + $0x1e0] sm:$0xff]
    %v110 = vld [vmem:[%s0 + $0x1e8] sm:$0xff]
    %v111 = vld [vmem:[%s0 + $0x1f0] sm:$0xff]
    %v112 = vld [vmem:[%s0 + $0x1f8] sm:$0xff]
    %v113 = vpack.c.bf16 %v50, %v49
    %v114 = vpack.c.bf16 %v52, %v51
    %v115 = vpack.c.bf16 %v54, %v53
    %v116 = vpack.c.bf16 %v56, %v55
    %v117 = vpack.c.bf16 %v58, %v57
    %v118 = vpack.c.bf16 %v60, %v59
    %v119 = vpack.c.bf16 %v62, %v61
    %v120 = vpack.c.bf16 %v64, %v63
    %v121 = vpack.c.bf16 %v66, %v65
    %v122 = vpack.c.bf16 %v68, %v67
    %v123 = vpack.c.bf16 %v70, %v69
    %v124 = vpack.c.bf16 %v72, %v71
    %v125 = vpack.c.bf16 %v74, %v73
    %v126 = vpack.c.bf16 %v76, %v75
    %v127 = vpack.c.bf16 %v78, %v77
    %v128 = vpack.c.bf16 %v80, %v79
    %v129 = vpack.c.bf16 %v82, %v81
    %v130 = vpack.c.bf16 %v84, %v83
    %v131 = vpack.c.bf16 %v86, %v85
    %v132 = vpack.c.bf16 %v88, %v87
    %v133 = vpack.c.bf16 %v90, %v89
    %v134 = vpack.c.bf16 %v92, %v91
    %v135 = vpack.c.bf16 %v94, %v93
    %v136 = vpack.c.bf16 %v96, %v95
    %v137 = vpack.c.bf16 %v98, %v97
    %v138 = vpack.c.bf16 %v100, %v99
    %v139 = vpack.c.bf16 %v102, %v101
    %v140 = vpack.c.bf16 %v104, %v103
    %v141 = vpack.c.bf16 %v106, %v105
    %v142 = vpack.c.bf16 %v108, %v107
    %v143 = vpack.c.bf16 %v110, %v109
    %v144 = vpack.c.bf16 %v112, %v111
    %v145 = vld [vmem:[%s1] sm:$0xff]
    %v146 = vld [vmem:[%s1 + $0x8] sm:$0xff]
    %v147 = vld [vmem:[%s1 + $0x10] sm:$0x11]
    %v148 = vld [vmem:[%s1 + $0x18] sm:$0x11]
    %v149 = vld [vmem:[%s2] sm:$0xf]
    %v151 = vlaneseq
    %v152 = vshrl.u32 %v151, 7
    %v153 = vsub.s32 0, %v152
    %v154 = vrot.slane %v149, %v153
    %v155 = vlaneseq
    %v156 = vshrl.u32 %v155, 7
    %v157 = vsub.s32 1, %v156
    %v158 = vrot.slane %v149, %v157
    %v159 = vlaneseq
    %v160 = vshrl.u32 %v159, 7
    %v161 = vsub.s32 2, %v160
    %v162 = vrot.slane %v149, %v161
    %v163 = vlaneseq
    %v164 = vshrl.u32 %v163, 7
    %v165 = vsub.s32 3, %v164
    %v166 = vrot.slane %v149, %v165
    %v175 = vunpack.c.l.b16 %v145
    %v176 = vunpack.c.h.b16 %v145
    %v177 = vunpack.c.l.b16 %v146
    %v178 = vunpack.c.h.b16 %v146
    %v179 = vunpack.c.l.b16 %v147
    %v180 = vunpack.c.h.b16 %v147
    %v181 = vunpack.c.l.b16 %v148
    %v182 = vunpack.c.h.b16 %v148
    %v183 = vpack.c.b16 %v179, %v175
    %v184 = vpack.c.b16 %v180, %v176
    %v185 = vpack.c.b16 %v181, %v177
    %v186 = vpack.c.b16 %v182, %v178
    %vm187 = vcmask 80896
    %v189 = vsel %vm187, %v113, 0
    %v192 = vsel %vm187, %v114, 0
    %v195 = vsel %vm187, %v115, 0
    %v198 = vsel %vm187, %v116, 0
    %v201 = vsel %vm187, %v117, 0
    %v204 = vsel %vm187, %v118, 0
    %v207 = vsel %vm187, %v119, 0
    %v210 = vsel %vm187, %v120, 0
    %v213 = vsel %vm187, %v121, 0
    %v216 = vsel %vm187, %v122, 0
    %v219 = vsel %vm187, %v123, 0
    %v222 = vsel %vm187, %v124, 0
    %v225 = vsel %vm187, %v125, 0
    %v228 = vsel %vm187, %v126, 0
    %v231 = vsel %vm187, %v127, 0
    %v234 = vsel %vm187, %v128, 0
    %v237 = vsel %vm187, %v129, 0
    %v240 = vsel %vm187, %v130, 0
    %v243 = vsel %vm187, %v131, 0
    %v246 = vsel %vm187, %v132, 0
    %v249 = vsel %vm187, %v133, 0
    %v252 = vsel %vm187, %v134, 0
    %v255 = vsel %vm187, %v135, 0
    %v258 = vsel %vm187, %v136, 0
    %v261 = vsel %vm187, %v137, 0
    %v264 = vsel %vm187, %v138, 0
    %v267 = vsel %vm187, %v139, 0
    %v270 = vsel %vm187, %v140, 0
    %v273 = vsel %vm187, %v141, 0
    %v276 = vsel %vm187, %v142, 0
    %v279 = vsel %vm187, %v143, 0
    %v282 = vsel %vm187, %v144, 0
    %vm284 = vcmask 1044480
    %v286 = vsel %vm284, %v183, 0
    %v289 = vsel %vm284, %v184, 0
    %v292 = vsel %vm284, %v185, 0
    %v295 = vsel %vm284, %v186, 0
    %297 = vmatprep.subr.bf16.mxu0 %v289
    %298 = vmatpush1.bf16.msra.mxu0 %v286
    %299 = vmatprep.subr.bf16.mxu0 0
    %300 = vmatpush1.bf16.msra.mxu0 0
    %301 = vmatprep.subr.bf16.mxu0 0
    %302 = vmatpush1.bf16.msra.mxu0 0
    %303 = vmatprep.subr.bf16.mxu0 0
    %304 = vmatpush1.bf16.msra.mxu0 0
    %305 = vmatprep.subr.bf16.mxu0 0
    %306 = vmatpush1.bf16.msra.mxu0 0
    %307 = vmatprep.subr.bf16.mxu0 0
    %308 = vmatpush1.bf16.msra.mxu0 0
    %309 = vmatprep.subr.bf16.mxu0 0
    %310 = vmatpush1.bf16.msra.mxu0 0
    %311 = vmatprep.subr.bf16.mxu0 0
    %312 = vmatpush1.bf16.msra.mxu0 0
    %313 = vmatprep.subr.bf16.mxu0 0
    %314 = vmatpush1.bf16.msra.mxu0 0
    %315 = vmatprep.subr.bf16.mxu0 0
    %316 = vmatpush1.bf16.msra.mxu0 0
    %317 = vmatprep.subr.bf16.mxu0 0
    %318 = vmatpush1.bf16.msra.mxu0 0
    %319 = vmatprep.subr.bf16.mxu0 0
    %320 = vmatpush1.bf16.msra.mxu0 0
    %321 = vmatprep.subr.bf16.mxu0 0
    %322 = vmatpush1.bf16.msra.mxu0 0
    %323 = vmatprep.subr.bf16.mxu0 0
    %324 = vmatpush1.bf16.msra.mxu0 0
    %325 = vmatprep.subr.bf16.mxu0 0
    %326 = vmatpush1.bf16.msra.mxu0 0
    %327 = vmatprep.subr.bf16.mxu0 0
    %328 = vmatpush1.bf16.msra.mxu0 0
    %329 = vmatprep.mubr.bf16.mxu0 0
    %330 = vmatmul.mubr.bf16.gmra.mrb[0].mxu0 %v189
    %v331 = vpop.f32.mrb[0].mxu0
    %v332 = vadd.f32 %v154, %v331
    %v333 = vpop.f32.mrb[0].mxu0
    %v334 = vadd.f32 %v158, %v333
    %v335 = vpop.f32.mrb[0].mxu0
    %v336 = vadd.f32 %v154, %v335
    %v337 = vpop.f32.mrb[0].mxu0
    %v338 = vadd.f32 %v158, %v337
    %339 = vmatprep.mubr.bf16.mxu0 0
    %340 = vmatmul.mubr.bf16.gmra.mrb[0].mxu0 %v192
    %v341 = vpop.f32.mrb[0].mxu0
    %v342 = vadd.f32 %v154, %v341
    %v343 = vpop.f32.mrb[0].mxu0
    %v344 = vadd.f32 %v158, %v343
    %v345 = vpop.f32.mrb[0].mxu0
    %v346 = vadd.f32 %v154, %v345
    %v347 = vpop.f32.mrb[0].mxu0
    %v348 = vadd.f32 %v158, %v347
    %349 = vmatprep.mubr.bf16.mxu0 0
    %350 = vmatmul.mubr.bf16.gmra.mrb[0].mxu0 %v195
    %v351 = vpop.f32.mrb[0].mxu0
    %v352 = vadd.f32 %v154, %v351
    %v353 = vpop.f32.mrb[0].mxu0
    %v354 = vadd.f32 %v158, %v353
    %v355 = vpop.f32.mrb[0].mxu0
    %v356 = vadd.f32 %v154, %v355
    %v357 = vpop.f32.mrb[0].mxu0
    %v358 = vadd.f32 %v158, %v357
    %359 = vmatprep.mubr.bf16.mxu0 0
    %360 = vmatmul.mubr.bf16.gmra.mrb[0].mxu0 %v198
    %v361 = vpop.f32.mrb[0].mxu0
    %v362 = vadd.f32 %v154, %v361
    %v363 = vpop.f32.mrb[0].mxu0
    %v364 = vadd.f32 %v158, %v363
    %v365 = vpop.f32.mrb[0].mxu0
    %v366 = vadd.f32 %v154, %v365
    %v367 = vpop.f32.mrb[0].mxu0
    %v368 = vadd.f32 %v158, %v367
    %369 = vmatprep.mubr.bf16.mxu0 0
    %370 = vmatmul.mubr.bf16.gmra.mrb[0].mxu0 %v201
    %v371 = vpop.f32.mrb[0].mxu0
    %v372 = vadd.f32 %v154, %v371
    %v373 = vpop.f32.mrb[0].mxu0
    %v374 = vadd.f32 %v158, %v373
    %v375 = vpop.f32.mrb[0].mxu0
    %v376 = vadd.f32 %v154, %v375
    %v377 = vpop.f32.mrb[0].mxu0
    %v378 = vadd.f32 %v158, %v377
    %379 = vmatprep.mubr.bf16.mxu0 0
    %380 = vmatmul.mubr.bf16.gmra.mrb[0].mxu0 %v204
    %v381 = vpop.f32.mrb[0].mxu0
    %v382 = vadd.f32 %v154, %v381
    %v383 = vpop.f32.mrb[0].mxu0
    %v384 = vadd.f32 %v158, %v383
    %v385 = vpop.f32.mrb[0].mxu0
    %v386 = vadd.f32 %v154, %v385
    %v387 = vpop.f32.mrb[0].mxu0
    %v388 = vadd.f32 %v158, %v387
    %389 = vmatprep.mubr.bf16.mxu0 0
    %390 = vmatmul.mubr.bf16.gmra.mrb[0].mxu0 %v207
    %v391 = vpop.f32.mrb[0].mxu0
    %v392 = vadd.f32 %v154, %v391
    %v393 = vpop.f32.mrb[0].mxu0
    %v394 = vadd.f32 %v158, %v393
    %v395 = vpop.f32.mrb[0].mxu0
    %v396 = vadd.f32 %v154, %v395
    %v397 = vpop.f32.mrb[0].mxu0
    %v398 = vadd.f32 %v158, %v397
    %399 = vmatprep.mubr.bf16.mxu0 0
    %400 = vmatmul.mubr.bf16.gmra.mrb[0].mxu0 %v210
    %v401 = vpop.f32.mrb[0].mxu0
    %v402 = vadd.f32 %v154, %v401
    %v403 = vpop.f32.mrb[0].mxu0
    %v404 = vadd.f32 %v158, %v403
    %v405 = vpop.f32.mrb[0].mxu0
    %v406 = vadd.f32 %v154, %v405
    %v407 = vpop.f32.mrb[0].mxu0
    %v408 = vadd.f32 %v158, %v407
    %409 = vmatprep.mubr.bf16.mxu0 0
    %410 = vmatmul.mubr.bf16.gmra.mrb[0].mxu0 %v213
    %v411 = vpop.f32.mrb[0].mxu0
    %v412 = vadd.f32 %v154, %v411
    %v413 = vpop.f32.mrb[0].mxu0
    %v414 = vadd.f32 %v158, %v413
    %v415 = vpop.f32.mrb[0].mxu0
    %v416 = vadd.f32 %v154, %v415
    %v417 = vpop.f32.mrb[0].mxu0
    %v418 = vadd.f32 %v158, %v417
    %419 = vmatprep.mubr.bf16.mxu0 0
    %420 = vmatmul.mubr.bf16.gmra.mrb[0].mxu0 %v216
    %v421 = vpop.f32.mrb[0].mxu0
    %v422 = vadd.f32 %v154, %v421
    %v423 = vpop.f32.mrb[0].mxu0
    %v424 = vadd.f32 %v158, %v423
    %v425 = vpop.f32.mrb[0].mxu0
    %v426 = vadd.f32 %v154, %v425
    %v427 = vpop.f32.mrb[0].mxu0
    %v428 = vadd.f32 %v158, %v427
    %429 = vmatprep.mubr.bf16.mxu0 0
    %430 = vmatmul.mubr.bf16.gmra.mrb[0].mxu0 %v219
    %v431 = vpop.f32.mrb[0].mxu0
    %v432 = vadd.f32 %v154, %v431
    %v433 = vpop.f32.mrb[0].mxu0
    %v434 = vadd.f32 %v158, %v433
    %v435 = vpop.f32.mrb[0].mxu0
    %v436 = vadd.f32 %v154, %v435
    %v437 = vpop.f32.mrb[0].mxu0
    %v438 = vadd.f32 %v158, %v437
    %439 = vmatprep.mubr.bf16.mxu0 0
    %440 = vmatmul.mubr.bf16.gmra.mrb[0].mxu0 %v222
    %v441 = vpop.f32.mrb[0].mxu0
    %v442 = vadd.f32 %v154, %v441
    %v443 = vpop.f32.mrb[0].mxu0
    %v444 = vadd.f32 %v158, %v443
    %v445 = vpop.f32.mrb[0].mxu0
    %v446 = vadd.f32 %v154, %v445
    %v447 = vpop.f32.mrb[0].mxu0
    %v448 = vadd.f32 %v158, %v447
    %449 = vmatprep.mubr.bf16.mxu0 0
    %450 = vmatmul.mubr.bf16.gmra.mrb[0].mxu0 %v225
    %v451 = vpop.f32.mrb[0].mxu0
    %v452 = vadd.f32 %v154, %v451
    %v453 = vpop.f32.mrb[0].mxu0
    %v454 = vadd.f32 %v158, %v453
    %v455 = vpop.f32.mrb[0].mxu0
    %v456 = vadd.f32 %v154, %v455
    %v457 = vpop.f32.mrb[0].mxu0
    %v458 = vadd.f32 %v158, %v457
    %459 = vmatprep.mubr.bf16.mxu0 0
    %460 = vmatmul.mubr.bf16.gmra.mrb[0].mxu0 %v228
    %v461 = vpop.f32.mrb[0].mxu0
    %v462 = vadd.f32 %v154, %v461
    %v463 = vpop.f32.mrb[0].mxu0
    %v464 = vadd.f32 %v158, %v463
    %v465 = vpop.f32.mrb[0].mxu0
    %v466 = vadd.f32 %v154, %v465
    %v467 = vpop.f32.mrb[0].mxu0
    %v468 = vadd.f32 %v158, %v467
    %469 = vmatprep.mubr.bf16.mxu0 0
    %470 = vmatmul.mubr.bf16.gmra.mrb[0].mxu0 %v231
    %v471 = vpop.f32.mrb[0].mxu0
    %v472 = vadd.f32 %v154, %v471
    %v473 = vpop.f32.mrb[0].mxu0
    %v474 = vadd.f32 %v158, %v473
    %v475 = vpop.f32.mrb[0].mxu0
    %v476 = vadd.f32 %v154, %v475
    %v477 = vpop.f32.mrb[0].mxu0
    %v478 = vadd.f32 %v158, %v477
    %479 = vmatprep.mubr.bf16.mxu0 0
    %480 = vmatmul.mubr.bf16.gmra.mrb[0].mxu0 %v234
    %v481 = vpop.f32.mrb[0].mxu0
    %v482 = vadd.f32 %v154, %v481
    %v483 = vpop.f32.mrb[0].mxu0
    %v484 = vadd.f32 %v158, %v483
    %v485 = vpop.f32.mrb[0].mxu0
    %v486 = vadd.f32 %v154, %v485
    %v487 = vpop.f32.mrb[0].mxu0
    %v488 = vadd.f32 %v158, %v487
    %489 = vmatprep.mubr.bf16.mxu0 0
    %490 = vmatmul.mubr.bf16.gmra.mrb[0].mxu0 %v237
    %v491 = vpop.f32.mrb[0].mxu0
    %v492 = vadd.f32 %v154, %v491
    %v493 = vpop.f32.mrb[0].mxu0
    %v494 = vadd.f32 %v158, %v493
    %v495 = vpop.f32.mrb[0].mxu0
    %v496 = vadd.f32 %v154, %v495
    %v497 = vpop.f32.mrb[0].mxu0
    %v498 = vadd.f32 %v158, %v497
    %499 = vmatprep.mubr.bf16.mxu0 0
    %500 = vmatmul.mubr.bf16.gmra.mrb[0].mxu0 %v240
    %v501 = vpop.f32.mrb[0].mxu0
    %v502 = vadd.f32 %v154, %v501
    %v503 = vpop.f32.mrb[0].mxu0
    %v504 = vadd.f32 %v158, %v503
    %v505 = vpop.f32.mrb[0].mxu0
    %v506 = vadd.f32 %v154, %v505
    %v507 = vpop.f32.mrb[0].mxu0
    %v508 = vadd.f32 %v158, %v507
    %509 = vmatprep.mubr.bf16.mxu0 0
    %510 = vmatmul.mubr.bf16.gmra.mrb[0].mxu0 %v243
    %v511 = vpop.f32.mrb[0].mxu0
    %v512 = vadd.f32 %v154, %v511
    %v513 = vpop.f32.mrb[0].mxu0
    %v514 = vadd.f32 %v158, %v513
    %v515 = vpop.f32.mrb[0].mxu0
    %v516 = vadd.f32 %v154, %v515
    %v517 = vpop.f32.mrb[0].mxu0
    %v518 = vadd.f32 %v158, %v517
    %519 = vmatprep.mubr.bf16.mxu0 0
    %520 = vmatmul.mubr.bf16.gmra.mrb[0].mxu0 %v246
    %v521 = vpop.f32.mrb[0].mxu0
    %v522 = vadd.f32 %v154, %v521
    %v523 = vpop.f32.mrb[0].mxu0
    %v524 = vadd.f32 %v158, %v523
    %v525 = vpop.f32.mrb[0].mxu0
    %v526 = vadd.f32 %v154, %v525
    %v527 = vpop.f32.mrb[0].mxu0
    %v528 = vadd.f32 %v158, %v527
    %529 = vmatprep.mubr.bf16.mxu0 0
    %530 = vmatmul.mubr.bf16.gmra.mrb[0].mxu0 %v249
    %v531 = vpop.f32.mrb[0].mxu0
    %v532 = vadd.f32 %v154, %v531
    %v533 = vpop.f32.mrb[0].mxu0
    %v534 = vadd.f32 %v158, %v533
    %v535 = vpop.f32.mrb[0].mxu0
    %v536 = vadd.f32 %v154, %v535
    %v537 = vpop.f32.mrb[0].mxu0
    %v538 = vadd.f32 %v158, %v537
    %539 = vmatprep.mubr.bf16.mxu0 0
    %540 = vmatmul.mubr.bf16.gmra.mrb[0].mxu0 %v252
    %v541 = vpop.f32.mrb[0].mxu0
    %v542 = vadd.f32 %v154, %v541
    %v543 = vpop.f32.mrb[0].mxu0
    %v544 = vadd.f32 %v158, %v543
    %v545 = vpop.f32.mrb[0].mxu0
    %v546 = vadd.f32 %v154, %v545
    %v547 = vpop.f32.mrb[0].mxu0
    %v548 = vadd.f32 %v158, %v547
    %549 = vmatprep.mubr.bf16.mxu0 0
    %550 = vmatmul.mubr.bf16.gmra.mrb[0].mxu0 %v255
    %v551 = vpop.f32.mrb[0].mxu0
    %v552 = vadd.f32 %v154, %v551
    %v553 = vpop.f32.mrb[0].mxu0
    %v554 = vadd.f32 %v158, %v553
    %v555 = vpop.f32.mrb[0].mxu0
    %v556 = vadd.f32 %v154, %v555
    %v557 = vpop.f32.mrb[0].mxu0
    %v558 = vadd.f32 %v158, %v557
    %559 = vmatprep.mubr.bf16.mxu0 0
    %560 = vmatmul.mubr.bf16.gmra.mrb[0].mxu0 %v258
    %v561 = vpop.f32.mrb[0].mxu0
    %v562 = vadd.f32 %v154, %v561
    %v563 = vpop.f32.mrb[0].mxu0
    %v564 = vadd.f32 %v158, %v563
    %v565 = vpop.f32.mrb[0].mxu0
    %v566 = vadd.f32 %v154, %v565
    %v567 = vpop.f32.mrb[0].mxu0
    %v568 = vadd.f32 %v158, %v567
    %569 = vmatprep.mubr.bf16.mxu0 0
    %570 = vmatmul.mubr.bf16.gmra.mrb[0].mxu0 %v261
    %v571 = vpop.f32.mrb[0].mxu0
    %v572 = vadd.f32 %v154, %v571
    %v573 = vpop.f32.mrb[0].mxu0
    %v574 = vadd.f32 %v158, %v573
    %v575 = vpop.f32.mrb[0].mxu0
    %v576 = vadd.f32 %v154, %v575
    %v577 = vpop.f32.mrb[0].mxu0
    %v578 = vadd.f32 %v158, %v577
    %579 = vmatprep.mubr.bf16.mxu0 0
    %580 = vmatmul.mubr.bf16.gmra.mrb[0].mxu0 %v264
    %v581 = vpop.f32.mrb[0].mxu0
    %v582 = vadd.f32 %v154, %v581
    %v583 = vpop.f32.mrb[0].mxu0
    %v584 = vadd.f32 %v158, %v583
    %v585 = vpop.f32.mrb[0].mxu0
    %v586 = vadd.f32 %v154, %v585
    %v587 = vpop.f32.mrb[0].mxu0
    %v588 = vadd.f32 %v158, %v587
    %589 = vmatprep.mubr.bf16.mxu0 0
    %590 = vmatmul.mubr.bf16.gmra.mrb[0].mxu0 %v267
    %v591 = vpop.f32.mrb[0].mxu0
    %v592 = vadd.f32 %v154, %v591
    %v593 = vpop.f32.mrb[0].mxu0
    %v594 = vadd.f32 %v158, %v593
    %v595 = vpop.f32.mrb[0].mxu0
    %v596 = vadd.f32 %v154, %v595
    %v597 = vpop.f32.mrb[0].mxu0
    %v598 = vadd.f32 %v158, %v597
    %599 = vmatprep.mubr.bf16.mxu0 0
    %600 = vmatmul.mubr.bf16.gmra.mrb[0].mxu0 %v270
    %v601 = vpop.f32.mrb[0].mxu0
    %v602 = vadd.f32 %v154, %v601
    %v603 = vpop.f32.mrb[0].mxu0
    %v604 = vadd.f32 %v158, %v603
    %v605 = vpop.f32.mrb[0].mxu0
    %v606 = vadd.f32 %v154, %v605
    %v607 = vpop.f32.mrb[0].mxu0
    %v608 = vadd.f32 %v158, %v607
    %609 = vmatprep.mubr.bf16.mxu0 0
    %610 = vmatmul.mubr.bf16.gmra.mrb[0].mxu0 %v273
    %v611 = vpop.f32.mrb[0].mxu0
    %v612 = vadd.f32 %v154, %v611
    %v613 = vpop.f32.mrb[0].mxu0
    %v614 = vadd.f32 %v158, %v613
    %v615 = vpop.f32.mrb[0].mxu0
    %v616 = vadd.f32 %v154, %v615
    %v617 = vpop.f32.mrb[0].mxu0
    %v618 = vadd.f32 %v158, %v617
    %619 = vmatprep.mubr.bf16.mxu0 0
    %620 = vmatmul.mubr.bf16.gmra.mrb[0].mxu0 %v276
    %v621 = vpop.f32.mrb[0].mxu0
    %v622 = vadd.f32 %v154, %v621
    %v623 = vpop.f32.mrb[0].mxu0
    %v624 = vadd.f32 %v158, %v623
    %v625 = vpop.f32.mrb[0].mxu0
    %v626 = vadd.f32 %v154, %v625
    %v627 = vpop.f32.mrb[0].mxu0
    %v628 = vadd.f32 %v158, %v627
    %629 = vmatprep.mubr.bf16.mxu0 0
    %630 = vmatmul.mubr.bf16.gmra.mrb[0].mxu0 %v279
    %v631 = vpop.f32.mrb[0].mxu0
    %v632 = vadd.f32 %v154, %v631
    %v633 = vpop.f32.mrb[0].mxu0
    %v634 = vadd.f32 %v158, %v633
    %v635 = vpop.f32.mrb[0].mxu0
    %v636 = vadd.f32 %v154, %v635
    %v637 = vpop.f32.mrb[0].mxu0
    %v638 = vadd.f32 %v158, %v637
    %639 = vmatprep.mubr.bf16.mxu0 0
    %640 = vmatmul.mubr.bf16.gmra.mrb[0].mxu0 %v282
    %v641 = vpop.f32.mrb[0].mxu0
    %v642 = vadd.f32 %v154, %v641
    %v643 = vpop.f32.mrb[0].mxu0
    %v644 = vadd.f32 %v158, %v643
    %v645 = vpop.f32.mrb[0].mxu0
    %v646 = vadd.f32 %v154, %v645
    %v647 = vpop.f32.mrb[0].mxu0
    %v648 = vadd.f32 %v158, %v647
    %649 = vdwg.mxu0
    %650 = vmatprep.subr.bf16.mxu0 %v295
    %651 = vmatpush1.bf16.msra.mxu0 %v292
    %652 = vmatprep.subr.bf16.mxu0 0
    %653 = vmatpush1.bf16.msra.mxu0 0
    %654 = vmatprep.subr.bf16.mxu0 0
    %655 = vmatpush1.bf16.msra.mxu0 0
    %656 = vmatprep.subr.bf16.mxu0 0
    %657 = vmatpush1.bf16.msra.mxu0 0
    %658 = vmatprep.subr.bf16.mxu0 0
    %659 = vmatpush1.bf16.msra.mxu0 0
    %660 = vmatprep.subr.bf16.mxu0 0
    %661 = vmatpush1.bf16.msra.mxu0 0
    %662 = vmatprep.subr.bf16.mxu0 0
    %663 = vmatpush1.bf16.msra.mxu0 0
    %664 = vmatprep.subr.bf16.mxu0 0
    %665 = vmatpush1.bf16.msra.mxu0 0
    %666 = vmatprep.subr.bf16.mxu0 0
    %667 = vmatpush1.bf16.msra.mxu0 0
    %668 = vmatprep.subr.bf16.mxu0 0
    %669 = vmatpush1.bf16.msra.mxu0 0
    %670 = vmatprep.subr.bf16.mxu0 0
    %671 = vmatpush1.bf16.msra.mxu0 0
    %672 = vmatprep.subr.bf16.mxu0 0
    %673 = vmatpush1.bf16.msra.mxu0 0
    %674 = vmatprep.subr.bf16.mxu0 0
    %675 = vmatpush1.bf16.msra.mxu0 0
    %676 = vmatprep.subr.bf16.mxu0 0
    %677 = vmatpush1.bf16.msra.mxu0 0
    %678 = vmatprep.subr.bf16.mxu0 0
    %679 = vmatpush1.bf16.msra.mxu0 0
    %680 = vmatprep.subr.bf16.mxu0 0
    %681 = vmatpush1.bf16.msra.mxu0 0
    %682 = vmatprep.mubr.bf16.mxu0 0
    %683 = vmatmul.mubr.bf16.gmra.mrb[0].mxu0 %v189
    %v684 = vpop.f32.mrb[0].mxu0
    %v685 = vadd.f32 %v162, %v684
    %v686 = vpop.f32.mrb[0].mxu0
    %v687 = vadd.f32 %v166, %v686
    %v688 = vpop.f32.mrb[0].mxu0
    %v689 = vadd.f32 %v162, %v688
    %v690 = vpop.f32.mrb[0].mxu0
    %v691 = vadd.f32 %v166, %v690
    %692 = vmatprep.mubr.bf16.mxu0 0
    %693 = vmatmul.mubr.bf16.gmra.mrb[0].mxu0 %v192
    %v694 = vpop.f32.mrb[0].mxu0
    %v695 = vadd.f32 %v162, %v694
    %v696 = vpop.f32.mrb[0].mxu0
    %v697 = vadd.f32 %v166, %v696
    %v698 = vpop.f32.mrb[0].mxu0
    %v699 = vadd.f32 %v162, %v698
    %v700 = vpop.f32.mrb[0].mxu0
    %v701 = vadd.f32 %v166, %v700
    %702 = vmatprep.mubr.bf16.mxu0 0
    %703 = vmatmul.mubr.bf16.gmra.mrb[0].mxu0 %v195
    %v704 = vpop.f32.mrb[0].mxu0
    %v705 = vadd.f32 %v162, %v704
    %v706 = vpop.f32.mrb[0].mxu0
    %v707 = vadd.f32 %v166, %v706
    %v708 = vpop.f32.mrb[0].mxu0
    %v709 = vadd.f32 %v162, %v708
    %v710 = vpop.f32.mrb[0].mxu0
    %v711 = vadd.f32 %v166, %v710
    %712 = vmatprep.mubr.bf16.mxu0 0
    %713 = vmatmul.mubr.bf16.gmra.mrb[0].mxu0 %v198
    %v714 = vpop.f32.mrb[0].mxu0
    %v715 = vadd.f32 %v162, %v714
    %v716 = vpop.f32.mrb[0].mxu0
    %v717 = vadd.f32 %v166, %v716
    %v718 = vpop.f32.mrb[0].mxu0
    %v719 = vadd.f32 %v162, %v718
    %v720 = vpop.f32.mrb[0].mxu0
    %v721 = vadd.f32 %v166, %v720
    %722 = vmatprep.mubr.bf16.mxu0 0
    %723 = vmatmul.mubr.bf16.gmra.mrb[0].mxu0 %v201
    %v724 = vpop.f32.mrb[0].mxu0
    %v725 = vadd.f32 %v162, %v724
    %v726 = vpop.f32.mrb[0].mxu0
    %v727 = vadd.f32 %v166, %v726
    %v728 = vpop.f32.mrb[0].mxu0
    %v729 = vadd.f32 %v162, %v728
    %v730 = vpop.f32.mrb[0].mxu0
    %v731 = vadd.f32 %v166, %v730
    %732 = vmatprep.mubr.bf16.mxu0 0
    %733 = vmatmul.mubr.bf16.gmra.mrb[0].mxu0 %v204
    %v734 = vpop.f32.mrb[0].mxu0
    %v735 = vadd.f32 %v162, %v734
    %v736 = vpop.f32.mrb[0].mxu0
    %v737 = vadd.f32 %v166, %v736
    %v738 = vpop.f32.mrb[0].mxu0
    %v739 = vadd.f32 %v162, %v738
    %v740 = vpop.f32.mrb[0].mxu0
    %v741 = vadd.f32 %v166, %v740
    %742 = vmatprep.mubr.bf16.mxu0 0
    %743 = vmatmul.mubr.bf16.gmra.mrb[0].mxu0 %v207
    %v744 = vpop.f32.mrb[0].mxu0
    %v745 = vadd.f32 %v162, %v744
    %v746 = vpop.f32.mrb[0].mxu0
    %v747 = vadd.f32 %v166, %v746
    %v748 = vpop.f32.mrb[0].mxu0
    %v749 = vadd.f32 %v162, %v748
    %v750 = vpop.f32.mrb[0].mxu0
    %v751 = vadd.f32 %v166, %v750
    %752 = vmatprep.mubr.bf16.mxu0 0
    %753 = vmatmul.mubr.bf16.gmra.mrb[0].mxu0 %v210
    %v754 = vpop.f32.mrb[0].mxu0
    %v755 = vadd.f32 %v162, %v754
    %v756 = vpop.f32.mrb[0].mxu0
    %v757 = vadd.f32 %v166, %v756
    %v758 = vpop.f32.mrb[0].mxu0
    %v759 = vadd.f32 %v162, %v758
    %v760 = vpop.f32.mrb[0].mxu0
    %v761 = vadd.f32 %v166, %v760
    %762 = vmatprep.mubr.bf16.mxu0 0
    %763 = vmatmul.mubr.bf16.gmra.mrb[0].mxu0 %v213
    %v764 = vpop.f32.mrb[0].mxu0
    %v765 = vadd.f32 %v162, %v764
    %v766 = vpop.f32.mrb[0].mxu0
    %v767 = vadd.f32 %v166, %v766
    %v768 = vpop.f32.mrb[0].mxu0
    %v769 = vadd.f32 %v162, %v768
    %v770 = vpop.f32.mrb[0].mxu0
    %v771 = vadd.f32 %v166, %v770
    %772 = vmatprep.mubr.bf16.mxu0 0
    %773 = vmatmul.mubr.bf16.gmra.mrb[0].mxu0 %v216
    %v774 = vpop.f32.mrb[0].mxu0
    %v775 = vadd.f32 %v162, %v774
    %v776 = vpop.f32.mrb[0].mxu0
    %v777 = vadd.f32 %v166, %v776
    %v778 = vpop.f32.mrb[0].mxu0
    %v779 = vadd.f32 %v162, %v778
    %v780 = vpop.f32.mrb[0].mxu0
    %v781 = vadd.f32 %v166, %v780
    %782 = vmatprep.mubr.bf16.mxu0 0
    %783 = vmatmul.mubr.bf16.gmra.mrb[0].mxu0 %v219
    %v784 = vpop.f32.mrb[0].mxu0
    %v785 = vadd.f32 %v162, %v784
    %v786 = vpop.f32.mrb[0].mxu0
    %v787 = vadd.f32 %v166, %v786
    %v788 = vpop.f32.mrb[0].mxu0
    %v789 = vadd.f32 %v162, %v788
    %v790 = vpop.f32.mrb[0].mxu0
    %v791 = vadd.f32 %v166, %v790
    %792 = vmatprep.mubr.bf16.mxu0 0
    %793 = vmatmul.mubr.bf16.gmra.mrb[0].mxu0 %v222
    %v794 = vpop.f32.mrb[0].mxu0
    %v795 = vadd.f32 %v162, %v794
    %v796 = vpop.f32.mrb[0].mxu0
    %v797 = vadd.f32 %v166, %v796
    %v798 = vpop.f32.mrb[0].mxu0
    %v799 = vadd.f32 %v162, %v798
    %v800 = vpop.f32.mrb[0].mxu0
    %v801 = vadd.f32 %v166, %v800
    %802 = vmatprep.mubr.bf16.mxu0 0
    %803 = vmatmul.mubr.bf16.gmra.mrb[0].mxu0 %v225
    %v804 = vpop.f32.mrb[0].mxu0
    %v805 = vadd.f32 %v162, %v804
    %v806 = vpop.f32.mrb[0].mxu0
    %v807 = vadd.f32 %v166, %v806
    %v808 = vpop.f32.mrb[0].mxu0
    %v809 = vadd.f32 %v162, %v808
    %v810 = vpop.f32.mrb[0].mxu0
    %v811 = vadd.f32 %v166, %v810
    %812 = vmatprep.mubr.bf16.mxu0 0
    %813 = vmatmul.mubr.bf16.gmra.mrb[0].mxu0 %v228
    %v814 = vpop.f32.mrb[0].mxu0
    %v815 = vadd.f32 %v162, %v814
    %v816 = vpop.f32.mrb[0].mxu0
    %v817 = vadd.f32 %v166, %v816
    %v818 = vpop.f32.mrb[0].mxu0
    %v819 = vadd.f32 %v162, %v818
    %v820 = vpop.f32.mrb[0].mxu0
    %v821 = vadd.f32 %v166, %v820
    %822 = vmatprep.mubr.bf16.mxu0 0
    %823 = vmatmul.mubr.bf16.gmra.mrb[0].mxu0 %v231
    %v824 = vpop.f32.mrb[0].mxu0
    %v825 = vadd.f32 %v162, %v824
    %v826 = vpop.f32.mrb[0].mxu0
    %v827 = vadd.f32 %v166, %v826
    %v828 = vpop.f32.mrb[0].mxu0
    %v829 = vadd.f32 %v162, %v828
    %v830 = vpop.f32.mrb[0].mxu0
    %v831 = vadd.f32 %v166, %v830
    %832 = vmatprep.mubr.bf16.mxu0 0
    %833 = vmatmul.mubr.bf16.gmra.mrb[0].mxu0 %v234
    %v834 = vpop.f32.mrb[0].mxu0
    %v835 = vadd.f32 %v162, %v834
    %v836 = vpop.f32.mrb[0].mxu0
    %v837 = vadd.f32 %v166, %v836
    %v838 = vpop.f32.mrb[0].mxu0
    %v839 = vadd.f32 %v162, %v838
    %v840 = vpop.f32.mrb[0].mxu0
    %v841 = vadd.f32 %v166, %v840
    %842 = vmatprep.mubr.bf16.mxu0 0
    %843 = vmatmul.mubr.bf16.gmra.mrb[0].mxu0 %v237
    %v844 = vpop.f32.mrb[0].mxu0
    %v845 = vadd.f32 %v162, %v844
    %v846 = vpop.f32.mrb[0].mxu0
    %v847 = vadd.f32 %v166, %v846
    %v848 = vpop.f32.mrb[0].mxu0
    %v849 = vadd.f32 %v162, %v848
    %v850 = vpop.f32.mrb[0].mxu0
    %v851 = vadd.f32 %v166, %v850
    %852 = vmatprep.mubr.bf16.mxu0 0
    %853 = vmatmul.mubr.bf16.gmra.mrb[0].mxu0 %v240
    %v854 = vpop.f32.mrb[0].mxu0
    %v855 = vadd.f32 %v162, %v854
    %v856 = vpop.f32.mrb[0].mxu0
    %v857 = vadd.f32 %v166, %v856
    %v858 = vpop.f32.mrb[0].mxu0
    %v859 = vadd.f32 %v162, %v858
    %v860 = vpop.f32.mrb[0].mxu0
    %v861 = vadd.f32 %v166, %v860
    %862 = vmatprep.mubr.bf16.mxu0 0
    %863 = vmatmul.mubr.bf16.gmra.mrb[0].mxu0 %v243
    %v864 = vpop.f32.mrb[0].mxu0
    %v865 = vadd.f32 %v162, %v864
    %v866 = vpop.f32.mrb[0].mxu0
    %v867 = vadd.f32 %v166, %v866
    %v868 = vpop.f32.mrb[0].mxu0
    %v869 = vadd.f32 %v162, %v868
    %v870 = vpop.f32.mrb[0].mxu0
    %v871 = vadd.f32 %v166, %v870
    %872 = vmatprep.mubr.bf16.mxu0 0
    %873 = vmatmul.mubr.bf16.gmra.mrb[0].mxu0 %v246
    %v874 = vpop.f32.mrb[0].mxu0
    %v875 = vadd.f32 %v162, %v874
    %v876 = vpop.f32.mrb[0].mxu0
    %v877 = vadd.f32 %v166, %v876
    %v878 = vpop.f32.mrb[0].mxu0
    %v879 = vadd.f32 %v162, %v878
    %v880 = vpop.f32.mrb[0].mxu0
    %v881 = vadd.f32 %v166, %v880
    %882 = vmatprep.mubr.bf16.mxu0 0
    %883 = vmatmul.mubr.bf16.gmra.mrb[0].mxu0 %v249
    %v884 = vpop.f32.mrb[0].mxu0
    %v885 = vadd.f32 %v162, %v884
    %v886 = vpop.f32.mrb[0].mxu0
    %v887 = vadd.f32 %v166, %v886
    %v888 = vpop.f32.mrb[0].mxu0
    %v889 = vadd.f32 %v162, %v888
    %v890 = vpop.f32.mrb[0].mxu0
    %v891 = vadd.f32 %v166, %v890
    %892 = vmatprep.mubr.bf16.mxu0 0
    %893 = vmatmul.mubr.bf16.gmra.mrb[0].mxu0 %v252
    %v894 = vpop.f32.mrb[0].mxu0
    %v895 = vadd.f32 %v162, %v894
    %v896 = vpop.f32.mrb[0].mxu0
    %v897 = vadd.f32 %v166, %v896
    %v898 = vpop.f32.mrb[0].mxu0
    %v899 = vadd.f32 %v162, %v898
    %v900 = vpop.f32.mrb[0].mxu0
    %v901 = vadd.f32 %v166, %v900
    %902 = vmatprep.mubr.bf16.mxu0 0
    %903 = vmatmul.mubr.bf16.gmra.mrb[0].mxu0 %v255
    %v904 = vpop.f32.mrb[0].mxu0
    %v905 = vadd.f32 %v162, %v904
    %v906 = vpop.f32.mrb[0].mxu0
    %v907 = vadd.f32 %v166, %v906
    %v908 = vpop.f32.mrb[0].mxu0
    %v909 = vadd.f32 %v162, %v908
    %v910 = vpop.f32.mrb[0].mxu0
    %v911 = vadd.f32 %v166, %v910
    %912 = vmatprep.mubr.bf16.mxu0 0
    %913 = vmatmul.mubr.bf16.gmra.mrb[0].mxu0 %v258
    %v914 = vpop.f32.mrb[0].mxu0
    %v915 = vadd.f32 %v162, %v914
    %v916 = vpop.f32.mrb[0].mxu0
    %v917 = vadd.f32 %v166, %v916
    %v918 = vpop.f32.mrb[0].mxu0
    %v919 = vadd.f32 %v162, %v918
    %v920 = vpop.f32.mrb[0].mxu0
    %v921 = vadd.f32 %v166, %v920
    %922 = vmatprep.mubr.bf16.mxu0 0
    %923 = vmatmul.mubr.bf16.gmra.mrb[0].mxu0 %v261
    %v924 = vpop.f32.mrb[0].mxu0
    %v925 = vadd.f32 %v162, %v924
    %v926 = vpop.f32.mrb[0].mxu0
    %v927 = vadd.f32 %v166, %v926
    %v928 = vpop.f32.mrb[0].mxu0
    %v929 = vadd.f32 %v162, %v928
    %v930 = vpop.f32.mrb[0].mxu0
    %v931 = vadd.f32 %v166, %v930
    %932 = vmatprep.mubr.bf16.mxu0 0
    %933 = vmatmul.mubr.bf16.gmra.mrb[0].mxu0 %v264
    %v934 = vpop.f32.mrb[0].mxu0
    %v935 = vadd.f32 %v162, %v934
    %v936 = vpop.f32.mrb[0].mxu0
    %v937 = vadd.f32 %v166, %v936
    %v938 = vpop.f32.mrb[0].mxu0
    %v939 = vadd.f32 %v162, %v938
    %v940 = vpop.f32.mrb[0].mxu0
    %v941 = vadd.f32 %v166, %v940
    %942 = vmatprep.mubr.bf16.mxu0 0
    %943 = vmatmul.mubr.bf16.gmra.mrb[0].mxu0 %v267
    %v944 = vpop.f32.mrb[0].mxu0
    %v945 = vadd.f32 %v162, %v944
    %v946 = vpop.f32.mrb[0].mxu0
    %v947 = vadd.f32 %v166, %v946
    %v948 = vpop.f32.mrb[0].mxu0
    %v949 = vadd.f32 %v162, %v948
    %v950 = vpop.f32.mrb[0].mxu0
    %v951 = vadd.f32 %v166, %v950
    %952 = vmatprep.mubr.bf16.mxu0 0
    %953 = vmatmul.mubr.bf16.gmra.mrb[0].mxu0 %v270
    %v954 = vpop.f32.mrb[0].mxu0
    %v955 = vadd.f32 %v162, %v954
    %v956 = vpop.f32.mrb[0].mxu0
    %v957 = vadd.f32 %v166, %v956
    %v958 = vpop.f32.mrb[0].mxu0
    %v959 = vadd.f32 %v162, %v958
    %v960 = vpop.f32.mrb[0].mxu0
    %v961 = vadd.f32 %v166, %v960
    %962 = vmatprep.mubr.bf16.mxu0 0
    %963 = vmatmul.mubr.bf16.gmra.mrb[0].mxu0 %v273
    %v964 = vpop.f32.mrb[0].mxu0
    %v965 = vadd.f32 %v162, %v964
    %v966 = vpop.f32.mrb[0].mxu0
    %v967 = vadd.f32 %v166, %v966
    %v968 = vpop.f32.mrb[0].mxu0
    %v969 = vadd.f32 %v162, %v968
    %v970 = vpop.f32.mrb[0].mxu0
    %v971 = vadd.f32 %v166, %v970
    %972 = vmatprep.mubr.bf16.mxu0 0
    %973 = vmatmul.mubr.bf16.gmra.mrb[0].mxu0 %v276
    %v974 = vpop.f32.mrb[0].mxu0
    %v975 = vadd.f32 %v162, %v974
    %v976 = vpop.f32.mrb[0].mxu0
    %v977 = vadd.f32 %v166, %v976
    %v978 = vpop.f32.mrb[0].mxu0
    %v979 = vadd.f32 %v162, %v978
    %v980 = vpop.f32.mrb[0].mxu0
    %v981 = vadd.f32 %v166, %v980
    %982 = vmatprep.mubr.bf16.mxu0 0
    %983 = vmatmul.mubr.bf16.gmra.mrb[0].mxu0 %v279
    %v984 = vpop.f32.mrb[0].mxu0
    %v985 = vadd.f32 %v162, %v984
    %v986 = vpop.f32.mrb[0].mxu0
    %v987 = vadd.f32 %v166, %v986
    %v988 = vpop.f32.mrb[0].mxu0
    %v989 = vadd.f32 %v162, %v988
    %v990 = vpop.f32.mrb[0].mxu0
    %v991 = vadd.f32 %v166, %v990
    %992 = vmatprep.mubr.bf16.mxu0 0
    %993 = vmatmul.mubr.bf16.gmra.mrb[0].mxu0 %v282
    %v994 = vpop.f32.mrb[0].mxu0
    %v995 = vadd.f32 %v162, %v994
    %v996 = vpop.f32.mrb[0].mxu0
    %v997 = vadd.f32 %v166, %v996
    %v998 = vpop.f32.mrb[0].mxu0
    %v999 = vadd.f32 %v162, %v998
    %v1000 = vpop.f32.mrb[0].mxu0
    %v1001 = vadd.f32 %v166, %v1000
    %1002 = vdwg.mxu0
    %v1003 = vmax.f32 %v332, 0.0
    %v1004 = vmax.f32 %v334, 0.0
    %v1005 = vmax.f32 %v685, 0.0
    %v1006 = vmax.f32 %v687, 0.0
    %v1007 = vmax.f32 %v336, 0.0
    %v1008 = vmax.f32 %v338, 0.0
    %v1009 = vmax.f32 %v689, 0.0
    %v1010 = vmax.f32 %v691, 0.0
    %v1011 = vmax.f32 %v342, 0.0
    %v1012 = vmax.f32 %v344, 0.0
    %v1013 = vmax.f32 %v695, 0.0
    %v1014 = vmax.f32 %v697, 0.0
    %v1015 = vmax.f32 %v346, 0.0
    %v1016 = vmax.f32 %v348, 0.0
    %v1017 = vmax.f32 %v699, 0.0
    %v1018 = vmax.f32 %v701, 0.0
    %v1019 = vmax.f32 %v352, 0.0
    %v1020 = vmax.f32 %v354, 0.0
    %v1021 = vmax.f32 %v705, 0.0
    %v1022 = vmax.f32 %v707, 0.0
    %v1023 = vmax.f32 %v356, 0.0
    %v1024 = vmax.f32 %v358, 0.0
    %v1025 = vmax.f32 %v709, 0.0
    %v1026 = vmax.f32 %v711, 0.0
    %v1027 = vmax.f32 %v362, 0.0
    %v1028 = vmax.f32 %v364, 0.0
    %v1029 = vmax.f32 %v715, 0.0
    %v1030 = vmax.f32 %v717, 0.0
    %v1031 = vmax.f32 %v366, 0.0
    %v1032 = vmax.f32 %v368, 0.0
    %v1033 = vmax.f32 %v719, 0.0
    %v1034 = vmax.f32 %v721, 0.0
    %v1035 = vmax.f32 %v372, 0.0
    %v1036 = vmax.f32 %v374, 0.0
    %v1037 = vmax.f32 %v725, 0.0
    %v1038 = vmax.f32 %v727, 0.0
    %v1039 = vmax.f32 %v376, 0.0
    %v1040 = vmax.f32 %v378, 0.0
    %v1041 = vmax.f32 %v729, 0.0
    %v1042 = vmax.f32 %v731, 0.0
    %v1043 = vmax.f32 %v382, 0.0
    %v1044 = vmax.f32 %v384, 0.0
    %v1045 = vmax.f32 %v735, 0.0
    %v1046 = vmax.f32 %v737, 0.0
    %v1047 = vmax.f32 %v386, 0.0
    %v1048 = vmax.f32 %v388, 0.0
    %v1049 = vmax.f32 %v739, 0.0
    %v1050 = vmax.f32 %v741, 0.0
    %v1051 = vmax.f32 %v392, 0.0
    %v1052 = vmax.f32 %v394, 0.0
    %v1053 = vmax.f32 %v745, 0.0
    %v1054 = vmax.f32 %v747, 0.0
    %v1055 = vmax.f32 %v396, 0.0
    %v1056 = vmax.f32 %v398, 0.0
    %v1057 = vmax.f32 %v749, 0.0
    %v1058 = vmax.f32 %v751, 0.0
    %v1059 = vmax.f32 %v402, 0.0
    %v1060 = vmax.f32 %v404, 0.0
    %v1061 = vmax.f32 %v755, 0.0
    %v1062 = vmax.f32 %v757, 0.0
    %v1063 = vmax.f32 %v406, 0.0
    %v1064 = vmax.f32 %v408, 0.0
    %v1065 = vmax.f32 %v759, 0.0
    %v1066 = vmax.f32 %v761, 0.0
    %v1067 = vmax.f32 %v412, 0.0
    %v1068 = vmax.f32 %v414, 0.0
    %v1069 = vmax.f32 %v765, 0.0
    %v1070 = vmax.f32 %v767, 0.0
    %v1071 = vmax.f32 %v416, 0.0
    %v1072 = vmax.f32 %v418, 0.0
    %v1073 = vmax.f32 %v769, 0.0
    %v1074 = vmax.f32 %v771, 0.0
    %v1075 = vmax.f32 %v422, 0.0
    %v1076 = vmax.f32 %v424, 0.0
    %v1077 = vmax.f32 %v775, 0.0
    %v1078 = vmax.f32 %v777, 0.0
    %v1079 = vmax.f32 %v426, 0.0
    %v1080 = vmax.f32 %v428, 0.0
    %v1081 = vmax.f32 %v779, 0.0
    %v1082 = vmax.f32 %v781, 0.0
    %v1083 = vmax.f32 %v432, 0.0
    %v1084 = vmax.f32 %v434, 0.0
    %v1085 = vmax.f32 %v785, 0.0
    %v1086 = vmax.f32 %v787, 0.0
    %v1087 = vmax.f32 %v436, 0.0
    %v1088 = vmax.f32 %v438, 0.0
    %v1089 = vmax.f32 %v789, 0.0
    %v1090 = vmax.f32 %v791, 0.0
    %v1091 = vmax.f32 %v442, 0.0
    %v1092 = vmax.f32 %v444, 0.0
    %v1093 = vmax.f32 %v795, 0.0
    %v1094 = vmax.f32 %v797, 0.0
    %v1095 = vmax.f32 %v446, 0.0
    %v1096 = vmax.f32 %v448, 0.0
    %v1097 = vmax.f32 %v799, 0.0
    %v1098 = vmax.f32 %v801, 0.0
    %v1099 = vmax.f32 %v452, 0.0
    %v1100 = vmax.f32 %v454, 0.0
    %v1101 = vmax.f32 %v805, 0.0
    %v1102 = vmax.f32 %v807, 0.0
    %v1103 = vmax.f32 %v456, 0.0
    %v1104 = vmax.f32 %v458, 0.0
    %v1105 = vmax.f32 %v809, 0.0
    %v1106 = vmax.f32 %v811, 0.0
    %v1107 = vmax.f32 %v462, 0.0
    %v1108 = vmax.f32 %v464, 0.0
    %v1109 = vmax.f32 %v815, 0.0
    %v1110 = vmax.f32 %v817, 0.0
    %v1111 = vmax.f32 %v466, 0.0
    %v1112 = vmax.f32 %v468, 0.0
    %v1113 = vmax.f32 %v819, 0.0
    %v1114 = vmax.f32 %v821, 0.0
    %v1115 = vmax.f32 %v472, 0.0
    %v1116 = vmax.f32 %v474, 0.0
    %v1117 = vmax.f32 %v825, 0.0
    %v1118 = vmax.f32 %v827, 0.0
    %v1119 = vmax.f32 %v476, 0.0
    %v1120 = vmax.f32 %v478, 0.0
    %v1121 = vmax.f32 %v829, 0.0
    %v1122 = vmax.f32 %v831, 0.0
    %v1123 = vmax.f32 %v482, 0.0
    %v1124 = vmax.f32 %v484, 0.0
    %v1125 = vmax.f32 %v835, 0.0
    %v1126 = vmax.f32 %v837, 0.0
    %v1127 = vmax.f32 %v486, 0.0
    %v1128 = vmax.f32 %v488, 0.0
    %v1129 = vmax.f32 %v839, 0.0
    %v1130 = vmax.f32 %v841, 0.0
    %v1131 = vmax.f32 %v492, 0.0
    %v1132 = vmax.f32 %v494, 0.0
    %v1133 = vmax.f32 %v845, 0.0
    %v1134 = vmax.f32 %v847, 0.0
    %v1135 = vmax.f32 %v496, 0.0
    %v1136 = vmax.f32 %v498, 0.0
    %v1137 = vmax.f32 %v849, 0.0
    %v1138 = vmax.f32 %v851, 0.0
    %v1139 = vmax.f32 %v502, 0.0
    %v1140 = vmax.f32 %v504, 0.0
    %v1141 = vmax.f32 %v855, 0.0
    %v1142 = vmax.f32 %v857, 0.0
    %v1143 = vmax.f32 %v506, 0.0
    %v1144 = vmax.f32 %v508, 0.0
    %v1145 = vmax.f32 %v859, 0.0
    %v1146 = vmax.f32 %v861, 0.0
    %v1147 = vmax.f32 %v512, 0.0
    %v1148 = vmax.f32 %v514, 0.0
    %v1149 = vmax.f32 %v865, 0.0
    %v1150 = vmax.f32 %v867, 0.0
    %v1151 = vmax.f32 %v516, 0.0
    %v1152 = vmax.f32 %v518, 0.0
    %v1153 = vmax.f32 %v869, 0.0
    %v1154 = vmax.f32 %v871, 0.0
    %v1155 = vmax.f32 %v522, 0.0
    %v1156 = vmax.f32 %v524, 0.0
    %v1157 = vmax.f32 %v875, 0.0
    %v1158 = vmax.f32 %v877, 0.0
    %v1159 = vmax.f32 %v526, 0.0
    %v1160 = vmax.f32 %v528, 0.0
    %v1161 = vmax.f32 %v879, 0.0
    %v1162 = vmax.f32 %v881, 0.0
    %v1163 = vmax.f32 %v532, 0.0
    %v1164 = vmax.f32 %v534, 0.0
    %v1165 = vmax.f32 %v885, 0.0
    %v1166 = vmax.f32 %v887, 0.0
    %v1167 = vmax.f32 %v536, 0.0
    %v1168 = vmax.f32 %v538, 0.0
    %v1169 = vmax.f32 %v889, 0.0
    %v1170 = vmax.f32 %v891, 0.0
    %v1171 = vmax.f32 %v542, 0.0
    %v1172 = vmax.f32 %v544, 0.0
    %v1173 = vmax.f32 %v895, 0.0
    %v1174 = vmax.f32 %v897, 0.0
    %v1175 = vmax.f32 %v546, 0.0
    %v1176 = vmax.f32 %v548, 0.0
    %v1177 = vmax.f32 %v899, 0.0
    %v1178 = vmax.f32 %v901, 0.0
    %v1179 = vmax.f32 %v552, 0.0
    %v1180 = vmax.f32 %v554, 0.0
    %v1181 = vmax.f32 %v905, 0.0
    %v1182 = vmax.f32 %v907, 0.0
    %v1183 = vmax.f32 %v556, 0.0
    %v1184 = vmax.f32 %v558, 0.0
    %v1185 = vmax.f32 %v909, 0.0
    %v1186 = vmax.f32 %v911, 0.0
    %v1187 = vmax.f32 %v562, 0.0
    %v1188 = vmax.f32 %v564, 0.0
    %v1189 = vmax.f32 %v915, 0.0
    %v1190 = vmax.f32 %v917, 0.0
    %v1191 = vmax.f32 %v566, 0.0
    %v1192 = vmax.f32 %v568, 0.0
    %v1193 = vmax.f32 %v919, 0.0
    %v1194 = vmax.f32 %v921, 0.0
    %v1195 = vmax.f32 %v572, 0.0
    %v1196 = vmax.f32 %v574, 0.0
    %v1197 = vmax.f32 %v925, 0.0
    %v1198 = vmax.f32 %v927, 0.0
    %v1199 = vmax.f32 %v576, 0.0
    %v1200 = vmax.f32 %v578, 0.0
    %v1201 = vmax.f32 %v929, 0.0
    %v1202 = vmax.f32 %v931, 0.0
    %v1203 = vmax.f32 %v582, 0.0
    %v1204 = vmax.f32 %v584, 0.0
    %v1205 = vmax.f32 %v935, 0.0
    %v1206 = vmax.f32 %v937, 0.0
    %v1207 = vmax.f32 %v586, 0.0
    %v1208 = vmax.f32 %v588, 0.0
    %v1209 = vmax.f32 %v939, 0.0
    %v1210 = vmax.f32 %v941, 0.0
    %v1211 = vmax.f32 %v592, 0.0
    %v1212 = vmax.f32 %v594, 0.0
    %v1213 = vmax.f32 %v945, 0.0
    %v1214 = vmax.f32 %v947, 0.0
    %v1215 = vmax.f32 %v596, 0.0
    %v1216 = vmax.f32 %v598, 0.0
    %v1217 = vmax.f32 %v949, 0.0
    %v1218 = vmax.f32 %v951, 0.0
    %v1219 = vmax.f32 %v602, 0.0
    %v1220 = vmax.f32 %v604, 0.0
    %v1221 = vmax.f32 %v955, 0.0
    %v1222 = vmax.f32 %v957, 0.0
    %v1223 = vmax.f32 %v606, 0.0
    %v1224 = vmax.f32 %v608, 0.0
    %v1225 = vmax.f32 %v959, 0.0
    %v1226 = vmax.f32 %v961, 0.0
    %v1227 = vmax.f32 %v612, 0.0
    %v1228 = vmax.f32 %v614, 0.0
    %v1229 = vmax.f32 %v965, 0.0
    %v1230 = vmax.f32 %v967, 0.0
    %v1231 = vmax.f32 %v616, 0.0
    %v1232 = vmax.f32 %v618, 0.0
    %v1233 = vmax.f32 %v969, 0.0
    %v1234 = vmax.f32 %v971, 0.0
    %v1235 = vmax.f32 %v622, 0.0
    %v1236 = vmax.f32 %v624, 0.0
    %v1237 = vmax.f32 %v975, 0.0
    %v1238 = vmax.f32 %v977, 0.0
    %v1239 = vmax.f32 %v626, 0.0
    %v1240 = vmax.f32 %v628, 0.0
    %v1241 = vmax.f32 %v979, 0.0
    %v1242 = vmax.f32 %v981, 0.0
    %v1243 = vmax.f32 %v632, 0.0
    %v1244 = vmax.f32 %v634, 0.0
    %v1245 = vmax.f32 %v985, 0.0
    %v1246 = vmax.f32 %v987, 0.0
    %v1247 = vmax.f32 %v636, 0.0
    %v1248 = vmax.f32 %v638, 0.0
    %v1249 = vmax.f32 %v989, 0.0
    %v1250 = vmax.f32 %v991, 0.0
    %v1251 = vmax.f32 %v642, 0.0
    %v1252 = vmax.f32 %v644, 0.0
    %v1253 = vmax.f32 %v995, 0.0
    %v1254 = vmax.f32 %v997, 0.0
    %v1255 = vmax.f32 %v646, 0.0
    %v1256 = vmax.f32 %v648, 0.0
    %v1257 = vmax.f32 %v999, 0.0
    %v1258 = vmax.f32 %v1001, 0.0
    %v1259 = vpack.c.bf16 %v1007, %v1003
    %v1260 = vpack.c.bf16 %v1008, %v1004
    %v1261 = vpack.c.bf16 %v1009, %v1005
    %v1262 = vpack.c.bf16 %v1010, %v1006
    %v1263 = vpack.c.bf16 %v1015, %v1011
    %v1264 = vpack.c.bf16 %v1016, %v1012
    %v1265 = vpack.c.bf16 %v1017, %v1013
    %v1266 = vpack.c.bf16 %v1018, %v1014
    %v1267 = vpack.c.bf16 %v1023, %v1019
    %v1268 = vpack.c.bf16 %v1024, %v1020
    %v1269 = vpack.c.bf16 %v1025, %v1021
    %v1270 = vpack.c.bf16 %v1026, %v1022
    %v1271 = vpack.c.bf16 %v1031, %v1027
    %v1272 = vpack.c.bf16 %v1032, %v1028
    %v1273 = vpack.c.bf16 %v1033, %v1029
    %v1274 = vpack.c.bf16 %v1034, %v1030
    %v1275 = vpack.c.bf16 %v1039, %v1035
    %v1276 = vpack.c.bf16 %v1040, %v1036
    %v1277 = vpack.c.bf16 %v1041, %v1037
    %v1278 = vpack.c.bf16 %v1042, %v1038
    %v1279 = vpack.c.bf16 %v1047, %v1043
    %v1280 = vpack.c.bf16 %v1048, %v1044
    %v1281 = vpack.c.bf16 %v1049, %v1045
    %v1282 = vpack.c.bf16 %v1050, %v1046
    %v1283 = vpack.c.bf16 %v1055, %v1051
    %v1284 = vpack.c.bf16 %v1056, %v1052
    %v1285 = vpack.c.bf16 %v1057, %v1053
    %v1286 = vpack.c.bf16 %v1058, %v1054
    %v1287 = vpack.c.bf16 %v1063, %v1059
    %v1288 = vpack.c.bf16 %v1064, %v1060
    %v1289 = vpack.c.bf16 %v1065, %v1061
    %v1290 = vpack.c.bf16 %v1066, %v1062
    %v1291 = vpack.c.bf16 %v1071, %v1067
    %v1292 = vpack.c.bf16 %v1072, %v1068
    %v1293 = vpack.c.bf16 %v1073, %v1069
    %v1294 = vpack.c.bf16 %v1074, %v1070
    %v1295 = vpack.c.bf16 %v1079, %v1075
    %v1296 = vpack.c.bf16 %v1080, %v1076
    %v1297 = vpack.c.bf16 %v1081, %v1077
    %v1298 = vpack.c.bf16 %v1082, %v1078
    %v1299 = vpack.c.bf16 %v1087, %v1083
    %v1300 = vpack.c.bf16 %v1088, %v1084
    %v1301 = vpack.c.bf16 %v1089, %v1085
    %v1302 = vpack.c.bf16 %v1090, %v1086
    %v1303 = vpack.c.bf16 %v1095, %v1091
    %v1304 = vpack.c.bf16 %v1096, %v1092
    %v1305 = vpack.c.bf16 %v1097, %v1093
    %v1306 = vpack.c.bf16 %v1098, %v1094
    %v1307 = vpack.c.bf16 %v1103, %v1099
    %v1308 = vpack.c.bf16 %v1104, %v1100
    %v1309 = vpack.c.bf16 %v1105, %v1101
    %v1310 = vpack.c.bf16 %v1106, %v1102
    %v1311 = vpack.c.bf16 %v1111, %v1107
    %v1312 = vpack.c.bf16 %v1112, %v1108
    %v1313 = vpack.c.bf16 %v1113, %v1109
    %v1314 = vpack.c.bf16 %v1114, %v1110
    %v1315 = vpack.c.bf16 %v1119, %v1115
    %v1316 = vpack.c.bf16 %v1120, %v1116
    %v1317 = vpack.c.bf16 %v1121, %v1117
    %v1318 = vpack.c.bf16 %v1122, %v1118
    %v1319 = vpack.c.bf16 %v1127, %v1123
    %v1320 = vpack.c.bf16 %v1128, %v1124
    %v1321 = vpack.c.bf16 %v1129, %v1125
    %v1322 = vpack.c.bf16 %v1130, %v1126
    %v1323 = vpack.c.bf16 %v1135, %v1131
    %v1324 = vpack.c.bf16 %v1136, %v1132
    %v1325 = vpack.c.bf16 %v1137, %v1133
    %v1326 = vpack.c.bf16 %v1138, %v1134
    %v1327 = vpack.c.bf16 %v1143, %v1139
    %v1328 = vpack.c.bf16 %v1144, %v1140
    %v1329 = vpack.c.bf16 %v1145, %v1141
    %v1330 = vpack.c.bf16 %v1146, %v1142
    %v1331 = vpack.c.bf16 %v1151, %v1147
    %v1332 = vpack.c.bf16 %v1152, %v1148
    %v1333 = vpack.c.bf16 %v1153, %v1149
    %v1334 = vpack.c.bf16 %v1154, %v1150
    %v1335 = vpack.c.bf16 %v1159, %v1155
    %v1336 = vpack.c.bf16 %v1160, %v1156
    %v1337 = vpack.c.bf16 %v1161, %v1157
    %v1338 = vpack.c.bf16 %v1162, %v1158
    %v1339 = vpack.c.bf16 %v1167, %v1163
    %v1340 = vpack.c.bf16 %v1168, %v1164
    %v1341 = vpack.c.bf16 %v1169, %v1165
    %v1342 = vpack.c.bf16 %v1170, %v1166
    %v1343 = vpack.c.bf16 %v1175, %v1171
    %v1344 = vpack.c.bf16 %v1176, %v1172
    %v1345 = vpack.c.bf16 %v1177, %v1173
    %v1346 = vpack.c.bf16 %v1178, %v1174
    %v1347 = vpack.c.bf16 %v1183, %v1179
    %v1348 = vpack.c.bf16 %v1184, %v1180
    %v1349 = vpack.c.bf16 %v1185, %v1181
    %v1350 = vpack.c.bf16 %v1186, %v1182
    %v1351 = vpack.c.bf16 %v1191, %v1187
    %v1352 = vpack.c.bf16 %v1192, %v1188
    %v1353 = vpack.c.bf16 %v1193, %v1189
    %v1354 = vpack.c.bf16 %v1194, %v1190
    %v1355 = vpack.c.bf16 %v1199, %v1195
    %v1356 = vpack.c.bf16 %v1200, %v1196
    %v1357 = vpack.c.bf16 %v1201, %v1197
    %v1358 = vpack.c.bf16 %v1202, %v1198
    %v1359 = vpack.c.bf16 %v1207, %v1203
    %v1360 = vpack.c.bf16 %v1208, %v1204
    %v1361 = vpack.c.bf16 %v1209, %v1205
    %v1362 = vpack.c.bf16 %v1210, %v1206
    %v1363 = vpack.c.bf16 %v1215, %v1211
    %v1364 = vpack.c.bf16 %v1216, %v1212
    %v1365 = vpack.c.bf16 %v1217, %v1213
    %v1366 = vpack.c.bf16 %v1218, %v1214
    %v1367 = vpack.c.bf16 %v1223, %v1219
    %v1368 = vpack.c.bf16 %v1224, %v1220
    %v1369 = vpack.c.bf16 %v1225, %v1221
    %v1370 = vpack.c.bf16 %v1226, %v1222
    %v1371 = vpack.c.bf16 %v1231, %v1227
    %v1372 = vpack.c.bf16 %v1232, %v1228
    %v1373 = vpack.c.bf16 %v1233, %v1229
    %v1374 = vpack.c.bf16 %v1234, %v1230
    %v1375 = vpack.c.bf16 %v1239, %v1235
    %v1376 = vpack.c.bf16 %v1240, %v1236
    %v1377 = vpack.c.bf16 %v1241, %v1237
    %v1378 = vpack.c.bf16 %v1242, %v1238
    %v1379 = vpack.c.bf16 %v1247, %v1243
    %v1380 = vpack.c.bf16 %v1248, %v1244
    %v1381 = vpack.c.bf16 %v1249, %v1245
    %v1382 = vpack.c.bf16 %v1250, %v1246
    %v1383 = vpack.c.bf16 %v1255, %v1251
    %v1384 = vpack.c.bf16 %v1256, %v1252
    %v1385 = vpack.c.bf16 %v1257, %v1253
    %v1386 = vpack.c.bf16 %v1258, %v1254
    %v1387 = vld [vmem:[#allocation3] sm:$0xff]
    %v1388 = vld [vmem:[#allocation3 + $0x8] sm:$0xff]
    %v1389 = vld [vmem:[#allocation3 + $0x10] sm:$0xff]
    %v1390 = vld [vmem:[#allocation3 + $0x18] sm:$0xff]
    %v1391 = vld [vmem:[#allocation3 + $0x20] sm:$0xff]
    %v1392 = vld [vmem:[#allocation3 + $0x28] sm:$0xff]
    %v1393 = vld [vmem:[#allocation3 + $0x30] sm:$0xff]
    %v1394 = vld [vmem:[#allocation3 + $0x38] sm:$0xff]
    %v1395 = vld [vmem:[#allocation3 + $0x40] sm:$0xff]
    %v1396 = vld [vmem:[#allocation3 + $0x48] sm:$0xff]
    %v1397 = vld [vmem:[#allocation3 + $0x50] sm:$0xff]
    %v1398 = vld [vmem:[#allocation3 + $0x58] sm:$0xff]
    %v1399 = vld [vmem:[#allocation3 + $0x60] sm:$0xff]
    %v1400 = vld [vmem:[#allocation3 + $0x68] sm:$0xff]
    %v1401 = vld [vmem:[#allocation3 + $0x70] sm:$0xff]
    %v1402 = vld [vmem:[#allocation3 + $0x78] sm:$0xff]
    %v1403 = vld [vmem:[#allocation3 + $0x80] sm:$0xff]
    %v1404 = vld [vmem:[#allocation3 + $0x88] sm:$0xff]
    %v1405 = vld [vmem:[#allocation3 + $0x90] sm:$0xff]
    %v1406 = vld [vmem:[#allocation3 + $0x98] sm:$0xff]
    %v1407 = vld [vmem:[#allocation3 + $0xa0] sm:$0xff]
    %v1408 = vld [vmem:[#allocation3 + $0xa8] sm:$0xff]
    %v1409 = vld [vmem:[#allocation3 + $0xb0] sm:$0xff]
    %v1410 = vld [vmem:[#allocation3 + $0xb8] sm:$0xff]
    %v1411 = vld [vmem:[#allocation3 + $0xc0] sm:$0xff]
    %v1412 = vld [vmem:[#allocation3 + $0xc8] sm:$0xff]
    %v1413 = vld [vmem:[#allocation3 + $0xd0] sm:$0xff]
    %v1414 = vld [vmem:[#allocation3 + $0xd8] sm:$0xff]
    %v1415 = vld [vmem:[#allocation3 + $0xe0] sm:$0xff]
    %v1416 = vld [vmem:[#allocation3 + $0xe8] sm:$0xff]
    %v1417 = vld [vmem:[#allocation3 + $0xf0] sm:$0xff]
    %v1418 = vld [vmem:[#allocation3 + $0xf8] sm:$0xff]
    %v1419 = vld [vmem:[#allocation3 + $0x100] sm:$0xff]
    %v1420 = vld [vmem:[#allocation3 + $0x108] sm:$0xff]
    %v1421 = vld [vmem:[#allocation3 + $0x110] sm:$0xff]
    %v1422 = vld [vmem:[#allocation3 + $0x118] sm:$0xff]
    %v1423 = vld [vmem:[#allocation3 + $0x120] sm:$0xff]
    %v1424 = vld [vmem:[#allocation3 + $0x128] sm:$0xff]
    %v1425 = vld [vmem:[#allocation3 + $0x130] sm:$0xff]
    %v1426 = vld [vmem:[#allocation3 + $0x138] sm:$0xff]
    %v1427 = vld [vmem:[#allocation3 + $0x140] sm:$0xff]
    %v1428 = vld [vmem:[#allocation3 + $0x148] sm:$0xff]
    %v1429 = vld [vmem:[#allocation3 + $0x150] sm:$0xff]
    %v1430 = vld [vmem:[#allocation3 + $0x158] sm:$0xff]
    %v1431 = vld [vmem:[#allocation3 + $0x160] sm:$0xff]
    %v1432 = vld [vmem:[#allocation3 + $0x168] sm:$0xff]
    %v1433 = vld [vmem:[#allocation3 + $0x170] sm:$0xff]
    %v1434 = vld [vmem:[#allocation3 + $0x178] sm:$0xff]
    %v1435 = vld [vmem:[#allocation3 + $0x180] sm:$0xff]
    %v1436 = vld [vmem:[#allocation3 + $0x188] sm:$0xff]
    %v1437 = vld [vmem:[#allocation3 + $0x190] sm:$0xff]
    %v1438 = vld [vmem:[#allocation3 + $0x198] sm:$0xff]
    %v1439 = vld [vmem:[#allocation3 + $0x1a0] sm:$0xff]
    %v1440 = vld [vmem:[#allocation3 + $0x1a8] sm:$0xff]
    %v1441 = vld [vmem:[#allocation3 + $0x1b0] sm:$0xff]
    %v1442 = vld [vmem:[#allocation3 + $0x1b8] sm:$0xff]
    %v1443 = vld [vmem:[#allocation3 + $0x1c0] sm:$0xff]
    %v1444 = vld [vmem:[#allocation3 + $0x1c8] sm:$0xff]
    %v1445 = vld [vmem:[#allocation3 + $0x1d0] sm:$0xff]
    %v1446 = vld [vmem:[#allocation3 + $0x1d8] sm:$0xff]
    %v1447 = vld [vmem:[#allocation3 + $0x1e0] sm:$0xff]
    %v1448 = vld [vmem:[#allocation3 + $0x1e8] sm:$0xff]
    %v1449 = vld [vmem:[#allocation3 + $0x1f0] sm:$0xff]
    %v1450 = vld [vmem:[#allocation3 + $0x1f8] sm:$0xff]
    %v1451 = vld [vmem:[#allocation3 + $0x200] sm:$0xff]
    %v1452 = vld [vmem:[#allocation3 + $0x208] sm:$0xff]
    %v1453 = vld [vmem:[#allocation3 + $0x210] sm:$0xff]
    %v1454 = vld [vmem:[#allocation3 + $0x218] sm:$0xff]
    %v1455 = vld [vmem:[#allocation3 + $0x220] sm:$0xff]
    %v1456 = vld [vmem:[#allocation3 + $0x228] sm:$0xff]
    %v1457 = vld [vmem:[#allocation3 + $0x230] sm:$0xff]
    %v1458 = vld [vmem:[#allocation3 + $0x238] sm:$0xff]
    %v1459 = vld [vmem:[#allocation3 + $0x240] sm:$0xff]
    %v1460 = vld [vmem:[#allocation3 + $0x248] sm:$0xff]
    %v1461 = vld [vmem:[#allocation3 + $0x250] sm:$0xff]
    %v1462 = vld [vmem:[#allocation3 + $0x258] sm:$0xff]
    %v1463 = vld [vmem:[#allocation3 + $0x260] sm:$0xff]
    %v1464 = vld [vmem:[#allocation3 + $0x268] sm:$0xff]
    %v1465 = vld [vmem:[#allocation3 + $0x270] sm:$0xff]
    %v1466 = vld [vmem:[#allocation3 + $0x278] sm:$0xff]
    %v1467 = vld [vmem:[#allocation3 + $0x280] sm:$0xff]
    %v1468 = vld [vmem:[#allocation3 + $0x288] sm:$0xff]
    %v1469 = vld [vmem:[#allocation3 + $0x290] sm:$0xff]
    %v1470 = vld [vmem:[#allocation3 + $0x298] sm:$0xff]
    %v1471 = vld [vmem:[#allocation3 + $0x2a0] sm:$0xff]
    %v1472 = vld [vmem:[#allocation3 + $0x2a8] sm:$0xff]
    %v1473 = vld [vmem:[#allocation3 + $0x2b0] sm:$0xff]
    %v1474 = vld [vmem:[#allocation3 + $0x2b8] sm:$0xff]
    %v1475 = vld [vmem:[#allocation3 + $0x2c0] sm:$0xff]
    %v1476 = vld [vmem:[#allocation3 + $0x2c8] sm:$0xff]
    %v1477 = vld [vmem:[#allocation3 + $0x2d0] sm:$0xff]
    %v1478 = vld [vmem:[#allocation3 + $0x2d8] sm:$0xff]
    %v1479 = vld [vmem:[#allocation3 + $0x2e0] sm:$0xff]
    %v1480 = vld [vmem:[#allocation3 + $0x2e8] sm:$0xff]
    %v1481 = vld [vmem:[#allocation3 + $0x2f0] sm:$0xff]
    %v1482 = vld [vmem:[#allocation3 + $0x2f8] sm:$0xff]
    %v1483 = vld [vmem:[#allocation3 + $0x300] sm:$0xff]
    %v1484 = vld [vmem:[#allocation3 + $0x308] sm:$0xff]
    %v1485 = vld [vmem:[#allocation3 + $0x310] sm:$0xff]
    %v1486 = vld [vmem:[#allocation3 + $0x318] sm:$0xff]
    %v1487 = vld [vmem:[#allocation3 + $0x320] sm:$0xff]
    %v1488 = vld [vmem:[#allocation3 + $0x328] sm:$0xff]
    %v1489 = vld [vmem:[#allocation3 + $0x330] sm:$0xff]
    %v1490 = vld [vmem:[#allocation3 + $0x338] sm:$0xff]
    %v1491 = vld [vmem:[#allocation3 + $0x340] sm:$0xff]
    %v1492 = vld [vmem:[#allocation3 + $0x348] sm:$0xff]
    %v1493 = vld [vmem:[#allocation3 + $0x350] sm:$0xff]
    %v1494 = vld [vmem:[#allocation3 + $0x358] sm:$0xff]
    %v1495 = vld [vmem:[#allocation3 + $0x360] sm:$0xff]
    %v1496 = vld [vmem:[#allocation3 + $0x368] sm:$0xff]
    %v1497 = vld [vmem:[#allocation3 + $0x370] sm:$0xff]
    %v1498 = vld [vmem:[#allocation3 + $0x378] sm:$0xff]
    %v1499 = vld [vmem:[#allocation3 + $0x380] sm:$0xff]
    %v1500 = vld [vmem:[#allocation3 + $0x388] sm:$0xff]
    %v1501 = vld [vmem:[#allocation3 + $0x390] sm:$0xff]
    %v1502 = vld [vmem:[#allocation3 + $0x398] sm:$0xff]
    %v1503 = vld [vmem:[#allocation3 + $0x3a0] sm:$0xff]
    %v1504 = vld [vmem:[#allocation3 + $0x3a8] sm:$0xff]
    %v1505 = vld [vmem:[#allocation3 + $0x3b0] sm:$0xff]
    %v1506 = vld [vmem:[#allocation3 + $0x3b8] sm:$0xff]
    %v1507 = vld [vmem:[#allocation3 + $0x3c0] sm:$0xff]
    %v1508 = vld [vmem:[#allocation3 + $0x3c8] sm:$0xff]
    %v1509 = vld [vmem:[#allocation3 + $0x3d0] sm:$0xff]
    %v1510 = vld [vmem:[#allocation3 + $0x3d8] sm:$0xff]
    %v1511 = vld [vmem:[#allocation3 + $0x3e0] sm:$0xff]
    %v1512 = vld [vmem:[#allocation3 + $0x3e8] sm:$0xff]
    %v1513 = vld [vmem:[#allocation3 + $0x3f0] sm:$0xff]
    %v1514 = vld [vmem:[#allocation3 + $0x3f8] sm:$0xff]
    %v1515 = vld [vmem:[%s4] sm:$0xf]
    %v1517 = vlaneseq
    %v1518 = vshrl.u32 %v1517, 7
    %v1519 = vsub.s32 0, %v1518
    %v1520 = vrot.slane %v1515, %v1519
    %v1521 = vlaneseq
    %v1522 = vshrl.u32 %v1521, 7
    %v1523 = vsub.s32 1, %v1522
    %v1524 = vrot.slane %v1515, %v1523
    %v1525 = vlaneseq
    %v1526 = vshrl.u32 %v1525, 7
    %v1527 = vsub.s32 2, %v1526
    %v1528 = vrot.slane %v1515, %v1527
    %v1529 = vlaneseq
    %v1530 = vshrl.u32 %v1529, 7
    %v1531 = vsub.s32 3, %v1530
    %v1532 = vrot.slane %v1515, %v1531
    %v1665 = vunpack.c.l.b16 %v1387
    %v1666 = vunpack.c.h.b16 %v1387
    %v1667 = vunpack.c.l.b16 %v1388
    %v1668 = vunpack.c.h.b16 %v1388
    %v1669 = vunpack.c.l.b16 %v1389
    %v1670 = vunpack.c.h.b16 %v1389
    %v1671 = vunpack.c.l.b16 %v1390
    %v1672 = vunpack.c.h.b16 %v1390
    %v1673 = vunpack.c.l.b16 %v1391
    %v1674 = vunpack.c.h.b16 %v1391
    %v1675 = vunpack.c.l.b16 %v1392
    %v1676 = vunpack.c.h.b16 %v1392
    %v1677 = vunpack.c.l.b16 %v1393
    %v1678 = vunpack.c.h.b16 %v1393
    %v1679 = vunpack.c.l.b16 %v1394
    %v1680 = vunpack.c.h.b16 %v1394
    %v1681 = vunpack.c.l.b16 %v1395
    %v1682 = vunpack.c.h.b16 %v1395
    %v1683 = vunpack.c.l.b16 %v1396
    %v1684 = vunpack.c.h.b16 %v1396
    %v1685 = vunpack.c.l.b16 %v1397
    %v1686 = vunpack.c.h.b16 %v1397
    %v1687 = vunpack.c.l.b16 %v1398
    %v1688 = vunpack.c.h.b16 %v1398
    %v1689 = vunpack.c.l.b16 %v1399
    %v1690 = vunpack.c.h.b16 %v1399
    %v1691 = vunpack.c.l.b16 %v1400
    %v1692 = vunpack.c.h.b16 %v1400
    %v1693 = vunpack.c.l.b16 %v1401
    %v1694 = vunpack.c.h.b16 %v1401
    %v1695 = vunpack.c.l.b16 %v1402
    %v1696 = vunpack.c.h.b16 %v1402
    %v1697 = vunpack.c.l.b16 %v1403
    %v1698 = vunpack.c.h.b16 %v1403
    %v1699 = vunpack.c.l.b16 %v1404
    %v1700 = vunpack.c.h.b16 %v1404
    %v1701 = vunpack.c.l.b16 %v1405
    %v1702 = vunpack.c.h.b16 %v1405
    %v1703 = vunpack.c.l.b16 %v1406
    %v1704 = vunpack.c.h.b16 %v1406
    %v1705 = vunpack.c.l.b16 %v1407
    %v1706 = vunpack.c.h.b16 %v1407
    %v1707 = vunpack.c.l.b16 %v1408
    %v1708 = vunpack.c.h.b16 %v1408
    %v1709 = vunpack.c.l.b16 %v1409
    %v1710 = vunpack.c.h.b16 %v1409
    %v1711 = vunpack.c.l.b16 %v1410
    %v1712 = vunpack.c.h.b16 %v1410
    %v1713 = vunpack.c.l.b16 %v1411
    %v1714 = vunpack.c.h.b16 %v1411
    %v1715 = vunpack.c.l.b16 %v1412
    %v1716 = vunpack.c.h.b16 %v1412
    %v1717 = vunpack.c.l.b16 %v1413
    %v1718 = vunpack.c.h.b16 %v1413
    %v1719 = vunpack.c.l.b16 %v1414
    %v1720 = vunpack.c.h.b16 %v1414
    %v1721 = vunpack.c.l.b16 %v1415
    %v1722 = vunpack.c.h.b16 %v1415
    %v1723 = vunpack.c.l.b16 %v1416
    %v1724 = vunpack.c.h.b16 %v1416
    %v1725 = vunpack.c.l.b16 %v1417
    %v1726 = vunpack.c.h.b16 %v1417
    %v1727 = vunpack.c.l.b16 %v1418
    %v1728 = vunpack.c.h.b16 %v1418
    %v1729 = vunpack.c.l.b16 %v1419
    %v1730 = vunpack.c.h.b16 %v1419
    %v1731 = vunpack.c.l.b16 %v1420
    %v1732 = vunpack.c.h.b16 %v1420
    %v1733 = vunpack.c.l.b16 %v1421
    %v1734 = vunpack.c.h.b16 %v1421
    %v1735 = vunpack.c.l.b16 %v1422
    %v1736 = vunpack.c.h.b16 %v1422
    %v1737 = vunpack.c.l.b16 %v1423
    %v1738 = vunpack.c.h.b16 %v1423
    %v1739 = vunpack.c.l.b16 %v1424
    %v1740 = vunpack.c.h.b16 %v1424
    %v1741 = vunpack.c.l.b16 %v1425
    %v1742 = vunpack.c.h.b16 %v1425
    %v1743 = vunpack.c.l.b16 %v1426
    %v1744 = vunpack.c.h.b16 %v1426
    %v1745 = vunpack.c.l.b16 %v1427
    %v1746 = vunpack.c.h.b16 %v1427
    %v1747 = vunpack.c.l.b16 %v1428
    %v1748 = vunpack.c.h.b16 %v1428
    %v1749 = vunpack.c.l.b16 %v1429
    %v1750 = vunpack.c.h.b16 %v1429
    %v1751 = vunpack.c.l.b16 %v1430
    %v1752 = vunpack.c.h.b16 %v1430
    %v1753 = vunpack.c.l.b16 %v1431
    %v1754 = vunpack.c.h.b16 %v1431
    %v1755 = vunpack.c.l.b16 %v1432
    %v1756 = vunpack.c.h.b16 %v1432
    %v1757 = vunpack.c.l.b16 %v1433
    %v1758 = vunpack.c.h.b16 %v1433
    %v1759 = vunpack.c.l.b16 %v1434
    %v1760 = vunpack.c.h.b16 %v1434
    %v1761 = vunpack.c.l.b16 %v1435
    %v1762 = vunpack.c.h.b16 %v1435
    %v1763 = vunpack.c.l.b16 %v1436
    %v1764 = vunpack.c.h.b16 %v1436
    %v1765 = vunpack.c.l.b16 %v1437
    %v1766 = vunpack.c.h.b16 %v1437
    %v1767 = vunpack.c.l.b16 %v1438
    %v1768 = vunpack.c.h.b16 %v1438
    %v1769 = vunpack.c.l.b16 %v1439
    %v1770 = vunpack.c.h.b16 %v1439
    %v1771 = vunpack.c.l.b16 %v1440
    %v1772 = vunpack.c.h.b16 %v1440
    %v1773 = vunpack.c.l.b16 %v1441
    %v1774 = vunpack.c.h.b16 %v1441
    %v1775 = vunpack.c.l.b16 %v1442
    %v1776 = vunpack.c.h.b16 %v1442
    %v1777 = vunpack.c.l.b16 %v1443
    %v1778 = vunpack.c.h.b16 %v1443
    %v1779 = vunpack.c.l.b16 %v1444
    %v1780 = vunpack.c.h.b16 %v1444
    %v1781 = vunpack.c.l.b16 %v1445
    %v1782 = vunpack.c.h.b16 %v1445
    %v1783 = vunpack.c.l.b16 %v1446
    %v1784 = vunpack.c.h.b16 %v1446
    %v1785 = vunpack.c.l.b16 %v1447
    %v1786 = vunpack.c.h.b16 %v1447
    %v1787 = vunpack.c.l.b16 %v1448
    %v1788 = vunpack.c.h.b16 %v1448
    %v1789 = vunpack.c.l.b16 %v1449
    %v1790 = vunpack.c.h.b16 %v1449
    %v1791 = vunpack.c.l.b16 %v1450
    %v1792 = vunpack.c.h.b16 %v1450
    %v1793 = vunpack.c.l.b16 %v1451
    %v1794 = vunpack.c.h.b16 %v1451
    %v1795 = vunpack.c.l.b16 %v1452
    %v1796 = vunpack.c.h.b16 %v1452
    %v1797 = vunpack.c.l.b16 %v1453
    %v1798 = vunpack.c.h.b16 %v1453
    %v1799 = vunpack.c.l.b16 %v1454
    %v1800 = vunpack.c.h.b16 %v1454
    %v1801 = vunpack.c.l.b16 %v1455
    %v1802 = vunpack.c.h.b16 %v1455
    %v1803 = vunpack.c.l.b16 %v1456
    %v1804 = vunpack.c.h.b16 %v1456
    %v1805 = vunpack.c.l.b16 %v1457
    %v1806 = vunpack.c.h.b16 %v1457
    %v1807 = vunpack.c.l.b16 %v1458
    %v1808 = vunpack.c.h.b16 %v1458
    %v1809 = vunpack.c.l.b16 %v1459
    %v1810 = vunpack.c.h.b16 %v1459
    %v1811 = vunpack.c.l.b16 %v1460
    %v1812 = vunpack.c.h.b16 %v1460
    %v1813 = vunpack.c.l.b16 %v1461
    %v1814 = vunpack.c.h.b16 %v1461
    %v1815 = vunpack.c.l.b16 %v1462
    %v1816 = vunpack.c.h.b16 %v1462
    %v1817 = vunpack.c.l.b16 %v1463
    %v1818 = vunpack.c.h.b16 %v1463
    %v1819 = vunpack.c.l.b16 %v1464
    %v1820 = vunpack.c.h.b16 %v1464
    %v1821 = vunpack.c.l.b16 %v1465
    %v1822 = vunpack.c.h.b16 %v1465
    %v1823 = vunpack.c.l.b16 %v1466
    %v1824 = vunpack.c.h.b16 %v1466
    %v1825 = vunpack.c.l.b16 %v1467
    %v1826 = vunpack.c.h.b16 %v1467
    %v1827 = vunpack.c.l.b16 %v1468
    %v1828 = vunpack.c.h.b16 %v1468
    %v1829 = vunpack.c.l.b16 %v1469
    %v1830 = vunpack.c.h.b16 %v1469
    %v1831 = vunpack.c.l.b16 %v1470
    %v1832 = vunpack.c.h.b16 %v1470
    %v1833 = vunpack.c.l.b16 %v1471
    %v1834 = vunpack.c.h.b16 %v1471
    %v1835 = vunpack.c.l.b16 %v1472
    %v1836 = vunpack.c.h.b16 %v1472
    %v1837 = vunpack.c.l.b16 %v1473
    %v1838 = vunpack.c.h.b16 %v1473
    %v1839 = vunpack.c.l.b16 %v1474
    %v1840 = vunpack.c.h.b16 %v1474
    %v1841 = vunpack.c.l.b16 %v1475
    %v1842 = vunpack.c.h.b16 %v1475
    %v1843 = vunpack.c.l.b16 %v1476
    %v1844 = vunpack.c.h.b16 %v1476
    %v1845 = vunpack.c.l.b16 %v1477
    %v1846 = vunpack.c.h.b16 %v1477
    %v1847 = vunpack.c.l.b16 %v1478
    %v1848 = vunpack.c.h.b16 %v1478
    %v1849 = vunpack.c.l.b16 %v1479
    %v1850 = vunpack.c.h.b16 %v1479
    %v1851 = vunpack.c.l.b16 %v1480
    %v1852 = vunpack.c.h.b16 %v1480
    %v1853 = vunpack.c.l.b16 %v1481
    %v1854 = vunpack.c.h.b16 %v1481
    %v1855 = vunpack.c.l.b16 %v1482
    %v1856 = vunpack.c.h.b16 %v1482
    %v1857 = vunpack.c.l.b16 %v1483
    %v1858 = vunpack.c.h.b16 %v1483
    %v1859 = vunpack.c.l.b16 %v1484
    %v1860 = vunpack.c.h.b16 %v1484
    %v1861 = vunpack.c.l.b16 %v1485
    %v1862 = vunpack.c.h.b16 %v1485
    %v1863 = vunpack.c.l.b16 %v1486
    %v1864 = vunpack.c.h.b16 %v1486
    %v1865 = vunpack.c.l.b16 %v1487
    %v1866 = vunpack.c.h.b16 %v1487
    %v1867 = vunpack.c.l.b16 %v1488
    %v1868 = vunpack.c.h.b16 %v1488
    %v1869 = vunpack.c.l.b16 %v1489
    %v1870 = vunpack.c.h.b16 %v1489
    %v1871 = vunpack.c.l.b16 %v1490
    %v1872 = vunpack.c.h.b16 %v1490
    %v1873 = vunpack.c.l.b16 %v1491
    %v1874 = vunpack.c.h.b16 %v1491
    %v1875 = vunpack.c.l.b16 %v1492
    %v1876 = vunpack.c.h.b16 %v1492
    %v1877 = vunpack.c.l.b16 %v1493
    %v1878 = vunpack.c.h.b16 %v1493
    %v1879 = vunpack.c.l.b16 %v1494
    %v1880 = vunpack.c.h.b16 %v1494
    %v1881 = vunpack.c.l.b16 %v1495
    %v1882 = vunpack.c.h.b16 %v1495
    %v1883 = vunpack.c.l.b16 %v1496
    %v1884 = vunpack.c.h.b16 %v1496
    %v1885 = vunpack.c.l.b16 %v1497
    %v1886 = vunpack.c.h.b16 %v1497
    %v1887 = vunpack.c.l.b16 %v1498
    %v1888 = vunpack.c.h.b16 %v1498
    %v1889 = vunpack.c.l.b16 %v1499
    %v1890 = vunpack.c.h.b16 %v1499
    %v1891 = vunpack.c.l.b16 %v1500
    %v1892 = vunpack.c.h.b16 %v1500
    %v1893 = vunpack.c.l.b16 %v1501
    %v1894 = vunpack.c.h.b16 %v1501
    %v1895 = vunpack.c.l.b16 %v1502
    %v1896 = vunpack.c.h.b16 %v1502
    %v1897 = vunpack.c.l.b16 %v1503
    %v1898 = vunpack.c.h.b16 %v1503
    %v1899 = vunpack.c.l.b16 %v1504
    %v1900 = vunpack.c.h.b16 %v1504
    %v1901 = vunpack.c.l.b16 %v1505
    %v1902 = vunpack.c.h.b16 %v1505
    %v1903 = vunpack.c.l.b16 %v1506
    %v1904 = vunpack.c.h.b16 %v1506
    %v1905 = vunpack.c.l.b16 %v1507
    %v1906 = vunpack.c.h.b16 %v1507
    %v1907 = vunpack.c.l.b16 %v1508
    %v1908 = vunpack.c.h.b16 %v1508
    %v1909 = vunpack.c.l.b16 %v1509
    %v1910 = vunpack.c.h.b16 %v1509
    %v1911 = vunpack.c.l.b16 %v1510
    %v1912 = vunpack.c.h.b16 %v1510
    %v1913 = vunpack.c.l.b16 %v1511
    %v1914 = vunpack.c.h.b16 %v1511
    %v1915 = vunpack.c.l.b16 %v1512
    %v1916 = vunpack.c.h.b16 %v1512
    %v1917 = vunpack.c.l.b16 %v1513
    %v1918 = vunpack.c.h.b16 %v1513
    %v1919 = vunpack.c.l.b16 %v1514
    %v1920 = vunpack.c.h.b16 %v1514
    %v1921 = vpack.c.b16 %v1669, %v1665
    %v1922 = vpack.c.b16 %v1670, %v1666
    %v1923 = vpack.c.b16 %v1671, %v1667
    %v1924 = vpack.c.b16 %v1672, %v1668
    %v1925 = vpack.c.b16 %v1677, %v1673
    %v1926 = vpack.c.b16 %v1678, %v1674
    %v1927 = vpack.c.b16 %v1679, %v1675
    %v1928 = vpack.c.b16 %v1680, %v1676
    %v1929 = vpack.c.b16 %v1685, %v1681
    %v1930 = vpack.c.b16 %v1686, %v1682
    %v1931 = vpack.c.b16 %v1687, %v1683
    %v1932 = vpack.c.b16 %v1688, %v1684
    %v1933 = vpack.c.b16 %v1693, %v1689
    %v1934 = vpack.c.b16 %v1694, %v1690
    %v1935 = vpack.c.b16 %v1695, %v1691
    %v1936 = vpack.c.b16 %v1696, %v1692
    %v1937 = vpack.c.b16 %v1701, %v1697
    %v1938 = vpack.c.b16 %v1702, %v1698
    %v1939 = vpack.c.b16 %v1703, %v1699
    %v1940 = vpack.c.b16 %v1704, %v1700
    %v1941 = vpack.c.b16 %v1709, %v1705
    %v1942 = vpack.c.b16 %v1710, %v1706
    %v1943 = vpack.c.b16 %v1711, %v1707
    %v1944 = vpack.c.b16 %v1712, %v1708
    %v1945 = vpack.c.b16 %v1717, %v1713
    %v1946 = vpack.c.b16 %v1718, %v1714
    %v1947 = vpack.c.b16 %v1719, %v1715
    %v1948 = vpack.c.b16 %v1720, %v1716
    %v1949 = vpack.c.b16 %v1725, %v1721
    %v1950 = vpack.c.b16 %v1726, %v1722
    %v1951 = vpack.c.b16 %v1727, %v1723
    %v1952 = vpack.c.b16 %v1728, %v1724
    %v1953 = vpack.c.b16 %v1733, %v1729
    %v1954 = vpack.c.b16 %v1734, %v1730
    %v1955 = vpack.c.b16 %v1735, %v1731
    %v1956 = vpack.c.b16 %v1736, %v1732
    %v1957 = vpack.c.b16 %v1741, %v1737
    %v1958 = vpack.c.b16 %v1742, %v1738
    %v1959 = vpack.c.b16 %v1743, %v1739
    %v1960 = vpack.c.b16 %v1744, %v1740
    %v1961 = vpack.c.b16 %v1749, %v1745
    %v1962 = vpack.c.b16 %v1750, %v1746
    %v1963 = vpack.c.b16 %v1751, %v1747
    %v1964 = vpack.c.b16 %v1752, %v1748
    %v1965 = vpack.c.b16 %v1757, %v1753
    %v1966 = vpack.c.b16 %v1758, %v1754
    %v1967 = vpack.c.b16 %v1759, %v1755
    %v1968 = vpack.c.b16 %v1760, %v1756
    %v1969 = vpack.c.b16 %v1765, %v1761
    %v1970 = vpack.c.b16 %v1766, %v1762
    %v1971 = vpack.c.b16 %v1767, %v1763
    %v1972 = vpack.c.b16 %v1768, %v1764
    %v1973 = vpack.c.b16 %v1773, %v1769
    %v1974 = vpack.c.b16 %v1774, %v1770
    %v1975 = vpack.c.b16 %v1775, %v1771
    %v1976 = vpack.c.b16 %v1776, %v1772
    %v1977 = vpack.c.b16 %v1781, %v1777
    %v1978 = vpack.c.b16 %v1782, %v1778
    %v1979 = vpack.c.b16 %v1783, %v1779
    %v1980 = vpack.c.b16 %v1784, %v1780
    %v1981 = vpack.c.b16 %v1789, %v1785
    %v1982 = vpack.c.b16 %v1790, %v1786
    %v1983 = vpack.c.b16 %v1791, %v1787
    %v1984 = vpack.c.b16 %v1792, %v1788
    %v1985 = vpack.c.b16 %v1797, %v1793
    %v1986 = vpack.c.b16 %v1798, %v1794
    %v1987 = vpack.c.b16 %v1799, %v1795
    %v1988 = vpack.c.b16 %v1800, %v1796
    %v1989 = vpack.c.b16 %v1805, %v1801
    %v1990 = vpack.c.b16 %v1806, %v1802
    %v1991 = vpack.c.b16 %v1807, %v1803
    %v1992 = vpack.c.b16 %v1808, %v1804
    %v1993 = vpack.c.b16 %v1813, %v1809
    %v1994 = vpack.c.b16 %v1814, %v1810
    %v1995 = vpack.c.b16 %v1815, %v1811
    %v1996 = vpack.c.b16 %v1816, %v1812
    %v1997 = vpack.c.b16 %v1821, %v1817
    %v1998 = vpack.c.b16 %v1822, %v1818
    %v1999 = vpack.c.b16 %v1823, %v1819
    %v2000 = vpack.c.b16 %v1824, %v1820
    %v2001 = vpack.c.b16 %v1829, %v1825
    %v2002 = vpack.c.b16 %v1830, %v1826
    %v2003 = vpack.c.b16 %v1831, %v1827
    %v2004 = vpack.c.b16 %v1832, %v1828
    %v2005 = vpack.c.b16 %v1837, %v1833
    %v2006 = vpack.c.b16 %v1838, %v1834
    %v2007 = vpack.c.b16 %v1839, %v1835
    %v2008 = vpack.c.b16 %v1840, %v1836
    %v2009 = vpack.c.b16 %v1845, %v1841
    %v2010 = vpack.c.b16 %v1846, %v1842
    %v2011 = vpack.c.b16 %v1847, %v1843
    %v2012 = vpack.c.b16 %v1848, %v1844
    %v2013 = vpack.c.b16 %v1853, %v1849
    %v2014 = vpack.c.b16 %v1854, %v1850
    %v2015 = vpack.c.b16 %v1855, %v1851
    %v2016 = vpack.c.b16 %v1856, %v1852
    %v2017 = vpack.c.b16 %v1861, %v1857
    %v2018 = vpack.c.b16 %v1862, %v1858
    %v2019 = vpack.c.b16 %v1863, %v1859
    %v2020 = vpack.c.b16 %v1864, %v1860
    %v2021 = vpack.c.b16 %v1869, %v1865
    %v2022 = vpack.c.b16 %v1870, %v1866
    %v2023 = vpack.c.b16 %v1871, %v1867
    %v2024 = vpack.c.b16 %v1872, %v1868
    %v2025 = vpack.c.b16 %v1877, %v1873
    %v2026 = vpack.c.b16 %v1878, %v1874
    %v2027 = vpack.c.b16 %v1879, %v1875
    %v2028 = vpack.c.b16 %v1880, %v1876
    %v2029 = vpack.c.b16 %v1885, %v1881
    %v2030 = vpack.c.b16 %v1886, %v1882
    %v2031 = vpack.c.b16 %v1887, %v1883
    %v2032 = vpack.c.b16 %v1888, %v1884
    %v2033 = vpack.c.b16 %v1893, %v1889
    %v2034 = vpack.c.b16 %v1894, %v1890
    %v2035 = vpack.c.b16 %v1895, %v1891
    %v2036 = vpack.c.b16 %v1896, %v1892
    %v2037 = vpack.c.b16 %v1901, %v1897
    %v2038 = vpack.c.b16 %v1902, %v1898
    %v2039 = vpack.c.b16 %v1903, %v1899
    %v2040 = vpack.c.b16 %v1904, %v1900
    %v2041 = vpack.c.b16 %v1909, %v1905
    %v2042 = vpack.c.b16 %v1910, %v1906
    %v2043 = vpack.c.b16 %v1911, %v1907
    %v2044 = vpack.c.b16 %v1912, %v1908
    %v2045 = vpack.c.b16 %v1917, %v1913
    %v2046 = vpack.c.b16 %v1918, %v1914
    %v2047 = vpack.c.b16 %v1919, %v1915
    %v2048 = vpack.c.b16 %v1920, %v1916
    %2177 = vmatprep.subr.bf16.mxu0 %v1922
    %2178 = vmatpush1.bf16.msra.mxu0 %v1921
    %2179 = vmatprep.subr.bf16.mxu0 %v1926
    %2180 = vmatpush1.bf16.msra.mxu0 %v1925
    %2181 = vmatprep.subr.bf16.mxu0 %v1930
    %2182 = vmatpush1.bf16.msra.mxu0 %v1929
    %2183 = vmatprep.subr.bf16.mxu0 %v1934
    %2184 = vmatpush1.bf16.msra.mxu0 %v1933
    %2185 = vmatprep.subr.bf16.mxu0 %v1938
    %2186 = vmatpush1.bf16.msra.mxu0 %v1937
    %2187 = vmatprep.subr.bf16.mxu0 %v1942
    %2188 = vmatpush1.bf16.msra.mxu0 %v1941
    %2189 = vmatprep.subr.bf16.mxu0 %v1946
    %2190 = vmatpush1.bf16.msra.mxu0 %v1945
    %2191 = vmatprep.subr.bf16.mxu0 %v1950
    %2192 = vmatpush1.bf16.msra.mxu0 %v1949
    %2193 = vmatprep.subr.bf16.mxu0 %v1954
    %2194 = vmatpush1.bf16.msra.mxu0 %v1953
    %2195 = vmatprep.subr.bf16.mxu0 %v1958
    %2196 = vmatpush1.bf16.msra.mxu0 %v1957
    %2197 = vmatprep.subr.bf16.mxu0 %v1962
    %2198 = vmatpush1.bf16.msra.mxu0 %v1961
    %2199 = vmatprep.subr.bf16.mxu0 %v1966
    %2200 = vmatpush1.bf16.msra.mxu0 %v1965
    %2201 = vmatprep.subr.bf16.mxu0 %v1970
    %2202 = vmatpush1.bf16.msra.mxu0 %v1969
    %2203 = vmatprep.subr.bf16.mxu0 %v1974
    %2204 = vmatpush1.bf16.msra.mxu0 %v1973
    %2205 = vmatprep.subr.bf16.mxu0 %v1978
    %2206 = vmatpush1.bf16.msra.mxu0 %v1977
    %2207 = vmatprep.subr.bf16.mxu0 %v1982
    %2208 = vmatpush1.bf16.msra.mxu0 %v1981
    %2209 = vmatprep.mubr.bf16.mxu0 %v1260
    %2210 = vmatmul.mubr.bf16.gmra.mrb[0].mxu0 %v1259
    %v2211 = vpop.f32.mrb[0].mxu0
    %v2212 = vadd.f32 %v1520, %v2211
    %v2213 = vpop.f32.mrb[0].mxu0
    %v2214 = vadd.f32 %v1524, %v2213
    %v2215 = vpop.f32.mrb[0].mxu0
    %v2216 = vadd.f32 %v1520, %v2215
    %v2217 = vpop.f32.mrb[0].mxu0
    %v2218 = vadd.f32 %v1524, %v2217
    %2219 = vmatprep.mubr.bf16.mxu0 %v1264
    %2220 = vmatmul.mubr.bf16.gmra.mrb[0].mxu0 %v1263
    %v2221 = vpop.f32.mrb[0].mxu0
    %v2222 = vadd.f32 %v1520, %v2221
    %v2223 = vpop.f32.mrb[0].mxu0
    %v2224 = vadd.f32 %v1524, %v2223
    %v2225 = vpop.f32.mrb[0].mxu0
    %v2226 = vadd.f32 %v1520, %v2225
    %v2227 = vpop.f32.mrb[0].mxu0
    %v2228 = vadd.f32 %v1524, %v2227
    %2229 = vmatprep.mubr.bf16.mxu0 %v1268
    %2230 = vmatmul.mubr.bf16.gmra.mrb[0].mxu0 %v1267
    %v2231 = vpop.f32.mrb[0].mxu0
    %v2232 = vadd.f32 %v1520, %v2231
    %v2233 = vpop.f32.mrb[0].mxu0
    %v2234 = vadd.f32 %v1524, %v2233
    %v2235 = vpop.f32.mrb[0].mxu0
    %v2236 = vadd.f32 %v1520, %v2235
    %v2237 = vpop.f32.mrb[0].mxu0
    %v2238 = vadd.f32 %v1524, %v2237
    %2239 = vmatprep.mubr.bf16.mxu0 %v1272
    %2240 = vmatmul.mubr.bf16.gmra.mrb[0].mxu0 %v1271
    %v2241 = vpop.f32.mrb[0].mxu0
    %v2242 = vadd.f32 %v1520, %v2241
    %v2243 = vpop.f32.mrb[0].mxu0
    %v2244 = vadd.f32 %v1524, %v2243
    %v2245 = vpop.f32.mrb[0].mxu0
    %v2246 = vadd.f32 %v1520, %v2245
    %v2247 = vpop.f32.mrb[0].mxu0
    %v2248 = vadd.f32 %v1524, %v2247
    %2249 = vmatprep.mubr.bf16.mxu0 %v1276
    %2250 = vmatmul.mubr.bf16.gmra.mrb[0].mxu0 %v1275
    %v2251 = vpop.f32.mrb[0].mxu0
    %v2252 = vadd.f32 %v1520, %v2251
    %v2253 = vpop.f32.mrb[0].mxu0
    %v2254 = vadd.f32 %v1524, %v2253
    %v2255 = vpop.f32.mrb[0].mxu0
    %v2256 = vadd.f32 %v1520, %v2255
    %v2257 = vpop.f32.mrb[0].mxu0
    %v2258 = vadd.f32 %v1524, %v2257
    %2259 = vmatprep.mubr.bf16.mxu0 %v1280
    %2260 = vmatmul.mubr.bf16.gmra.mrb[0].mxu0 %v1279
    %v2261 = vpop.f32.mrb[0].mxu0
    %v2262 = vadd.f32 %v1520, %v2261
    %v2263 = vpop.f32.mrb[0].mxu0
    %v2264 = vadd.f32 %v1524, %v2263
    %v2265 = vpop.f32.mrb[0].mxu0
    %v2266 = vadd.f32 %v1520, %v2265
    %v2267 = vpop.f32.mrb[0].mxu0
    %v2268 = vadd.f32 %v1524, %v2267
    %2269 = vmatprep.mubr.bf16.mxu0 %v1284
    %2270 = vmatmul.mubr.bf16.gmra.mrb[0].mxu0 %v1283
    %v2271 = vpop.f32.mrb[0].mxu0
    %v2272 = vadd.f32 %v1520, %v2271
    %v2273 = vpop.f32.mrb[0].mxu0
    %v2274 = vadd.f32 %v1524, %v2273
    %v2275 = vpop.f32.mrb[0].mxu0
    %v2276 = vadd.f32 %v1520, %v2275
    %v2277 = vpop.f32.mrb[0].mxu0
    %v2278 = vadd.f32 %v1524, %v2277
    %2279 = vmatprep.mubr.bf16.mxu0 %v1288
    %2280 = vmatmul.mubr.bf16.gmra.mrb[0].mxu0 %v1287
    %v2281 = vpop.f32.mrb[0].mxu0
    %v2282 = vadd.f32 %v1520, %v2281
    %v2283 = vpop.f32.mrb[0].mxu0
    %v2284 = vadd.f32 %v1524, %v2283
    %v2285 = vpop.f32.mrb[0].mxu0
    %v2286 = vadd.f32 %v1520, %v2285
    %v2287 = vpop.f32.mrb[0].mxu0
    %v2288 = vadd.f32 %v1524, %v2287
    %2289 = vmatprep.mubr.bf16.mxu0 %v1292
    %2290 = vmatmul.mubr.bf16.gmra.mrb[0].mxu0 %v1291
    %v2291 = vpop.f32.mrb[0].mxu0
    %v2292 = vadd.f32 %v1520, %v2291
    %v2293 = vpop.f32.mrb[0].mxu0
    %v2294 = vadd.f32 %v1524, %v2293
    %v2295 = vpop.f32.mrb[0].mxu0
    %v2296 = vadd.f32 %v1520, %v2295
    %v2297 = vpop.f32.mrb[0].mxu0
    %v2298 = vadd.f32 %v1524, %v2297
    %2299 = vmatprep.mubr.bf16.mxu0 %v1296
    %2300 = vmatmul.mubr.bf16.gmra.mrb[0].mxu0 %v1295
    %v2301 = vpop.f32.mrb[0].mxu0
    %v2302 = vadd.f32 %v1520, %v2301
    %v2303 = vpop.f32.mrb[0].mxu0
    %v2304 = vadd.f32 %v1524, %v2303
    %v2305 = vpop.f32.mrb[0].mxu0
    %v2306 = vadd.f32 %v1520, %v2305
    %v2307 = vpop.f32.mrb[0].mxu0
    %v2308 = vadd.f32 %v1524, %v2307
    %2309 = vmatprep.mubr.bf16.mxu0 %v1300
    %2310 = vmatmul.mubr.bf16.gmra.mrb[0].mxu0 %v1299
    %v2311 = vpop.f32.mrb[0].mxu0
    %v2312 = vadd.f32 %v1520, %v2311
    %v2313 = vpop.f32.mrb[0].mxu0
    %v2314 = vadd.f32 %v1524, %v2313
    %v2315 = vpop.f32.mrb[0].mxu0
    %v2316 = vadd.f32 %v1520, %v2315
    %v2317 = vpop.f32.mrb[0].mxu0
    %v2318 = vadd.f32 %v1524, %v2317
    %2319 = vmatprep.mubr.bf16.mxu0 %v1304
    %2320 = vmatmul.mubr.bf16.gmra.mrb[0].mxu0 %v1303
    %v2321 = vpop.f32.mrb[0].mxu0
    %v2322 = vadd.f32 %v1520, %v2321
    %v2323 = vpop.f32.mrb[0].mxu0
    %v2324 = vadd.f32 %v1524, %v2323
    %v2325 = vpop.f32.mrb[0].mxu0
    %v2326 = vadd.f32 %v1520, %v2325
    %v2327 = vpop.f32.mrb[0].mxu0
    %v2328 = vadd.f32 %v1524, %v2327
    %2329 = vmatprep.mubr.bf16.mxu0 %v1308
    %2330 = vmatmul.mubr.bf16.gmra.mrb[0].mxu0 %v1307
    %v2331 = vpop.f32.mrb[0].mxu0
    %v2332 = vadd.f32 %v1520, %v2331
    %v2333 = vpop.f32.mrb[0].mxu0
    %v2334 = vadd.f32 %v1524, %v2333
    %v2335 = vpop.f32.mrb[0].mxu0
    %v2336 = vadd.f32 %v1520, %v2335
    %v2337 = vpop.f32.mrb[0].mxu0
    %v2338 = vadd.f32 %v1524, %v2337
    %2339 = vmatprep.mubr.bf16.mxu0 %v1312
    %2340 = vmatmul.mubr.bf16.gmra.mrb[0].mxu0 %v1311
    %v2341 = vpop.f32.mrb[0].mxu0
    %v2342 = vadd.f32 %v1520, %v2341
    %v2343 = vpop.f32.mrb[0].mxu0
    %v2344 = vadd.f32 %v1524, %v2343
    %v2345 = vpop.f32.mrb[0].mxu0
    %v2346 = vadd.f32 %v1520, %v2345
    %v2347 = vpop.f32.mrb[0].mxu0
    %v2348 = vadd.f32 %v1524, %v2347
    %2349 = vmatprep.mubr.bf16.mxu0 %v1316
    %2350 = vmatmul.mubr.bf16.gmra.mrb[0].mxu0 %v1315
    %v2351 = vpop.f32.mrb[0].mxu0
    %v2352 = vadd.f32 %v1520, %v2351
    %v2353 = vpop.f32.mrb[0].mxu0
    %v2354 = vadd.f32 %v1524, %v2353
    %v2355 = vpop.f32.mrb[0].mxu0
    %v2356 = vadd.f32 %v1520, %v2355
    %v2357 = vpop.f32.mrb[0].mxu0
    %v2358 = vadd.f32 %v1524, %v2357
    %2359 = vmatprep.mubr.bf16.mxu0 %v1320
    %2360 = vmatmul.mubr.bf16.gmra.mrb[0].mxu0 %v1319
    %v2361 = vpop.f32.mrb[0].mxu0
    %v2362 = vadd.f32 %v1520, %v2361
    %v2363 = vpop.f32.mrb[0].mxu0
    %v2364 = vadd.f32 %v1524, %v2363
    %v2365 = vpop.f32.mrb[0].mxu0
    %v2366 = vadd.f32 %v1520, %v2365
    %v2367 = vpop.f32.mrb[0].mxu0
    %v2368 = vadd.f32 %v1524, %v2367
    %2369 = vmatprep.mubr.bf16.mxu0 %v1324
    %2370 = vmatmul.mubr.bf16.gmra.mrb[0].mxu0 %v1323
    %v2371 = vpop.f32.mrb[0].mxu0
    %v2372 = vadd.f32 %v1520, %v2371
    %v2373 = vpop.f32.mrb[0].mxu0
    %v2374 = vadd.f32 %v1524, %v2373
    %v2375 = vpop.f32.mrb[0].mxu0
    %v2376 = vadd.f32 %v1520, %v2375
    %v2377 = vpop.f32.mrb[0].mxu0
    %v2378 = vadd.f32 %v1524, %v2377
    %2379 = vmatprep.mubr.bf16.mxu0 %v1328
    %2380 = vmatmul.mubr.bf16.gmra.mrb[0].mxu0 %v1327
    %v2381 = vpop.f32.mrb[0].mxu0
    %v2382 = vadd.f32 %v1520, %v2381
    %v2383 = vpop.f32.mrb[0].mxu0
    %v2384 = vadd.f32 %v1524, %v2383
    %v2385 = vpop.f32.mrb[0].mxu0
    %v2386 = vadd.f32 %v1520, %v2385
    %v2387 = vpop.f32.mrb[0].mxu0
    %v2388 = vadd.f32 %v1524, %v2387
    %2389 = vmatprep.mubr.bf16.mxu0 %v1332
    %2390 = vmatmul.mubr.bf16.gmra.mrb[0].mxu0 %v1331
    %v2391 = vpop.f32.mrb[0].mxu0
    %v2392 = vadd.f32 %v1520, %v2391
    %v2393 = vpop.f32.mrb[0].mxu0
    %v2394 = vadd.f32 %v1524, %v2393
    %v2395 = vpop.f32.mrb[0].mxu0
    %v2396 = vadd.f32 %v1520, %v2395
    %v2397 = vpop.f32.mrb[0].mxu0
    %v2398 = vadd.f32 %v1524, %v2397
    %2399 = vmatprep.mubr.bf16.mxu0 %v1336
    %2400 = vmatmul.mubr.bf16.gmra.mrb[0].mxu0 %v1335
    %v2401 = vpop.f32.mrb[0].mxu0
    %v2402 = vadd.f32 %v1520, %v2401
    %v2403 = vpop.f32.mrb[0].mxu0
    %v2404 = vadd.f32 %v1524, %v2403
    %v2405 = vpop.f32.mrb[0].mxu0
    %v2406 = vadd.f32 %v1520, %v2405
    %v2407 = vpop.f32.mrb[0].mxu0
    %v2408 = vadd.f32 %v1524, %v2407
    %2409 = vmatprep.mubr.bf16.mxu0 %v1340
    %2410 = vmatmul.mubr.bf16.gmra.mrb[0].mxu0 %v1339
    %v2411 = vpop.f32.mrb[0].mxu0
    %v2412 = vadd.f32 %v1520, %v2411
    %v2413 = vpop.f32.mrb[0].mxu0
    %v2414 = vadd.f32 %v1524, %v2413
    %v2415 = vpop.f32.mrb[0].mxu0
    %v2416 = vadd.f32 %v1520, %v2415
    %v2417 = vpop.f32.mrb[0].mxu0
    %v2418 = vadd.f32 %v1524, %v2417
    %2419 = vmatprep.mubr.bf16.mxu0 %v1344
    %2420 = vmatmul.mubr.bf16.gmra.mrb[0].mxu0 %v1343
    %v2421 = vpop.f32.mrb[0].mxu0
    %v2422 = vadd.f32 %v1520, %v2421
    %v2423 = vpop.f32.mrb[0].mxu0
    %v2424 = vadd.f32 %v1524, %v2423
    %v2425 = vpop.f32.mrb[0].mxu0
    %v2426 = vadd.f32 %v1520, %v2425
    %v2427 = vpop.f32.mrb[0].mxu0
    %v2428 = vadd.f32 %v1524, %v2427
    %2429 = vmatprep.mubr.bf16.mxu0 %v1348
    %2430 = vmatmul.mubr.bf16.gmra.mrb[0].mxu0 %v1347
    %v2431 = vpop.f32.mrb[0].mxu0
    %v2432 = vadd.f32 %v1520, %v2431
    %v2433 = vpop.f32.mrb[0].mxu0
    %v2434 = vadd.f32 %v1524, %v2433
    %v2435 = vpop.f32.mrb[0].mxu0
    %v2436 = vadd.f32 %v1520, %v2435
    %v2437 = vpop.f32.mrb[0].mxu0
    %v2438 = vadd.f32 %v1524, %v2437
    %2439 = vmatprep.mubr.bf16.mxu0 %v1352
    %2440 = vmatmul.mubr.bf16.gmra.mrb[0].mxu0 %v1351
    %v2441 = vpop.f32.mrb[0].mxu0
    %v2442 = vadd.f32 %v1520, %v2441
    %v2443 = vpop.f32.mrb[0].mxu0
    %v2444 = vadd.f32 %v1524, %v2443
    %v2445 = vpop.f32.mrb[0].mxu0
    %v2446 = vadd.f32 %v1520, %v2445
    %v2447 = vpop.f32.mrb[0].mxu0
    %v2448 = vadd.f32 %v1524, %v2447
    %2449 = vmatprep.mubr.bf16.mxu0 %v1356
    %2450 = vmatmul.mubr.bf16.gmra.mrb[0].mxu0 %v1355
    %v2451 = vpop.f32.mrb[0].mxu0
    %v2452 = vadd.f32 %v1520, %v2451
    %v2453 = vpop.f32.mrb[0].mxu0
    %v2454 = vadd.f32 %v1524, %v2453
    %v2455 = vpop.f32.mrb[0].mxu0
    %v2456 = vadd.f32 %v1520, %v2455
    %v2457 = vpop.f32.mrb[0].mxu0
    %v2458 = vadd.f32 %v1524, %v2457
    %2459 = vmatprep.mubr.bf16.mxu0 %v1360
    %2460 = vmatmul.mubr.bf16.gmra.mrb[0].mxu0 %v1359
    %v2461 = vpop.f32.mrb[0].mxu0
    %v2462 = vadd.f32 %v1520, %v2461
    %v2463 = vpop.f32.mrb[0].mxu0
    %v2464 = vadd.f32 %v1524, %v2463
    %v2465 = vpop.f32.mrb[0].mxu0
    %v2466 = vadd.f32 %v1520, %v2465
    %v2467 = vpop.f32.mrb[0].mxu0
    %v2468 = vadd.f32 %v1524, %v2467
    %2469 = vmatprep.mubr.bf16.mxu0 %v1364
    %2470 = vmatmul.mubr.bf16.gmra.mrb[0].mxu0 %v1363
    %v2471 = vpop.f32.mrb[0].mxu0
    %v2472 = vadd.f32 %v1520, %v2471
    %v2473 = vpop.f32.mrb[0].mxu0
    %v2474 = vadd.f32 %v1524, %v2473
    %v2475 = vpop.f32.mrb[0].mxu0
    %v2476 = vadd.f32 %v1520, %v2475
    %v2477 = vpop.f32.mrb[0].mxu0
    %v2478 = vadd.f32 %v1524, %v2477
    %2479 = vmatprep.mubr.bf16.mxu0 %v1368
    %2480 = vmatmul.mubr.bf16.gmra.mrb[0].mxu0 %v1367
    %v2481 = vpop.f32.mrb[0].mxu0
    %v2482 = vadd.f32 %v1520, %v2481
    %v2483 = vpop.f32.mrb[0].mxu0
    %v2484 = vadd.f32 %v1524, %v2483
    %v2485 = vpop.f32.mrb[0].mxu0
    %v2486 = vadd.f32 %v1520, %v2485
    %v2487 = vpop.f32.mrb[0].mxu0
    %v2488 = vadd.f32 %v1524, %v2487
    %2489 = vmatprep.mubr.bf16.mxu0 %v1372
    %2490 = vmatmul.mubr.bf16.gmra.mrb[0].mxu0 %v1371
    %v2491 = vpop.f32.mrb[0].mxu0
    %v2492 = vadd.f32 %v1520, %v2491
    %v2493 = vpop.f32.mrb[0].mxu0
    %v2494 = vadd.f32 %v1524, %v2493
    %v2495 = vpop.f32.mrb[0].mxu0
    %v2496 = vadd.f32 %v1520, %v2495
    %v2497 = vpop.f32.mrb[0].mxu0
    %v2498 = vadd.f32 %v1524, %v2497
    %2499 = vmatprep.mubr.bf16.mxu0 %v1376
    %2500 = vmatmul.mubr.bf16.gmra.mrb[0].mxu0 %v1375
    %v2501 = vpop.f32.mrb[0].mxu0
    %v2502 = vadd.f32 %v1520, %v2501
    %v2503 = vpop.f32.mrb[0].mxu0
    %v2504 = vadd.f32 %v1524, %v2503
    %v2505 = vpop.f32.mrb[0].mxu0
    %v2506 = vadd.f32 %v1520, %v2505
    %v2507 = vpop.f32.mrb[0].mxu0
    %v2508 = vadd.f32 %v1524, %v2507
    %2509 = vmatprep.mubr.bf16.mxu0 %v1380
    %2510 = vmatmul.mubr.bf16.gmra.mrb[0].mxu0 %v1379
    %v2511 = vpop.f32.mrb[0].mxu0
    %v2512 = vadd.f32 %v1520, %v2511
    %v2513 = vpop.f32.mrb[0].mxu0
    %v2514 = vadd.f32 %v1524, %v2513
    %v2515 = vpop.f32.mrb[0].mxu0
    %v2516 = vadd.f32 %v1520, %v2515
    %v2517 = vpop.f32.mrb[0].mxu0
    %v2518 = vadd.f32 %v1524, %v2517
    %2519 = vmatprep.mubr.bf16.mxu0 %v1384
    %2520 = vmatmul.mubr.bf16.gmra.mrb[0].mxu0 %v1383
    %v2521 = vpop.f32.mrb[0].mxu0
    %v2522 = vadd.f32 %v1520, %v2521
    %v2523 = vpop.f32.mrb[0].mxu0
    %v2524 = vadd.f32 %v1524, %v2523
    %v2525 = vpop.f32.mrb[0].mxu0
    %v2526 = vadd.f32 %v1520, %v2525
    %v2527 = vpop.f32.mrb[0].mxu0
    %v2528 = vadd.f32 %v1524, %v2527
    %2529 = vdwg.mxu0
    %2530 = vmatprep.subr.bf16.mxu0 %v1986
    %2531 = vmatpush1.bf16.msra.mxu0 %v1985
    %2532 = vmatprep.subr.bf16.mxu0 %v1990
    %2533 = vmatpush1.bf16.msra.mxu0 %v1989
    %2534 = vmatprep.subr.bf16.mxu0 %v1994
    %2535 = vmatpush1.bf16.msra.mxu0 %v1993
    %2536 = vmatprep.subr.bf16.mxu0 %v1998
    %2537 = vmatpush1.bf16.msra.mxu0 %v1997
    %2538 = vmatprep.subr.bf16.mxu0 %v2002
    %2539 = vmatpush1.bf16.msra.mxu0 %v2001
    %2540 = vmatprep.subr.bf16.mxu0 %v2006
    %2541 = vmatpush1.bf16.msra.mxu0 %v2005
    %2542 = vmatprep.subr.bf16.mxu0 %v2010
    %2543 = vmatpush1.bf16.msra.mxu0 %v2009
    %2544 = vmatprep.subr.bf16.mxu0 %v2014
    %2545 = vmatpush1.bf16.msra.mxu0 %v2013
    %2546 = vmatprep.subr.bf16.mxu0 %v2018
    %2547 = vmatpush1.bf16.msra.mxu0 %v2017
    %2548 = vmatprep.subr.bf16.mxu0 %v2022
    %2549 = vmatpush1.bf16.msra.mxu0 %v2021
    %2550 = vmatprep.subr.bf16.mxu0 %v2026
    %2551 = vmatpush1.bf16.msra.mxu0 %v2025
    %2552 = vmatprep.subr.bf16.mxu0 %v2030
    %2553 = vmatpush1.bf16.msra.mxu0 %v2029
    %2554 = vmatprep.subr.bf16.mxu0 %v2034
    %2555 = vmatpush1.bf16.msra.mxu0 %v2033
    %2556 = vmatprep.subr.bf16.mxu0 %v2038
    %2557 = vmatpush1.bf16.msra.mxu0 %v2037
    %2558 = vmatprep.subr.bf16.mxu0 %v2042
    %2559 = vmatpush1.bf16.msra.mxu0 %v2041
    %2560 = vmatprep.subr.bf16.mxu0 %v2046
    %2561 = vmatpush1.bf16.msra.mxu0 %v2045
    %2562 = vmatprep.mubr.bf16.mxu0 %v1262
    %2563 = vmatmul.mubr.bf16.gmra.mrb[0].mxu0 %v1261
    %v2564 = vpop.f32.mrb[0].mxu0
    %v2565 = vadd.f32 %v2212, %v2564
    %v2566 = vpop.f32.mrb[0].mxu0
    %v2567 = vadd.f32 %v2214, %v2566
    %v2568 = vpop.f32.mrb[0].mxu0
    %v2569 = vadd.f32 %v2216, %v2568
    %v2570 = vpop.f32.mrb[0].mxu0
    %v2571 = vadd.f32 %v2218, %v2570
    %2572 = vmatprep.mubr.bf16.mxu0 %v1266
    %2573 = vmatmul.mubr.bf16.gmra.mrb[0].mxu0 %v1265
    %v2574 = vpop.f32.mrb[0].mxu0
    %v2575 = vadd.f32 %v2222, %v2574
    %v2576 = vpop.f32.mrb[0].mxu0
    %v2577 = vadd.f32 %v2224, %v2576
    %v2578 = vpop.f32.mrb[0].mxu0
    %v2579 = vadd.f32 %v2226, %v2578
    %v2580 = vpop.f32.mrb[0].mxu0
    %v2581 = vadd.f32 %v2228, %v2580
    %2582 = vmatprep.mubr.bf16.mxu0 %v1270
    %2583 = vmatmul.mubr.bf16.gmra.mrb[0].mxu0 %v1269
    %v2584 = vpop.f32.mrb[0].mxu0
    %v2585 = vadd.f32 %v2232, %v2584
    %v2586 = vpop.f32.mrb[0].mxu0
    %v2587 = vadd.f32 %v2234, %v2586
    %v2588 = vpop.f32.mrb[0].mxu0
    %v2589 = vadd.f32 %v2236, %v2588
    %v2590 = vpop.f32.mrb[0].mxu0
    %v2591 = vadd.f32 %v2238, %v2590
    %2592 = vmatprep.mubr.bf16.mxu0 %v1274
    %2593 = vmatmul.mubr.bf16.gmra.mrb[0].mxu0 %v1273
    %v2594 = vpop.f32.mrb[0].mxu0
    %v2595 = vadd.f32 %v2242, %v2594
    %v2596 = vpop.f32.mrb[0].mxu0
    %v2597 = vadd.f32 %v2244, %v2596
    %v2598 = vpop.f32.mrb[0].mxu0
    %v2599 = vadd.f32 %v2246, %v2598
    %v2600 = vpop.f32.mrb[0].mxu0
    %v2601 = vadd.f32 %v2248, %v2600
    %2602 = vmatprep.mubr.bf16.mxu0 %v1278
    %2603 = vmatmul.mubr.bf16.gmra.mrb[0].mxu0 %v1277
    %v2604 = vpop.f32.mrb[0].mxu0
    %v2605 = vadd.f32 %v2252, %v2604
    %v2606 = vpop.f32.mrb[0].mxu0
    %v2607 = vadd.f32 %v2254, %v2606
    %v2608 = vpop.f32.mrb[0].mxu0
    %v2609 = vadd.f32 %v2256, %v2608
    %v2610 = vpop.f32.mrb[0].mxu0
    %v2611 = vadd.f32 %v2258, %v2610
    %2612 = vmatprep.mubr.bf16.mxu0 %v1282
    %2613 = vmatmul.mubr.bf16.gmra.mrb[0].mxu0 %v1281
    %v2614 = vpop.f32.mrb[0].mxu0
    %v2615 = vadd.f32 %v2262, %v2614
    %v2616 = vpop.f32.mrb[0].mxu0
    %v2617 = vadd.f32 %v2264, %v2616
    %v2618 = vpop.f32.mrb[0].mxu0
    %v2619 = vadd.f32 %v2266, %v2618
    %v2620 = vpop.f32.mrb[0].mxu0
    %v2621 = vadd.f32 %v2268, %v2620
    %2622 = vmatprep.mubr.bf16.mxu0 %v1286
    %2623 = vmatmul.mubr.bf16.gmra.mrb[0].mxu0 %v1285
    %v2624 = vpop.f32.mrb[0].mxu0
    %v2625 = vadd.f32 %v2272, %v2624
    %v2626 = vpop.f32.mrb[0].mxu0
    %v2627 = vadd.f32 %v2274, %v2626
    %v2628 = vpop.f32.mrb[0].mxu0
    %v2629 = vadd.f32 %v2276, %v2628
    %v2630 = vpop.f32.mrb[0].mxu0
    %v2631 = vadd.f32 %v2278, %v2630
    %2632 = vmatprep.mubr.bf16.mxu0 %v1290
    %2633 = vmatmul.mubr.bf16.gmra.mrb[0].mxu0 %v1289
    %v2634 = vpop.f32.mrb[0].mxu0
    %v2635 = vadd.f32 %v2282, %v2634
    %v2636 = vpop.f32.mrb[0].mxu0
    %v2637 = vadd.f32 %v2284, %v2636
    %v2638 = vpop.f32.mrb[0].mxu0
    %v2639 = vadd.f32 %v2286, %v2638
    %v2640 = vpop.f32.mrb[0].mxu0
    %v2641 = vadd.f32 %v2288, %v2640
    %2642 = vmatprep.mubr.bf16.mxu0 %v1294
    %2643 = vmatmul.mubr.bf16.gmra.mrb[0].mxu0 %v1293
    %v2644 = vpop.f32.mrb[0].mxu0
    %v2645 = vadd.f32 %v2292, %v2644
    %v2646 = vpop.f32.mrb[0].mxu0
    %v2647 = vadd.f32 %v2294, %v2646
    %v2648 = vpop.f32.mrb[0].mxu0
    %v2649 = vadd.f32 %v2296, %v2648
    %v2650 = vpop.f32.mrb[0].mxu0
    %v2651 = vadd.f32 %v2298, %v2650
    %2652 = vmatprep.mubr.bf16.mxu0 %v1298
    %2653 = vmatmul.mubr.bf16.gmra.mrb[0].mxu0 %v1297
    %v2654 = vpop.f32.mrb[0].mxu0
    %v2655 = vadd.f32 %v2302, %v2654
    %v2656 = vpop.f32.mrb[0].mxu0
    %v2657 = vadd.f32 %v2304, %v2656
    %v2658 = vpop.f32.mrb[0].mxu0
    %v2659 = vadd.f32 %v2306, %v2658
    %v2660 = vpop.f32.mrb[0].mxu0
    %v2661 = vadd.f32 %v2308, %v2660
    %2662 = vmatprep.mubr.bf16.mxu0 %v1302
    %2663 = vmatmul.mubr.bf16.gmra.mrb[0].mxu0 %v1301
    %v2664 = vpop.f32.mrb[0].mxu0
    %v2665 = vadd.f32 %v2312, %v2664
    %v2666 = vpop.f32.mrb[0].mxu0
    %v2667 = vadd.f32 %v2314, %v2666
    %v2668 = vpop.f32.mrb[0].mxu0
    %v2669 = vadd.f32 %v2316, %v2668
    %v2670 = vpop.f32.mrb[0].mxu0
    %v2671 = vadd.f32 %v2318, %v2670
    %2672 = vmatprep.mubr.bf16.mxu0 %v1306
    %2673 = vmatmul.mubr.bf16.gmra.mrb[0].mxu0 %v1305
    %v2674 = vpop.f32.mrb[0].mxu0
    %v2675 = vadd.f32 %v2322, %v2674
    %v2676 = vpop.f32.mrb[0].mxu0
    %v2677 = vadd.f32 %v2324, %v2676
    %v2678 = vpop.f32.mrb[0].mxu0
    %v2679 = vadd.f32 %v2326, %v2678
    %v2680 = vpop.f32.mrb[0].mxu0
    %v2681 = vadd.f32 %v2328, %v2680
    %2682 = vmatprep.mubr.bf16.mxu0 %v1310
    %2683 = vmatmul.mubr.bf16.gmra.mrb[0].mxu0 %v1309
    %v2684 = vpop.f32.mrb[0].mxu0
    %v2685 = vadd.f32 %v2332, %v2684
    %v2686 = vpop.f32.mrb[0].mxu0
    %v2687 = vadd.f32 %v2334, %v2686
    %v2688 = vpop.f32.mrb[0].mxu0
    %v2689 = vadd.f32 %v2336, %v2688
    %v2690 = vpop.f32.mrb[0].mxu0
    %v2691 = vadd.f32 %v2338, %v2690
    %2692 = vmatprep.mubr.bf16.mxu0 %v1314
    %2693 = vmatmul.mubr.bf16.gmra.mrb[0].mxu0 %v1313
    %v2694 = vpop.f32.mrb[0].mxu0
    %v2695 = vadd.f32 %v2342, %v2694
    %v2696 = vpop.f32.mrb[0].mxu0
    %v2697 = vadd.f32 %v2344, %v2696
    %v2698 = vpop.f32.mrb[0].mxu0
    %v2699 = vadd.f32 %v2346, %v2698
    %v2700 = vpop.f32.mrb[0].mxu0
    %v2701 = vadd.f32 %v2348, %v2700
    %2702 = vmatprep.mubr.bf16.mxu0 %v1318
    %2703 = vmatmul.mubr.bf16.gmra.mrb[0].mxu0 %v1317
    %v2704 = vpop.f32.mrb[0].mxu0
    %v2705 = vadd.f32 %v2352, %v2704
    %v2706 = vpop.f32.mrb[0].mxu0
    %v2707 = vadd.f32 %v2354, %v2706
    %v2708 = vpop.f32.mrb[0].mxu0
    %v2709 = vadd.f32 %v2356, %v2708
    %v2710 = vpop.f32.mrb[0].mxu0
    %v2711 = vadd.f32 %v2358, %v2710
    %2712 = vmatprep.mubr.bf16.mxu0 %v1322
    %2713 = vmatmul.mubr.bf16.gmra.mrb[0].mxu0 %v1321
    %v2714 = vpop.f32.mrb[0].mxu0
    %v2715 = vadd.f32 %v2362, %v2714
    %v2716 = vpop.f32.mrb[0].mxu0
    %v2717 = vadd.f32 %v2364, %v2716
    %v2718 = vpop.f32.mrb[0].mxu0
    %v2719 = vadd.f32 %v2366, %v2718
    %v2720 = vpop.f32.mrb[0].mxu0
    %v2721 = vadd.f32 %v2368, %v2720
    %2722 = vmatprep.mubr.bf16.mxu0 %v1326
    %2723 = vmatmul.mubr.bf16.gmra.mrb[0].mxu0 %v1325
    %v2724 = vpop.f32.mrb[0].mxu0
    %v2725 = vadd.f32 %v2372, %v2724
    %v2726 = vpop.f32.mrb[0].mxu0
    %v2727 = vadd.f32 %v2374, %v2726
    %v2728 = vpop.f32.mrb[0].mxu0
    %v2729 = vadd.f32 %v2376, %v2728
    %v2730 = vpop.f32.mrb[0].mxu0
    %v2731 = vadd.f32 %v2378, %v2730
    %2732 = vmatprep.mubr.bf16.mxu0 %v1330
    %2733 = vmatmul.mubr.bf16.gmra.mrb[0].mxu0 %v1329
    %v2734 = vpop.f32.mrb[0].mxu0
    %v2735 = vadd.f32 %v2382, %v2734
    %v2736 = vpop.f32.mrb[0].mxu0
    %v2737 = vadd.f32 %v2384, %v2736
    %v2738 = vpop.f32.mrb[0].mxu0
    %v2739 = vadd.f32 %v2386, %v2738
    %v2740 = vpop.f32.mrb[0].mxu0
    %v2741 = vadd.f32 %v2388, %v2740
    %2742 = vmatprep.mubr.bf16.mxu0 %v1334
    %2743 = vmatmul.mubr.bf16.gmra.mrb[0].mxu0 %v1333
    %v2744 = vpop.f32.mrb[0].mxu0
    %v2745 = vadd.f32 %v2392, %v2744
    %v2746 = vpop.f32.mrb[0].mxu0
    %v2747 = vadd.f32 %v2394, %v2746
    %v2748 = vpop.f32.mrb[0].mxu0
    %v2749 = vadd.f32 %v2396, %v2748
    %v2750 = vpop.f32.mrb[0].mxu0
    %v2751 = vadd.f32 %v2398, %v2750
    %2752 = vmatprep.mubr.bf16.mxu0 %v1338
    %2753 = vmatmul.mubr.bf16.gmra.mrb[0].mxu0 %v1337
    %v2754 = vpop.f32.mrb[0].mxu0
    %v2755 = vadd.f32 %v2402, %v2754
    %v2756 = vpop.f32.mrb[0].mxu0
    %v2757 = vadd.f32 %v2404, %v2756
    %v2758 = vpop.f32.mrb[0].mxu0
    %v2759 = vadd.f32 %v2406, %v2758
    %v2760 = vpop.f32.mrb[0].mxu0
    %v2761 = vadd.f32 %v2408, %v2760
    %2762 = vmatprep.mubr.bf16.mxu0 %v1342
    %2763 = vmatmul.mubr.bf16.gmra.mrb[0].mxu0 %v1341
    %v2764 = vpop.f32.mrb[0].mxu0
    %v2765 = vadd.f32 %v2412, %v2764
    %v2766 = vpop.f32.mrb[0].mxu0
    %v2767 = vadd.f32 %v2414, %v2766
    %v2768 = vpop.f32.mrb[0].mxu0
    %v2769 = vadd.f32 %v2416, %v2768
    %v2770 = vpop.f32.mrb[0].mxu0
    %v2771 = vadd.f32 %v2418, %v2770
    %2772 = vmatprep.mubr.bf16.mxu0 %v1346
    %2773 = vmatmul.mubr.bf16.gmra.mrb[0].mxu0 %v1345
    %v2774 = vpop.f32.mrb[0].mxu0
    %v2775 = vadd.f32 %v2422, %v2774
    %v2776 = vpop.f32.mrb[0].mxu0
    %v2777 = vadd.f32 %v2424, %v2776
    %v2778 = vpop.f32.mrb[0].mxu0
    %v2779 = vadd.f32 %v2426, %v2778
    %v2780 = vpop.f32.mrb[0].mxu0
    %v2781 = vadd.f32 %v2428, %v2780
    %2782 = vmatprep.mubr.bf16.mxu0 %v1350
    %2783 = vmatmul.mubr.bf16.gmra.mrb[0].mxu0 %v1349
    %v2784 = vpop.f32.mrb[0].mxu0
    %v2785 = vadd.f32 %v2432, %v2784
    %v2786 = vpop.f32.mrb[0].mxu0
    %v2787 = vadd.f32 %v2434, %v2786
    %v2788 = vpop.f32.mrb[0].mxu0
    %v2789 = vadd.f32 %v2436, %v2788
    %v2790 = vpop.f32.mrb[0].mxu0
    %v2791 = vadd.f32 %v2438, %v2790
    %2792 = vmatprep.mubr.bf16.mxu0 %v1354
    %2793 = vmatmul.mubr.bf16.gmra.mrb[0].mxu0 %v1353
    %v2794 = vpop.f32.mrb[0].mxu0
    %v2795 = vadd.f32 %v2442, %v2794
    %v2796 = vpop.f32.mrb[0].mxu0
    %v2797 = vadd.f32 %v2444, %v2796
    %v2798 = vpop.f32.mrb[0].mxu0
    %v2799 = vadd.f32 %v2446, %v2798
    %v2800 = vpop.f32.mrb[0].mxu0
    %v2801 = vadd.f32 %v2448, %v2800
    %2802 = vmatprep.mubr.bf16.mxu0 %v1358
    %2803 = vmatmul.mubr.bf16.gmra.mrb[0].mxu0 %v1357
    %v2804 = vpop.f32.mrb[0].mxu0
    %v2805 = vadd.f32 %v2452, %v2804
    %v2806 = vpop.f32.mrb[0].mxu0
    %v2807 = vadd.f32 %v2454, %v2806
    %v2808 = vpop.f32.mrb[0].mxu0
    %v2809 = vadd.f32 %v2456, %v2808
    %v2810 = vpop.f32.mrb[0].mxu0
    %v2811 = vadd.f32 %v2458, %v2810
    %2812 = vmatprep.mubr.bf16.mxu0 %v1362
    %2813 = vmatmul.mubr.bf16.gmra.mrb[0].mxu0 %v1361
    %v2814 = vpop.f32.mrb[0].mxu0
    %v2815 = vadd.f32 %v2462, %v2814
    %v2816 = vpop.f32.mrb[0].mxu0
    %v2817 = vadd.f32 %v2464, %v2816
    %v2818 = vpop.f32.mrb[0].mxu0
    %v2819 = vadd.f32 %v2466, %v2818
    %v2820 = vpop.f32.mrb[0].mxu0
    %v2821 = vadd.f32 %v2468, %v2820
    %2822 = vmatprep.mubr.bf16.mxu0 %v1366
    %2823 = vmatmul.mubr.bf16.gmra.mrb[0].mxu0 %v1365
    %v2824 = vpop.f32.mrb[0].mxu0
    %v2825 = vadd.f32 %v2472, %v2824
    %v2826 = vpop.f32.mrb[0].mxu0
    %v2827 = vadd.f32 %v2474, %v2826
    %v2828 = vpop.f32.mrb[0].mxu0
    %v2829 = vadd.f32 %v2476, %v2828
    %v2830 = vpop.f32.mrb[0].mxu0
    %v2831 = vadd.f32 %v2478, %v2830
    %2832 = vmatprep.mubr.bf16.mxu0 %v1370
    %2833 = vmatmul.mubr.bf16.gmra.mrb[0].mxu0 %v1369
    %v2834 = vpop.f32.mrb[0].mxu0
    %v2835 = vadd.f32 %v2482, %v2834
    %v2836 = vpop.f32.mrb[0].mxu0
    %v2837 = vadd.f32 %v2484, %v2836
    %v2838 = vpop.f32.mrb[0].mxu0
    %v2839 = vadd.f32 %v2486, %v2838
    %v2840 = vpop.f32.mrb[0].mxu0
    %v2841 = vadd.f32 %v2488, %v2840
    %2842 = vmatprep.mubr.bf16.mxu0 %v1374
    %2843 = vmatmul.mubr.bf16.gmra.mrb[0].mxu0 %v1373
    %v2844 = vpop.f32.mrb[0].mxu0
    %v2845 = vadd.f32 %v2492, %v2844
    %v2846 = vpop.f32.mrb[0].mxu0
    %v2847 = vadd.f32 %v2494, %v2846
    %v2848 = vpop.f32.mrb[0].mxu0
    %v2849 = vadd.f32 %v2496, %v2848
    %v2850 = vpop.f32.mrb[0].mxu0
    %v2851 = vadd.f32 %v2498, %v2850
    %2852 = vmatprep.mubr.bf16.mxu0 %v1378
    %2853 = vmatmul.mubr.bf16.gmra.mrb[0].mxu0 %v1377
    %v2854 = vpop.f32.mrb[0].mxu0
    %v2855 = vadd.f32 %v2502, %v2854
    %v2856 = vpop.f32.mrb[0].mxu0
    %v2857 = vadd.f32 %v2504, %v2856
    %v2858 = vpop.f32.mrb[0].mxu0
    %v2859 = vadd.f32 %v2506, %v2858
    %v2860 = vpop.f32.mrb[0].mxu0
    %v2861 = vadd.f32 %v2508, %v2860
    %2862 = vmatprep.mubr.bf16.mxu0 %v1382
    %2863 = vmatmul.mubr.bf16.gmra.mrb[0].mxu0 %v1381
    %v2864 = vpop.f32.mrb[0].mxu0
    %v2865 = vadd.f32 %v2512, %v2864
    %v2866 = vpop.f32.mrb[0].mxu0
    %v2867 = vadd.f32 %v2514, %v2866
    %v2868 = vpop.f32.mrb[0].mxu0
    %v2869 = vadd.f32 %v2516, %v2868
    %v2870 = vpop.f32.mrb[0].mxu0
    %v2871 = vadd.f32 %v2518, %v2870
    %2872 = vmatprep.mubr.bf16.mxu0 %v1386
    %2873 = vmatmul.mubr.bf16.gmra.mrb[0].mxu0 %v1385
    %v2874 = vpop.f32.mrb[0].mxu0
    %v2875 = vadd.f32 %v2522, %v2874
    %v2876 = vpop.f32.mrb[0].mxu0
    %v2877 = vadd.f32 %v2524, %v2876
    %v2878 = vpop.f32.mrb[0].mxu0
    %v2879 = vadd.f32 %v2526, %v2878
    %v2880 = vpop.f32.mrb[0].mxu0
    %v2881 = vadd.f32 %v2528, %v2880
    %2882 = vdwg.mxu0
    %2883 = vmatprep.subr.bf16.mxu0 %v1924
    %2884 = vmatpush1.bf16.msra.mxu0 %v1923
    %2885 = vmatprep.subr.bf16.mxu0 %v1928
    %2886 = vmatpush1.bf16.msra.mxu0 %v1927
    %2887 = vmatprep.subr.bf16.mxu0 %v1932
    %2888 = vmatpush1.bf16.msra.mxu0 %v1931
    %2889 = vmatprep.subr.bf16.mxu0 %v1936
    %2890 = vmatpush1.bf16.msra.mxu0 %v1935
    %2891 = vmatprep.subr.bf16.mxu0 %v1940
    %2892 = vmatpush1.bf16.msra.mxu0 %v1939
    %2893 = vmatprep.subr.bf16.mxu0 %v1944
    %2894 = vmatpush1.bf16.msra.mxu0 %v1943
    %2895 = vmatprep.subr.bf16.mxu0 %v1948
    %2896 = vmatpush1.bf16.msra.mxu0 %v1947
    %2897 = vmatprep.subr.bf16.mxu0 %v1952
    %2898 = vmatpush1.bf16.msra.mxu0 %v1951
    %2899 = vmatprep.subr.bf16.mxu0 %v1956
    %2900 = vmatpush1.bf16.msra.mxu0 %v1955
    %2901 = vmatprep.subr.bf16.mxu0 %v1960
    %2902 = vmatpush1.bf16.msra.mxu0 %v1959
    %2903 = vmatprep.subr.bf16.mxu0 %v1964
    %2904 = vmatpush1.bf16.msra.mxu0 %v1963
    %2905 = vmatprep.subr.bf16.mxu0 %v1968
    %2906 = vmatpush1.bf16.msra.mxu0 %v1967
    %2907 = vmatprep.subr.bf16.mxu0 %v1972
    %2908 = vmatpush1.bf16.msra.mxu0 %v1971
    %2909 = vmatprep.subr.bf16.mxu0 %v1976
    %2910 = vmatpush1.bf16.msra.mxu0 %v1975
    %2911 = vmatprep.subr.bf16.mxu0 %v1980
    %2912 = vmatpush1.bf16.msra.mxu0 %v1979
    %2913 = vmatprep.subr.bf16.mxu0 %v1984
    %2914 = vmatpush1.bf16.msra.mxu0 %v1983
    %2915 = vmatprep.mubr.bf16.mxu0 %v1260
    %2916 = vmatmul.mubr.bf16.gmra.mrb[0].mxu0 %v1259
    %v2917 = vpop.f32.mrb[0].mxu0
    %v2918 = vadd.f32 %v1528, %v2917
    %v2919 = vpop.f32.mrb[0].mxu0
    %v2920 = vadd.f32 %v1532, %v2919
    %v2921 = vpop.f32.mrb[0].mxu0
    %v2922 = vadd.f32 %v1528, %v2921
    %v2923 = vpop.f32.mrb[0].mxu0
    %v2924 = vadd.f32 %v1532, %v2923
    %2925 = vmatprep.mubr.bf16.mxu0 %v1264
    %2926 = vmatmul.mubr.bf16.gmra.mrb[0].mxu0 %v1263
    %v2927 = vpop.f32.mrb[0].mxu0
    %v2928 = vadd.f32 %v1528, %v2927
    %v2929 = vpop.f32.mrb[0].mxu0
    %v2930 = vadd.f32 %v1532, %v2929
    %v2931 = vpop.f32.mrb[0].mxu0
    %v2932 = vadd.f32 %v1528, %v2931
    %v2933 = vpop.f32.mrb[0].mxu0
    %v2934 = vadd.f32 %v1532, %v2933
    %2935 = vmatprep.mubr.bf16.mxu0 %v1268
    %2936 = vmatmul.mubr.bf16.gmra.mrb[0].mxu0 %v1267
    %v2937 = vpop.f32.mrb[0].mxu0
    %v2938 = vadd.f32 %v1528, %v2937
    %v2939 = vpop.f32.mrb[0].mxu0
    %v2940 = vadd.f32 %v1532, %v2939
    %v2941 = vpop.f32.mrb[0].mxu0
    %v2942 = vadd.f32 %v1528, %v2941
    %v2943 = vpop.f32.mrb[0].mxu0
    %v2944 = vadd.f32 %v1532, %v2943
    %2945 = vmatprep.mubr.bf16.mxu0 %v1272
    %2946 = vmatmul.mubr.bf16.gmra.mrb[0].mxu0 %v1271
    %v2947 = vpop.f32.mrb[0].mxu0
    %v2948 = vadd.f32 %v1528, %v2947
    %v2949 = vpop.f32.mrb[0].mxu0
    %v2950 = vadd.f32 %v1532, %v2949
    %v2951 = vpop.f32.mrb[0].mxu0
    %v2952 = vadd.f32 %v1528, %v2951
    %v2953 = vpop.f32.mrb[0].mxu0
    %v2954 = vadd.f32 %v1532, %v2953
    %2955 = vmatprep.mubr.bf16.mxu0 %v1276
    %2956 = vmatmul.mubr.bf16.gmra.mrb[0].mxu0 %v1275
    %v2957 = vpop.f32.mrb[0].mxu0
    %v2958 = vadd.f32 %v1528, %v2957
    %v2959 = vpop.f32.mrb[0].mxu0
    %v2960 = vadd.f32 %v1532, %v2959
    %v2961 = vpop.f32.mrb[0].mxu0
    %v2962 = vadd.f32 %v1528, %v2961
    %v2963 = vpop.f32.mrb[0].mxu0
    %v2964 = vadd.f32 %v1532, %v2963
    %2965 = vmatprep.mubr.bf16.mxu0 %v1280
    %2966 = vmatmul.mubr.bf16.gmra.mrb[0].mxu0 %v1279
    %v2967 = vpop.f32.mrb[0].mxu0
    %v2968 = vadd.f32 %v1528, %v2967
    %v2969 = vpop.f32.mrb[0].mxu0
    %v2970 = vadd.f32 %v1532, %v2969
    %v2971 = vpop.f32.mrb[0].mxu0
    %v2972 = vadd.f32 %v1528, %v2971
    %v2973 = vpop.f32.mrb[0].mxu0
    %v2974 = vadd.f32 %v1532, %v2973
    %2975 = vmatprep.mubr.bf16.mxu0 %v1284
    %2976 = vmatmul.mubr.bf16.gmra.mrb[0].mxu0 %v1283
    %v2977 = vpop.f32.mrb[0].mxu0
    %v2978 = vadd.f32 %v1528, %v2977
    %v2979 = vpop.f32.mrb[0].mxu0
    %v2980 = vadd.f32 %v1532, %v2979
    %v2981 = vpop.f32.mrb[0].mxu0
    %v2982 = vadd.f32 %v1528, %v2981
    %v2983 = vpop.f32.mrb[0].mxu0
    %v2984 = vadd.f32 %v1532, %v2983
    %2985 = vmatprep.mubr.bf16.mxu0 %v1288
    %2986 = vmatmul.mubr.bf16.gmra.mrb[0].mxu0 %v1287
    %v2987 = vpop.f32.mrb[0].mxu0
    %v2988 = vadd.f32 %v1528, %v2987
    %v2989 = vpop.f32.mrb[0].mxu0
    %v2990 = vadd.f32 %v1532, %v2989
    %v2991 = vpop.f32.mrb[0].mxu0
    %v2992 = vadd.f32 %v1528, %v2991
    %v2993 = vpop.f32.mrb[0].mxu0
    %v2994 = vadd.f32 %v1532, %v2993
    %2995 = vmatprep.mubr.bf16.mxu0 %v1292
    %2996 = vmatmul.mubr.bf16.gmra.mrb[0].mxu0 %v1291
    %v2997 = vpop.f32.mrb[0].mxu0
    %v2998 = vadd.f32 %v1528, %v2997
    %v2999 = vpop.f32.mrb[0].mxu0
    %v3000 = vadd.f32 %v1532, %v2999
    %v3001 = vpop.f32.mrb[0].mxu0
    %v3002 = vadd.f32 %v1528, %v3001
    %v3003 = vpop.f32.mrb[0].mxu0
    %v3004 = vadd.f32 %v1532, %v3003
    %3005 = vmatprep.mubr.bf16.mxu0 %v1296
    %3006 = vmatmul.mubr.bf16.gmra.mrb[0].mxu0 %v1295
    %v3007 = vpop.f32.mrb[0].mxu0
    %v3008 = vadd.f32 %v1528, %v3007
    %v3009 = vpop.f32.mrb[0].mxu0
    %v3010 = vadd.f32 %v1532, %v3009
    %v3011 = vpop.f32.mrb[0].mxu0
    %v3012 = vadd.f32 %v1528, %v3011
    %v3013 = vpop.f32.mrb[0].mxu0
    %v3014 = vadd.f32 %v1532, %v3013
    %3015 = vmatprep.mubr.bf16.mxu0 %v1300
    %3016 = vmatmul.mubr.bf16.gmra.mrb[0].mxu0 %v1299
    %v3017 = vpop.f32.mrb[0].mxu0
    %v3018 = vadd.f32 %v1528, %v3017
    %v3019 = vpop.f32.mrb[0].mxu0
    %v3020 = vadd.f32 %v1532, %v3019
    %v3021 = vpop.f32.mrb[0].mxu0
    %v3022 = vadd.f32 %v1528, %v3021
    %v3023 = vpop.f32.mrb[0].mxu0
    %v3024 = vadd.f32 %v1532, %v3023
    %3025 = vmatprep.mubr.bf16.mxu0 %v1304
    %3026 = vmatmul.mubr.bf16.gmra.mrb[0].mxu0 %v1303
    %v3027 = vpop.f32.mrb[0].mxu0
    %v3028 = vadd.f32 %v1528, %v3027
    %v3029 = vpop.f32.mrb[0].mxu0
    %v3030 = vadd.f32 %v1532, %v3029
    %v3031 = vpop.f32.mrb[0].mxu0
    %v3032 = vadd.f32 %v1528, %v3031
    %v3033 = vpop.f32.mrb[0].mxu0
    %v3034 = vadd.f32 %v1532, %v3033
    %3035 = vmatprep.mubr.bf16.mxu0 %v1308
    %3036 = vmatmul.mubr.bf16.gmra.mrb[0].mxu0 %v1307
    %v3037 = vpop.f32.mrb[0].mxu0
    %v3038 = vadd.f32 %v1528, %v3037
    %v3039 = vpop.f32.mrb[0].mxu0
    %v3040 = vadd.f32 %v1532, %v3039
    %v3041 = vpop.f32.mrb[0].mxu0
    %v3042 = vadd.f32 %v1528, %v3041
    %v3043 = vpop.f32.mrb[0].mxu0
    %v3044 = vadd.f32 %v1532, %v3043
    %3045 = vmatprep.mubr.bf16.mxu0 %v1312
    %3046 = vmatmul.mubr.bf16.gmra.mrb[0].mxu0 %v1311
    %v3047 = vpop.f32.mrb[0].mxu0
    %v3048 = vadd.f32 %v1528, %v3047
    %v3049 = vpop.f32.mrb[0].mxu0
    %v3050 = vadd.f32 %v1532, %v3049
    %v3051 = vpop.f32.mrb[0].mxu0
    %v3052 = vadd.f32 %v1528, %v3051
    %v3053 = vpop.f32.mrb[0].mxu0
    %v3054 = vadd.f32 %v1532, %v3053
    %3055 = vmatprep.mubr.bf16.mxu0 %v1316
    %3056 = vmatmul.mubr.bf16.gmra.mrb[0].mxu0 %v1315
    %v3057 = vpop.f32.mrb[0].mxu0
    %v3058 = vadd.f32 %v1528, %v3057
    %v3059 = vpop.f32.mrb[0].mxu0
    %v3060 = vadd.f32 %v1532, %v3059
    %v3061 = vpop.f32.mrb[0].mxu0
    %v3062 = vadd.f32 %v1528, %v3061
    %v3063 = vpop.f32.mrb[0].mxu0
    %v3064 = vadd.f32 %v1532, %v3063
    %3065 = vmatprep.mubr.bf16.mxu0 %v1320
    %3066 = vmatmul.mubr.bf16.gmra.mrb[0].mxu0 %v1319
    %v3067 = vpop.f32.mrb[0].mxu0
    %v3068 = vadd.f32 %v1528, %v3067
    %v3069 = vpop.f32.mrb[0].mxu0
    %v3070 = vadd.f32 %v1532, %v3069
    %v3071 = vpop.f32.mrb[0].mxu0
    %v3072 = vadd.f32 %v1528, %v3071
    %v3073 = vpop.f32.mrb[0].mxu0
    %v3074 = vadd.f32 %v1532, %v3073
    %3075 = vmatprep.mubr.bf16.mxu0 %v1324
    %3076 = vmatmul.mubr.bf16.gmra.mrb[0].mxu0 %v1323
    %v3077 = vpop.f32.mrb[0].mxu0
    %v3078 = vadd.f32 %v1528, %v3077
    %v3079 = vpop.f32.mrb[0].mxu0
    %v3080 = vadd.f32 %v1532, %v3079
    %v3081 = vpop.f32.mrb[0].mxu0
    %v3082 = vadd.f32 %v1528, %v3081
    %v3083 = vpop.f32.mrb[0].mxu0
    %v3084 = vadd.f32 %v1532, %v3083
    %3085 = vmatprep.mubr.bf16.mxu0 %v1328
    %3086 = vmatmul.mubr.bf16.gmra.mrb[0].mxu0 %v1327
    %v3087 = vpop.f32.mrb[0].mxu0
    %v3088 = vadd.f32 %v1528, %v3087
    %v3089 = vpop.f32.mrb[0].mxu0
    %v3090 = vadd.f32 %v1532, %v3089
    %v3091 = vpop.f32.mrb[0].mxu0
    %v3092 = vadd.f32 %v1528, %v3091
    %v3093 = vpop.f32.mrb[0].mxu0
    %v3094 = vadd.f32 %v1532, %v3093
    %3095 = vmatprep.mubr.bf16.mxu0 %v1332
    %3096 = vmatmul.mubr.bf16.gmra.mrb[0].mxu0 %v1331
    %v3097 = vpop.f32.mrb[0].mxu0
    %v3098 = vadd.f32 %v1528, %v3097
    %v3099 = vpop.f32.mrb[0].mxu0
    %v3100 = vadd.f32 %v1532, %v3099
    %v3101 = vpop.f32.mrb[0].mxu0
    %v3102 = vadd.f32 %v1528, %v3101
    %v3103 = vpop.f32.mrb[0].mxu0
    %v3104 = vadd.f32 %v1532, %v3103
    %3105 = vmatprep.mubr.bf16.mxu0 %v1336
    %3106 = vmatmul.mubr.bf16.gmra.mrb[0].mxu0 %v1335
    %v3107 = vpop.f32.mrb[0].mxu0
    %v3108 = vadd.f32 %v1528, %v3107
    %v3109 = vpop.f32.mrb[0].mxu0
    %v3110 = vadd.f32 %v1532, %v3109
    %v3111 = vpop.f32.mrb[0].mxu0
    %v3112 = vadd.f32 %v1528, %v3111
    %v3113 = vpop.f32.mrb[0].mxu0
    %v3114 = vadd.f32 %v1532, %v3113
    %3115 = vmatprep.mubr.bf16.mxu0 %v1340
    %3116 = vmatmul.mubr.bf16.gmra.mrb[0].mxu0 %v1339
    %v3117 = vpop.f32.mrb[0].mxu0
    %v3118 = vadd.f32 %v1528, %v3117
    %v3119 = vpop.f32.mrb[0].mxu0
    %v3120 = vadd.f32 %v1532, %v3119
    %v3121 = vpop.f32.mrb[0].mxu0
    %v3122 = vadd.f32 %v1528, %v3121
    %v3123 = vpop.f32.mrb[0].mxu0
    %v3124 = vadd.f32 %v1532, %v3123
    %3125 = vmatprep.mubr.bf16.mxu0 %v1344
    %3126 = vmatmul.mubr.bf16.gmra.mrb[0].mxu0 %v1343
    %v3127 = vpop.f32.mrb[0].mxu0
    %v3128 = vadd.f32 %v1528, %v3127
    %v3129 = vpop.f32.mrb[0].mxu0
    %v3130 = vadd.f32 %v1532, %v3129
    %v3131 = vpop.f32.mrb[0].mxu0
    %v3132 = vadd.f32 %v1528, %v3131
    %v3133 = vpop.f32.mrb[0].mxu0
    %v3134 = vadd.f32 %v1532, %v3133
    %3135 = vmatprep.mubr.bf16.mxu0 %v1348
    %3136 = vmatmul.mubr.bf16.gmra.mrb[0].mxu0 %v1347
    %v3137 = vpop.f32.mrb[0].mxu0
    %v3138 = vadd.f32 %v1528, %v3137
    %v3139 = vpop.f32.mrb[0].mxu0
    %v3140 = vadd.f32 %v1532, %v3139
    %v3141 = vpop.f32.mrb[0].mxu0
    %v3142 = vadd.f32 %v1528, %v3141
    %v3143 = vpop.f32.mrb[0].mxu0
    %v3144 = vadd.f32 %v1532, %v3143
    %3145 = vmatprep.mubr.bf16.mxu0 %v1352
    %3146 = vmatmul.mubr.bf16.gmra.mrb[0].mxu0 %v1351
    %v3147 = vpop.f32.mrb[0].mxu0
    %v3148 = vadd.f32 %v1528, %v3147
    %v3149 = vpop.f32.mrb[0].mxu0
    %v3150 = vadd.f32 %v1532, %v3149
    %v3151 = vpop.f32.mrb[0].mxu0
    %v3152 = vadd.f32 %v1528, %v3151
    %v3153 = vpop.f32.mrb[0].mxu0
    %v3154 = vadd.f32 %v1532, %v3153
    %3155 = vmatprep.mubr.bf16.mxu0 %v1356
    %3156 = vmatmul.mubr.bf16.gmra.mrb[0].mxu0 %v1355
    %v3157 = vpop.f32.mrb[0].mxu0
    %v3158 = vadd.f32 %v1528, %v3157
    %v3159 = vpop.f32.mrb[0].mxu0
    %v3160 = vadd.f32 %v1532, %v3159
    %v3161 = vpop.f32.mrb[0].mxu0
    %v3162 = vadd.f32 %v1528, %v3161
    %v3163 = vpop.f32.mrb[0].mxu0
    %v3164 = vadd.f32 %v1532, %v3163
    %3165 = vmatprep.mubr.bf16.mxu0 %v1360
    %3166 = vmatmul.mubr.bf16.gmra.mrb[0].mxu0 %v1359
    %v3167 = vpop.f32.mrb[0].mxu0
    %v3168 = vadd.f32 %v1528, %v3167
    %v3169 = vpop.f32.mrb[0].mxu0
    %v3170 = vadd.f32 %v1532, %v3169
    %v3171 = vpop.f32.mrb[0].mxu0
    %v3172 = vadd.f32 %v1528, %v3171
    %v3173 = vpop.f32.mrb[0].mxu0
    %v3174 = vadd.f32 %v1532, %v3173
    %3175 = vmatprep.mubr.bf16.mxu0 %v1364
    %3176 = vmatmul.mubr.bf16.gmra.mrb[0].mxu0 %v1363
    %v3177 = vpop.f32.mrb[0].mxu0
    %v3178 = vadd.f32 %v1528, %v3177
    %v3179 = vpop.f32.mrb[0].mxu0
    %v3180 = vadd.f32 %v1532, %v3179
    %v3181 = vpop.f32.mrb[0].mxu0
    %v3182 = vadd.f32 %v1528, %v3181
    %v3183 = vpop.f32.mrb[0].mxu0
    %v3184 = vadd.f32 %v1532, %v3183
    %3185 = vmatprep.mubr.bf16.mxu0 %v1368
    %3186 = vmatmul.mubr.bf16.gmra.mrb[0].mxu0 %v1367
    %v3187 = vpop.f32.mrb[0].mxu0
    %v3188 = vadd.f32 %v1528, %v3187
    %v3189 = vpop.f32.mrb[0].mxu0
    %v3190 = vadd.f32 %v1532, %v3189
    %v3191 = vpop.f32.mrb[0].mxu0
    %v3192 = vadd.f32 %v1528, %v3191
    %v3193 = vpop.f32.mrb[0].mxu0
    %v3194 = vadd.f32 %v1532, %v3193
    %3195 = vmatprep.mubr.bf16.mxu0 %v1372
    %3196 = vmatmul.mubr.bf16.gmra.mrb[0].mxu0 %v1371
    %v3197 = vpop.f32.mrb[0].mxu0
    %v3198 = vadd.f32 %v1528, %v3197
    %v3199 = vpop.f32.mrb[0].mxu0
    %v3200 = vadd.f32 %v1532, %v3199
    %v3201 = vpop.f32.mrb[0].mxu0
    %v3202 = vadd.f32 %v1528, %v3201
    %v3203 = vpop.f32.mrb[0].mxu0
    %v3204 = vadd.f32 %v1532, %v3203
    %3205 = vmatprep.mubr.bf16.mxu0 %v1376
    %3206 = vmatmul.mubr.bf16.gmra.mrb[0].mxu0 %v1375
    %v3207 = vpop.f32.mrb[0].mxu0
    %v3208 = vadd.f32 %v1528, %v3207
    %v3209 = vpop.f32.mrb[0].mxu0
    %v3210 = vadd.f32 %v1532, %v3209
    %v3211 = vpop.f32.mrb[0].mxu0
    %v3212 = vadd.f32 %v1528, %v3211
    %v3213 = vpop.f32.mrb[0].mxu0
    %v3214 = vadd.f32 %v1532, %v3213
    %3215 = vmatprep.mubr.bf16.mxu0 %v1380
    %3216 = vmatmul.mubr.bf16.gmra.mrb[0].mxu0 %v1379
    %v3217 = vpop.f32.mrb[0].mxu0
    %v3218 = vadd.f32 %v1528, %v3217
    %v3219 = vpop.f32.mrb[0].mxu0
    %v3220 = vadd.f32 %v1532, %v3219
    %v3221 = vpop.f32.mrb[0].mxu0
    %v3222 = vadd.f32 %v1528, %v3221
    %v3223 = vpop.f32.mrb[0].mxu0
    %v3224 = vadd.f32 %v1532, %v3223
    %3225 = vmatprep.mubr.bf16.mxu0 %v1384
    %3226 = vmatmul.mubr.bf16.gmra.mrb[0].mxu0 %v1383
    %v3227 = vpop.f32.mrb[0].mxu0
    %v3228 = vadd.f32 %v1528, %v3227
    %v3229 = vpop.f32.mrb[0].mxu0
    %v3230 = vadd.f32 %v1532, %v3229
    %v3231 = vpop.f32.mrb[0].mxu0
    %v3232 = vadd.f32 %v1528, %v3231
    %v3233 = vpop.f32.mrb[0].mxu0
    %v3234 = vadd.f32 %v1532, %v3233
    %3235 = vdwg.mxu0
    %3236 = vmatprep.subr.bf16.mxu0 %v1988
    %3237 = vmatpush1.bf16.msra.mxu0 %v1987
    %3238 = vmatprep.subr.bf16.mxu0 %v1992
    %3239 = vmatpush1.bf16.msra.mxu0 %v1991
    %3240 = vmatprep.subr.bf16.mxu0 %v1996
    %3241 = vmatpush1.bf16.msra.mxu0 %v1995
    %3242 = vmatprep.subr.bf16.mxu0 %v2000
    %3243 = vmatpush1.bf16.msra.mxu0 %v1999
    %3244 = vmatprep.subr.bf16.mxu0 %v2004
    %3245 = vmatpush1.bf16.msra.mxu0 %v2003
    %3246 = vmatprep.subr.bf16.mxu0 %v2008
    %3247 = vmatpush1.bf16.msra.mxu0 %v2007
    %3248 = vmatprep.subr.bf16.mxu0 %v2012
    %3249 = vmatpush1.bf16.msra.mxu0 %v2011
    %3250 = vmatprep.subr.bf16.mxu0 %v2016
    %3251 = vmatpush1.bf16.msra.mxu0 %v2015
    %3252 = vmatprep.subr.bf16.mxu0 %v2020
    %3253 = vmatpush1.bf16.msra.mxu0 %v2019
    %3254 = vmatprep.subr.bf16.mxu0 %v2024
    %3255 = vmatpush1.bf16.msra.mxu0 %v2023
    %3256 = vmatprep.subr.bf16.mxu0 %v2028
    %3257 = vmatpush1.bf16.msra.mxu0 %v2027
    %3258 = vmatprep.subr.bf16.mxu0 %v2032
    %3259 = vmatpush1.bf16.msra.mxu0 %v2031
    %3260 = vmatprep.subr.bf16.mxu0 %v2036
    %3261 = vmatpush1.bf16.msra.mxu0 %v2035
    %3262 = vmatprep.subr.bf16.mxu0 %v2040
    %3263 = vmatpush1.bf16.msra.mxu0 %v2039
    %3264 = vmatprep.subr.bf16.mxu0 %v2044
    %3265 = vmatpush1.bf16.msra.mxu0 %v2043
    %3266 = vmatprep.subr.bf16.mxu0 %v2048
    %3267 = vmatpush1.bf16.msra.mxu0 %v2047
    %3268 = vmatprep.mubr.bf16.mxu0 %v1262
    %3269 = vmatmul.mubr.bf16.gmra.mrb[0].mxu0 %v1261
    %v3270 = vpop.f32.mrb[0].mxu0
    %v3271 = vadd.f32 %v2918, %v3270
    %v3272 = vpop.f32.mrb[0].mxu0
    %v3273 = vadd.f32 %v2920, %v3272
    %v3274 = vpop.f32.mrb[0].mxu0
    %v3275 = vadd.f32 %v2922, %v3274
    %v3276 = vpop.f32.mrb[0].mxu0
    %v3277 = vadd.f32 %v2924, %v3276
    %3278 = vmatprep.mubr.bf16.mxu0 %v1266
    %3279 = vmatmul.mubr.bf16.gmra.mrb[0].mxu0 %v1265
    %v3280 = vpop.f32.mrb[0].mxu0
    %v3281 = vadd.f32 %v2928, %v3280
    %v3282 = vpop.f32.mrb[0].mxu0
    %v3283 = vadd.f32 %v2930, %v3282
    %v3284 = vpop.f32.mrb[0].mxu0
    %v3285 = vadd.f32 %v2932, %v3284
    %v3286 = vpop.f32.mrb[0].mxu0
    %v3287 = vadd.f32 %v2934, %v3286
    %3288 = vmatprep.mubr.bf16.mxu0 %v1270
    %3289 = vmatmul.mubr.bf16.gmra.mrb[0].mxu0 %v1269
    %v3290 = vpop.f32.mrb[0].mxu0
    %v3291 = vadd.f32 %v2938, %v3290
    %v3292 = vpop.f32.mrb[0].mxu0
    %v3293 = vadd.f32 %v2940, %v3292
    %v3294 = vpop.f32.mrb[0].mxu0
    %v3295 = vadd.f32 %v2942, %v3294
    %v3296 = vpop.f32.mrb[0].mxu0
    %v3297 = vadd.f32 %v2944, %v3296
    %3298 = vmatprep.mubr.bf16.mxu0 %v1274
    %3299 = vmatmul.mubr.bf16.gmra.mrb[0].mxu0 %v1273
    %v3300 = vpop.f32.mrb[0].mxu0
    %v3301 = vadd.f32 %v2948, %v3300
    %v3302 = vpop.f32.mrb[0].mxu0
    %v3303 = vadd.f32 %v2950, %v3302
    %v3304 = vpop.f32.mrb[0].mxu0
    %v3305 = vadd.f32 %v2952, %v3304
    %v3306 = vpop.f32.mrb[0].mxu0
    %v3307 = vadd.f32 %v2954, %v3306
    %3308 = vmatprep.mubr.bf16.mxu0 %v1278
    %3309 = vmatmul.mubr.bf16.gmra.mrb[0].mxu0 %v1277
    %v3310 = vpop.f32.mrb[0].mxu0
    %v3311 = vadd.f32 %v2958, %v3310
    %v3312 = vpop.f32.mrb[0].mxu0
    %v3313 = vadd.f32 %v2960, %v3312
    %v3314 = vpop.f32.mrb[0].mxu0
    %v3315 = vadd.f32 %v2962, %v3314
    %v3316 = vpop.f32.mrb[0].mxu0
    %v3317 = vadd.f32 %v2964, %v3316
    %3318 = vmatprep.mubr.bf16.mxu0 %v1282
    %3319 = vmatmul.mubr.bf16.gmra.mrb[0].mxu0 %v1281
    %v3320 = vpop.f32.mrb[0].mxu0
    %v3321 = vadd.f32 %v2968, %v3320
    %v3322 = vpop.f32.mrb[0].mxu0
    %v3323 = vadd.f32 %v2970, %v3322
    %v3324 = vpop.f32.mrb[0].mxu0
    %v3325 = vadd.f32 %v2972, %v3324
    %v3326 = vpop.f32.mrb[0].mxu0
    %v3327 = vadd.f32 %v2974, %v3326
    %3328 = vmatprep.mubr.bf16.mxu0 %v1286
    %3329 = vmatmul.mubr.bf16.gmra.mrb[0].mxu0 %v1285
    %v3330 = vpop.f32.mrb[0].mxu0
    %v3331 = vadd.f32 %v2978, %v3330
    %v3332 = vpop.f32.mrb[0].mxu0
    %v3333 = vadd.f32 %v2980, %v3332
    %v3334 = vpop.f32.mrb[0].mxu0
    %v3335 = vadd.f32 %v2982, %v3334
    %v3336 = vpop.f32.mrb[0].mxu0
    %v3337 = vadd.f32 %v2984, %v3336
    %3338 = vmatprep.mubr.bf16.mxu0 %v1290
    %3339 = vmatmul.mubr.bf16.gmra.mrb[0].mxu0 %v1289
    %v3340 = vpop.f32.mrb[0].mxu0
    %v3341 = vadd.f32 %v2988, %v3340
    %v3342 = vpop.f32.mrb[0].mxu0
    %v3343 = vadd.f32 %v2990, %v3342
    %v3344 = vpop.f32.mrb[0].mxu0
    %v3345 = vadd.f32 %v2992, %v3344
    %v3346 = vpop.f32.mrb[0].mxu0
    %v3347 = vadd.f32 %v2994, %v3346
    %3348 = vmatprep.mubr.bf16.mxu0 %v1294
    %3349 = vmatmul.mubr.bf16.gmra.mrb[0].mxu0 %v1293
    %v3350 = vpop.f32.mrb[0].mxu0
    %v3351 = vadd.f32 %v2998, %v3350
    %v3352 = vpop.f32.mrb[0].mxu0
    %v3353 = vadd.f32 %v3000, %v3352
    %v3354 = vpop.f32.mrb[0].mxu0
    %v3355 = vadd.f32 %v3002, %v3354
    %v3356 = vpop.f32.mrb[0].mxu0
    %v3357 = vadd.f32 %v3004, %v3356
    %3358 = vmatprep.mubr.bf16.mxu0 %v1298
    %3359 = vmatmul.mubr.bf16.gmra.mrb[0].mxu0 %v1297
    %v3360 = vpop.f32.mrb[0].mxu0
    %v3361 = vadd.f32 %v3008, %v3360
    %v3362 = vpop.f32.mrb[0].mxu0
    %v3363 = vadd.f32 %v3010, %v3362
    %v3364 = vpop.f32.mrb[0].mxu0
    %v3365 = vadd.f32 %v3012, %v3364
    %v3366 = vpop.f32.mrb[0].mxu0
    %v3367 = vadd.f32 %v3014, %v3366
    %3368 = vmatprep.mubr.bf16.mxu0 %v1302
    %3369 = vmatmul.mubr.bf16.gmra.mrb[0].mxu0 %v1301
    %v3370 = vpop.f32.mrb[0].mxu0
    %v3371 = vadd.f32 %v3018, %v3370
    %v3372 = vpop.f32.mrb[0].mxu0
    %v3373 = vadd.f32 %v3020, %v3372
    %v3374 = vpop.f32.mrb[0].mxu0
    %v3375 = vadd.f32 %v3022, %v3374
    %v3376 = vpop.f32.mrb[0].mxu0
    %v3377 = vadd.f32 %v3024, %v3376
    %3378 = vmatprep.mubr.bf16.mxu0 %v1306
    %3379 = vmatmul.mubr.bf16.gmra.mrb[0].mxu0 %v1305
    %v3380 = vpop.f32.mrb[0].mxu0
    %v3381 = vadd.f32 %v3028, %v3380
    %v3382 = vpop.f32.mrb[0].mxu0
    %v3383 = vadd.f32 %v3030, %v3382
    %v3384 = vpop.f32.mrb[0].mxu0
    %v3385 = vadd.f32 %v3032, %v3384
    %v3386 = vpop.f32.mrb[0].mxu0
    %v3387 = vadd.f32 %v3034, %v3386
    %3388 = vmatprep.mubr.bf16.mxu0 %v1310
    %3389 = vmatmul.mubr.bf16.gmra.mrb[0].mxu0 %v1309
    %v3390 = vpop.f32.mrb[0].mxu0
    %v3391 = vadd.f32 %v3038, %v3390
    %v3392 = vpop.f32.mrb[0].mxu0
    %v3393 = vadd.f32 %v3040, %v3392
    %v3394 = vpop.f32.mrb[0].mxu0
    %v3395 = vadd.f32 %v3042, %v3394
    %v3396 = vpop.f32.mrb[0].mxu0
    %v3397 = vadd.f32 %v3044, %v3396
    %3398 = vmatprep.mubr.bf16.mxu0 %v1314
    %3399 = vmatmul.mubr.bf16.gmra.mrb[0].mxu0 %v1313
    %v3400 = vpop.f32.mrb[0].mxu0
    %v3401 = vadd.f32 %v3048, %v3400
    %v3402 = vpop.f32.mrb[0].mxu0
    %v3403 = vadd.f32 %v3050, %v3402
    %v3404 = vpop.f32.mrb[0].mxu0
    %v3405 = vadd.f32 %v3052, %v3404
    %v3406 = vpop.f32.mrb[0].mxu0
    %v3407 = vadd.f32 %v3054, %v3406
    %3408 = vmatprep.mubr.bf16.mxu0 %v1318
    %3409 = vmatmul.mubr.bf16.gmra.mrb[0].mxu0 %v1317
    %v3410 = vpop.f32.mrb[0].mxu0
    %v3411 = vadd.f32 %v3058, %v3410
    %v3412 = vpop.f32.mrb[0].mxu0
    %v3413 = vadd.f32 %v3060, %v3412
    %v3414 = vpop.f32.mrb[0].mxu0
    %v3415 = vadd.f32 %v3062, %v3414
    %v3416 = vpop.f32.mrb[0].mxu0
    %v3417 = vadd.f32 %v3064, %v3416
    %3418 = vmatprep.mubr.bf16.mxu0 %v1322
    %3419 = vmatmul.mubr.bf16.gmra.mrb[0].mxu0 %v1321
    %v3420 = vpop.f32.mrb[0].mxu0
    %v3421 = vadd.f32 %v3068, %v3420
    %v3422 = vpop.f32.mrb[0].mxu0
    %v3423 = vadd.f32 %v3070, %v3422
    %v3424 = vpop.f32.mrb[0].mxu0
    %v3425 = vadd.f32 %v3072, %v3424
    %v3426 = vpop.f32.mrb[0].mxu0
    %v3427 = vadd.f32 %v3074, %v3426
    %3428 = vmatprep.mubr.bf16.mxu0 %v1326
    %3429 = vmatmul.mubr.bf16.gmra.mrb[0].mxu0 %v1325
    %v3430 = vpop.f32.mrb[0].mxu0
    %v3431 = vadd.f32 %v3078, %v3430
    %v3432 = vpop.f32.mrb[0].mxu0
    %v3433 = vadd.f32 %v3080, %v3432
    %v3434 = vpop.f32.mrb[0].mxu0
    %v3435 = vadd.f32 %v3082, %v3434
    %v3436 = vpop.f32.mrb[0].mxu0
    %v3437 = vadd.f32 %v3084, %v3436
    %3438 = vmatprep.mubr.bf16.mxu0 %v1330
    %3439 = vmatmul.mubr.bf16.gmra.mrb[0].mxu0 %v1329
    %v3440 = vpop.f32.mrb[0].mxu0
    %v3441 = vadd.f32 %v3088, %v3440
    %v3442 = vpop.f32.mrb[0].mxu0
    %v3443 = vadd.f32 %v3090, %v3442
    %v3444 = vpop.f32.mrb[0].mxu0
    %v3445 = vadd.f32 %v3092, %v3444
    %v3446 = vpop.f32.mrb[0].mxu0
    %v3447 = vadd.f32 %v3094, %v3446
    %3448 = vmatprep.mubr.bf16.mxu0 %v1334
    %3449 = vmatmul.mubr.bf16.gmra.mrb[0].mxu0 %v1333
    %v3450 = vpop.f32.mrb[0].mxu0
    %v3451 = vadd.f32 %v3098, %v3450
    %v3452 = vpop.f32.mrb[0].mxu0
    %v3453 = vadd.f32 %v3100, %v3452
    %v3454 = vpop.f32.mrb[0].mxu0
    %v3455 = vadd.f32 %v3102, %v3454
    %v3456 = vpop.f32.mrb[0].mxu0
    %v3457 = vadd.f32 %v3104, %v3456
    %3458 = vmatprep.mubr.bf16.mxu0 %v1338
    %3459 = vmatmul.mubr.bf16.gmra.mrb[0].mxu0 %v1337
    %v3460 = vpop.f32.mrb[0].mxu0
    %v3461 = vadd.f32 %v3108, %v3460
    %v3462 = vpop.f32.mrb[0].mxu0
    %v3463 = vadd.f32 %v3110, %v3462
    %v3464 = vpop.f32.mrb[0].mxu0
    %v3465 = vadd.f32 %v3112, %v3464
    %v3466 = vpop.f32.mrb[0].mxu0
    %v3467 = vadd.f32 %v3114, %v3466
    %3468 = vmatprep.mubr.bf16.mxu0 %v1342
    %3469 = vmatmul.mubr.bf16.gmra.mrb[0].mxu0 %v1341
    %v3470 = vpop.f32.mrb[0].mxu0
    %v3471 = vadd.f32 %v3118, %v3470
    %v3472 = vpop.f32.mrb[0].mxu0
    %v3473 = vadd.f32 %v3120, %v3472
    %v3474 = vpop.f32.mrb[0].mxu0
    %v3475 = vadd.f32 %v3122, %v3474
    %v3476 = vpop.f32.mrb[0].mxu0
    %v3477 = vadd.f32 %v3124, %v3476
    %3478 = vmatprep.mubr.bf16.mxu0 %v1346
    %3479 = vmatmul.mubr.bf16.gmra.mrb[0].mxu0 %v1345
    %v3480 = vpop.f32.mrb[0].mxu0
    %v3481 = vadd.f32 %v3128, %v3480
    %v3482 = vpop.f32.mrb[0].mxu0
    %v3483 = vadd.f32 %v3130, %v3482
    %v3484 = vpop.f32.mrb[0].mxu0
    %v3485 = vadd.f32 %v3132, %v3484
    %v3486 = vpop.f32.mrb[0].mxu0
    %v3487 = vadd.f32 %v3134, %v3486
    %3488 = vmatprep.mubr.bf16.mxu0 %v1350
    %3489 = vmatmul.mubr.bf16.gmra.mrb[0].mxu0 %v1349
    %v3490 = vpop.f32.mrb[0].mxu0
    %v3491 = vadd.f32 %v3138, %v3490
    %v3492 = vpop.f32.mrb[0].mxu0
    %v3493 = vadd.f32 %v3140, %v3492
    %v3494 = vpop.f32.mrb[0].mxu0
    %v3495 = vadd.f32 %v3142, %v3494
    %v3496 = vpop.f32.mrb[0].mxu0
    %v3497 = vadd.f32 %v3144, %v3496
    %3498 = vmatprep.mubr.bf16.mxu0 %v1354
    %3499 = vmatmul.mubr.bf16.gmra.mrb[0].mxu0 %v1353
    %v3500 = vpop.f32.mrb[0].mxu0
    %v3501 = vadd.f32 %v3148, %v3500
    %v3502 = vpop.f32.mrb[0].mxu0
    %v3503 = vadd.f32 %v3150, %v3502
    %v3504 = vpop.f32.mrb[0].mxu0
    %v3505 = vadd.f32 %v3152, %v3504
    %v3506 = vpop.f32.mrb[0].mxu0
    %v3507 = vadd.f32 %v3154, %v3506
    %3508 = vmatprep.mubr.bf16.mxu0 %v1358
    %3509 = vmatmul.mubr.bf16.gmra.mrb[0].mxu0 %v1357
    %v3510 = vpop.f32.mrb[0].mxu0
    %v3511 = vadd.f32 %v3158, %v3510
    %v3512 = vpop.f32.mrb[0].mxu0
    %v3513 = vadd.f32 %v3160, %v3512
    %v3514 = vpop.f32.mrb[0].mxu0
    %v3515 = vadd.f32 %v3162, %v3514
    %v3516 = vpop.f32.mrb[0].mxu0
    %v3517 = vadd.f32 %v3164, %v3516
    %3518 = vmatprep.mubr.bf16.mxu0 %v1362
    %3519 = vmatmul.mubr.bf16.gmra.mrb[0].mxu0 %v1361
    %v3520 = vpop.f32.mrb[0].mxu0
    %v3521 = vadd.f32 %v3168, %v3520
    %v3522 = vpop.f32.mrb[0].mxu0
    %v3523 = vadd.f32 %v3170, %v3522
    %v3524 = vpop.f32.mrb[0].mxu0
    %v3525 = vadd.f32 %v3172, %v3524
    %v3526 = vpop.f32.mrb[0].mxu0
    %v3527 = vadd.f32 %v3174, %v3526
    %3528 = vmatprep.mubr.bf16.mxu0 %v1366
    %3529 = vmatmul.mubr.bf16.gmra.mrb[0].mxu0 %v1365
    %v3530 = vpop.f32.mrb[0].mxu0
    %v3531 = vadd.f32 %v3178, %v3530
    %v3532 = vpop.f32.mrb[0].mxu0
    %v3533 = vadd.f32 %v3180, %v3532
    %v3534 = vpop.f32.mrb[0].mxu0
    %v3535 = vadd.f32 %v3182, %v3534
    %v3536 = vpop.f32.mrb[0].mxu0
    %v3537 = vadd.f32 %v3184, %v3536
    %3538 = vmatprep.mubr.bf16.mxu0 %v1370
    %3539 = vmatmul.mubr.bf16.gmra.mrb[0].mxu0 %v1369
    %v3540 = vpop.f32.mrb[0].mxu0
    %v3541 = vadd.f32 %v3188, %v3540
    %v3542 = vpop.f32.mrb[0].mxu0
    %v3543 = vadd.f32 %v3190, %v3542
    %v3544 = vpop.f32.mrb[0].mxu0
    %v3545 = vadd.f32 %v3192, %v3544
    %v3546 = vpop.f32.mrb[0].mxu0
    %v3547 = vadd.f32 %v3194, %v3546
    %3548 = vmatprep.mubr.bf16.mxu0 %v1374
    %3549 = vmatmul.mubr.bf16.gmra.mrb[0].mxu0 %v1373
    %v3550 = vpop.f32.mrb[0].mxu0
    %v3551 = vadd.f32 %v3198, %v3550
    %v3552 = vpop.f32.mrb[0].mxu0
    %v3553 = vadd.f32 %v3200, %v3552
    %v3554 = vpop.f32.mrb[0].mxu0
    %v3555 = vadd.f32 %v3202, %v3554
    %v3556 = vpop.f32.mrb[0].mxu0
    %v3557 = vadd.f32 %v3204, %v3556
    %3558 = vmatprep.mubr.bf16.mxu0 %v1378
    %3559 = vmatmul.mubr.bf16.gmra.mrb[0].mxu0 %v1377
    %v3560 = vpop.f32.mrb[0].mxu0
    %v3561 = vadd.f32 %v3208, %v3560
    %v3562 = vpop.f32.mrb[0].mxu0
    %v3563 = vadd.f32 %v3210, %v3562
    %v3564 = vpop.f32.mrb[0].mxu0
    %v3565 = vadd.f32 %v3212, %v3564
    %v3566 = vpop.f32.mrb[0].mxu0
    %v3567 = vadd.f32 %v3214, %v3566
    %3568 = vmatprep.mubr.bf16.mxu0 %v1382
    %3569 = vmatmul.mubr.bf16.gmra.mrb[0].mxu0 %v1381
    %v3570 = vpop.f32.mrb[0].mxu0
    %v3571 = vadd.f32 %v3218, %v3570
    %v3572 = vpop.f32.mrb[0].mxu0
    %v3573 = vadd.f32 %v3220, %v3572
    %v3574 = vpop.f32.mrb[0].mxu0
    %v3575 = vadd.f32 %v3222, %v3574
    %v3576 = vpop.f32.mrb[0].mxu0
    %v3577 = vadd.f32 %v3224, %v3576
    %3578 = vmatprep.mubr.bf16.mxu0 %v1386
    %3579 = vmatmul.mubr.bf16.gmra.mrb[0].mxu0 %v1385
    %v3580 = vpop.f32.mrb[0].mxu0
    %v3581 = vadd.f32 %v3228, %v3580
    %v3582 = vpop.f32.mrb[0].mxu0
    %v3583 = vadd.f32 %v3230, %v3582
    %v3584 = vpop.f32.mrb[0].mxu0
    %v3585 = vadd.f32 %v3232, %v3584
    %v3586 = vpop.f32.mrb[0].mxu0
    %v3587 = vadd.f32 %v3234, %v3586
    %3588 = vdwg.mxu0
    %v3589 = vmax.f32 %v2565, 0.0
    %v3590 = vmax.f32 %v2567, 0.0
    %v3591 = vmax.f32 %v3271, 0.0
    %v3592 = vmax.f32 %v3273, 0.0
    %v3593 = vmax.f32 %v2569, 0.0
    %v3594 = vmax.f32 %v2571, 0.0
    %v3595 = vmax.f32 %v3275, 0.0
    %v3596 = vmax.f32 %v3277, 0.0
    %v3597 = vmax.f32 %v2575, 0.0
    %v3598 = vmax.f32 %v2577, 0.0
    %v3599 = vmax.f32 %v3281, 0.0
    %v3600 = vmax.f32 %v3283, 0.0
    %v3601 = vmax.f32 %v2579, 0.0
    %v3602 = vmax.f32 %v2581, 0.0
    %v3603 = vmax.f32 %v3285, 0.0
    %v3604 = vmax.f32 %v3287, 0.0
    %v3605 = vmax.f32 %v2585, 0.0
    %v3606 = vmax.f32 %v2587, 0.0
    %v3607 = vmax.f32 %v3291, 0.0
    %v3608 = vmax.f32 %v3293, 0.0
    %v3609 = vmax.f32 %v2589, 0.0
    %v3610 = vmax.f32 %v2591, 0.0
    %v3611 = vmax.f32 %v3295, 0.0
    %v3612 = vmax.f32 %v3297, 0.0
    %v3613 = vmax.f32 %v2595, 0.0
    %v3614 = vmax.f32 %v2597, 0.0
    %v3615 = vmax.f32 %v3301, 0.0
    %v3616 = vmax.f32 %v3303, 0.0
    %v3617 = vmax.f32 %v2599, 0.0
    %v3618 = vmax.f32 %v2601, 0.0
    %v3619 = vmax.f32 %v3305, 0.0
    %v3620 = vmax.f32 %v3307, 0.0
    %v3621 = vmax.f32 %v2605, 0.0
    %v3622 = vmax.f32 %v2607, 0.0
    %v3623 = vmax.f32 %v3311, 0.0
    %v3624 = vmax.f32 %v3313, 0.0
    %v3625 = vmax.f32 %v2609, 0.0
    %v3626 = vmax.f32 %v2611, 0.0
    %v3627 = vmax.f32 %v3315, 0.0
    %v3628 = vmax.f32 %v3317, 0.0
    %v3629 = vmax.f32 %v2615, 0.0
    %v3630 = vmax.f32 %v2617, 0.0
    %v3631 = vmax.f32 %v3321, 0.0
    %v3632 = vmax.f32 %v3323, 0.0
    %v3633 = vmax.f32 %v2619, 0.0
    %v3634 = vmax.f32 %v2621, 0.0
    %v3635 = vmax.f32 %v3325, 0.0
    %v3636 = vmax.f32 %v3327, 0.0
    %v3637 = vmax.f32 %v2625, 0.0
    %v3638 = vmax.f32 %v2627, 0.0
    %v3639 = vmax.f32 %v3331, 0.0
    %v3640 = vmax.f32 %v3333, 0.0
    %v3641 = vmax.f32 %v2629, 0.0
    %v3642 = vmax.f32 %v2631, 0.0
    %v3643 = vmax.f32 %v3335, 0.0
    %v3644 = vmax.f32 %v3337, 0.0
    %v3645 = vmax.f32 %v2635, 0.0
    %v3646 = vmax.f32 %v2637, 0.0
    %v3647 = vmax.f32 %v3341, 0.0
    %v3648 = vmax.f32 %v3343, 0.0
    %v3649 = vmax.f32 %v2639, 0.0
    %v3650 = vmax.f32 %v2641, 0.0
    %v3651 = vmax.f32 %v3345, 0.0
    %v3652 = vmax.f32 %v3347, 0.0
    %v3653 = vmax.f32 %v2645, 0.0
    %v3654 = vmax.f32 %v2647, 0.0
    %v3655 = vmax.f32 %v3351, 0.0
    %v3656 = vmax.f32 %v3353, 0.0
    %v3657 = vmax.f32 %v2649, 0.0
    %v3658 = vmax.f32 %v2651, 0.0
    %v3659 = vmax.f32 %v3355, 0.0
    %v3660 = vmax.f32 %v3357, 0.0
    %v3661 = vmax.f32 %v2655, 0.0
    %v3662 = vmax.f32 %v2657, 0.0
    %v3663 = vmax.f32 %v3361, 0.0
    %v3664 = vmax.f32 %v3363, 0.0
    %v3665 = vmax.f32 %v2659, 0.0
    %v3666 = vmax.f32 %v2661, 0.0
    %v3667 = vmax.f32 %v3365, 0.0
    %v3668 = vmax.f32 %v3367, 0.0
    %v3669 = vmax.f32 %v2665, 0.0
    %v3670 = vmax.f32 %v2667, 0.0
    %v3671 = vmax.f32 %v3371, 0.0
    %v3672 = vmax.f32 %v3373, 0.0
    %v3673 = vmax.f32 %v2669, 0.0
    %v3674 = vmax.f32 %v2671, 0.0
    %v3675 = vmax.f32 %v3375, 0.0
    %v3676 = vmax.f32 %v3377, 0.0
    %v3677 = vmax.f32 %v2675, 0.0
    %v3678 = vmax.f32 %v2677, 0.0
    %v3679 = vmax.f32 %v3381, 0.0
    %v3680 = vmax.f32 %v3383, 0.0
    %v3681 = vmax.f32 %v2679, 0.0
    %v3682 = vmax.f32 %v2681, 0.0
    %v3683 = vmax.f32 %v3385, 0.0
    %v3684 = vmax.f32 %v3387, 0.0
    %v3685 = vmax.f32 %v2685, 0.0
    %v3686 = vmax.f32 %v2687, 0.0
    %v3687 = vmax.f32 %v3391, 0.0
    %v3688 = vmax.f32 %v3393, 0.0
    %v3689 = vmax.f32 %v2689, 0.0
    %v3690 = vmax.f32 %v2691, 0.0
    %v3691 = vmax.f32 %v3395, 0.0
    %v3692 = vmax.f32 %v3397, 0.0
    %v3693 = vmax.f32 %v2695, 0.0
    %v3694 = vmax.f32 %v2697, 0.0
    %v3695 = vmax.f32 %v3401, 0.0
    %v3696 = vmax.f32 %v3403, 0.0
    %v3697 = vmax.f32 %v2699, 0.0
    %v3698 = vmax.f32 %v2701, 0.0
    %v3699 = vmax.f32 %v3405, 0.0
    %v3700 = vmax.f32 %v3407, 0.0
    %v3701 = vmax.f32 %v2705, 0.0
    %v3702 = vmax.f32 %v2707, 0.0
    %v3703 = vmax.f32 %v3411, 0.0
    %v3704 = vmax.f32 %v3413, 0.0
    %v3705 = vmax.f32 %v2709, 0.0
    %v3706 = vmax.f32 %v2711, 0.0
    %v3707 = vmax.f32 %v3415, 0.0
    %v3708 = vmax.f32 %v3417, 0.0
    %v3709 = vmax.f32 %v2715, 0.0
    %v3710 = vmax.f32 %v2717, 0.0
    %v3711 = vmax.f32 %v3421, 0.0
    %v3712 = vmax.f32 %v3423, 0.0
    %v3713 = vmax.f32 %v2719, 0.0
    %v3714 = vmax.f32 %v2721, 0.0
    %v3715 = vmax.f32 %v3425, 0.0
    %v3716 = vmax.f32 %v3427, 0.0
    %v3717 = vmax.f32 %v2725, 0.0
    %v3718 = vmax.f32 %v2727, 0.0
    %v3719 = vmax.f32 %v3431, 0.0
    %v3720 = vmax.f32 %v3433, 0.0
    %v3721 = vmax.f32 %v2729, 0.0
    %v3722 = vmax.f32 %v2731, 0.0
    %v3723 = vmax.f32 %v3435, 0.0
    %v3724 = vmax.f32 %v3437, 0.0
    %v3725 = vmax.f32 %v2735, 0.0
    %v3726 = vmax.f32 %v2737, 0.0
    %v3727 = vmax.f32 %v3441, 0.0
    %v3728 = vmax.f32 %v3443, 0.0
    %v3729 = vmax.f32 %v2739, 0.0
    %v3730 = vmax.f32 %v2741, 0.0
    %v3731 = vmax.f32 %v3445, 0.0
    %v3732 = vmax.f32 %v3447, 0.0
    %v3733 = vmax.f32 %v2745, 0.0
    %v3734 = vmax.f32 %v2747, 0.0
    %v3735 = vmax.f32 %v3451, 0.0
    %v3736 = vmax.f32 %v3453, 0.0
    %v3737 = vmax.f32 %v2749, 0.0
    %v3738 = vmax.f32 %v2751, 0.0
    %v3739 = vmax.f32 %v3455, 0.0
    %v3740 = vmax.f32 %v3457, 0.0
    %v3741 = vmax.f32 %v2755, 0.0
    %v3742 = vmax.f32 %v2757, 0.0
    %v3743 = vmax.f32 %v3461, 0.0
    %v3744 = vmax.f32 %v3463, 0.0
    %v3745 = vmax.f32 %v2759, 0.0
    %v3746 = vmax.f32 %v2761, 0.0
    %v3747 = vmax.f32 %v3465, 0.0
    %v3748 = vmax.f32 %v3467, 0.0
    %v3749 = vmax.f32 %v2765, 0.0
    %v3750 = vmax.f32 %v2767, 0.0
    %v3751 = vmax.f32 %v3471, 0.0
    %v3752 = vmax.f32 %v3473, 0.0
    %v3753 = vmax.f32 %v2769, 0.0
    %v3754 = vmax.f32 %v2771, 0.0
    %v3755 = vmax.f32 %v3475, 0.0
    %v3756 = vmax.f32 %v3477, 0.0
    %v3757 = vmax.f32 %v2775, 0.0
    %v3758 = vmax.f32 %v2777, 0.0
    %v3759 = vmax.f32 %v3481, 0.0
    %v3760 = vmax.f32 %v3483, 0.0
    %v3761 = vmax.f32 %v2779, 0.0
    %v3762 = vmax.f32 %v2781, 0.0
    %v3763 = vmax.f32 %v3485, 0.0
    %v3764 = vmax.f32 %v3487, 0.0
    %v3765 = vmax.f32 %v2785, 0.0
    %v3766 = vmax.f32 %v2787, 0.0
    %v3767 = vmax.f32 %v3491, 0.0
    %v3768 = vmax.f32 %v3493, 0.0
    %v3769 = vmax.f32 %v2789, 0.0
    %v3770 = vmax.f32 %v2791, 0.0
    %v3771 = vmax.f32 %v3495, 0.0
    %v3772 = vmax.f32 %v3497, 0.0
    %v3773 = vmax.f32 %v2795, 0.0
    %v3774 = vmax.f32 %v2797, 0.0
    %v3775 = vmax.f32 %v3501, 0.0
    %v3776 = vmax.f32 %v3503, 0.0
    %v3777 = vmax.f32 %v2799, 0.0
    %v3778 = vmax.f32 %v2801, 0.0
    %v3779 = vmax.f32 %v3505, 0.0
    %v3780 = vmax.f32 %v3507, 0.0
    %v3781 = vmax.f32 %v2805, 0.0
    %v3782 = vmax.f32 %v2807, 0.0
    %v3783 = vmax.f32 %v3511, 0.0
    %v3784 = vmax.f32 %v3513, 0.0
    %v3785 = vmax.f32 %v2809, 0.0
    %v3786 = vmax.f32 %v2811, 0.0
    %v3787 = vmax.f32 %v3515, 0.0
    %v3788 = vmax.f32 %v3517, 0.0
    %v3789 = vmax.f32 %v2815, 0.0
    %v3790 = vmax.f32 %v2817, 0.0
    %v3791 = vmax.f32 %v3521, 0.0
    %v3792 = vmax.f32 %v3523, 0.0
    %v3793 = vmax.f32 %v2819, 0.0
    %v3794 = vmax.f32 %v2821, 0.0
    %v3795 = vmax.f32 %v3525, 0.0
    %v3796 = vmax.f32 %v3527, 0.0
    %v3797 = vmax.f32 %v2825, 0.0
    %v3798 = vmax.f32 %v2827, 0.0
    %v3799 = vmax.f32 %v3531, 0.0
    %v3800 = vmax.f32 %v3533, 0.0
    %v3801 = vmax.f32 %v2829, 0.0
    %v3802 = vmax.f32 %v2831, 0.0
    %v3803 = vmax.f32 %v3535, 0.0
    %v3804 = vmax.f32 %v3537, 0.0
    %v3805 = vmax.f32 %v2835, 0.0
    %v3806 = vmax.f32 %v2837, 0.0
    %v3807 = vmax.f32 %v3541, 0.0
    %v3808 = vmax.f32 %v3543, 0.0
    %v3809 = vmax.f32 %v2839, 0.0
    %v3810 = vmax.f32 %v2841, 0.0
    %v3811 = vmax.f32 %v3545, 0.0
    %v3812 = vmax.f32 %v3547, 0.0
    %v3813 = vmax.f32 %v2845, 0.0
    %v3814 = vmax.f32 %v2847, 0.0
    %v3815 = vmax.f32 %v3551, 0.0
    %v3816 = vmax.f32 %v3553, 0.0
    %v3817 = vmax.f32 %v2849, 0.0
    %v3818 = vmax.f32 %v2851, 0.0
    %v3819 = vmax.f32 %v3555, 0.0
    %v3820 = vmax.f32 %v3557, 0.0
    %v3821 = vmax.f32 %v2855, 0.0
    %v3822 = vmax.f32 %v2857, 0.0
    %v3823 = vmax.f32 %v3561, 0.0
    %v3824 = vmax.f32 %v3563, 0.0
    %v3825 = vmax.f32 %v2859, 0.0
    %v3826 = vmax.f32 %v2861, 0.0
    %v3827 = vmax.f32 %v3565, 0.0
    %v3828 = vmax.f32 %v3567, 0.0
    %v3829 = vmax.f32 %v2865, 0.0
    %v3830 = vmax.f32 %v2867, 0.0
    %v3831 = vmax.f32 %v3571, 0.0
    %v3832 = vmax.f32 %v3573, 0.0
    %v3833 = vmax.f32 %v2869, 0.0
    %v3834 = vmax.f32 %v2871, 0.0
    %v3835 = vmax.f32 %v3575, 0.0
    %v3836 = vmax.f32 %v3577, 0.0
    %v3837 = vmax.f32 %v2875, 0.0
    %v3838 = vmax.f32 %v2877, 0.0
    %v3839 = vmax.f32 %v3581, 0.0
    %v3840 = vmax.f32 %v3583, 0.0
    %v3841 = vmax.f32 %v2879, 0.0
    %v3842 = vmax.f32 %v2881, 0.0
    %v3843 = vmax.f32 %v3585, 0.0
    %v3844 = vmax.f32 %v3587, 0.0
    %v3845 = vpack.c.bf16 %v3593, %v3589
    %v3846 = vpack.c.bf16 %v3594, %v3590
    %v3847 = vpack.c.bf16 %v3595, %v3591
    %v3848 = vpack.c.bf16 %v3596, %v3592
    %v3849 = vpack.c.bf16 %v3601, %v3597
    %v3850 = vpack.c.bf16 %v3602, %v3598
    %v3851 = vpack.c.bf16 %v3603, %v3599
    %v3852 = vpack.c.bf16 %v3604, %v3600
    %v3853 = vpack.c.bf16 %v3609, %v3605
    %v3854 = vpack.c.bf16 %v3610, %v3606
    %v3855 = vpack.c.bf16 %v3611, %v3607
    %v3856 = vpack.c.bf16 %v3612, %v3608
    %v3857 = vpack.c.bf16 %v3617, %v3613
    %v3858 = vpack.c.bf16 %v3618, %v3614
    %v3859 = vpack.c.bf16 %v3619, %v3615
    %v3860 = vpack.c.bf16 %v3620, %v3616
    %v3861 = vpack.c.bf16 %v3625, %v3621
    %v3862 = vpack.c.bf16 %v3626, %v3622
    %v3863 = vpack.c.bf16 %v3627, %v3623
    %v3864 = vpack.c.bf16 %v3628, %v3624
    %v3865 = vpack.c.bf16 %v3633, %v3629
    %v3866 = vpack.c.bf16 %v3634, %v3630
    %v3867 = vpack.c.bf16 %v3635, %v3631
    %v3868 = vpack.c.bf16 %v3636, %v3632
    %v3869 = vpack.c.bf16 %v3641, %v3637
    %v3870 = vpack.c.bf16 %v3642, %v3638
    %v3871 = vpack.c.bf16 %v3643, %v3639
    %v3872 = vpack.c.bf16 %v3644, %v3640
    %v3873 = vpack.c.bf16 %v3649, %v3645
    %v3874 = vpack.c.bf16 %v3650, %v3646
    %v3875 = vpack.c.bf16 %v3651, %v3647
    %v3876 = vpack.c.bf16 %v3652, %v3648
    %v3877 = vpack.c.bf16 %v3657, %v3653
    %v3878 = vpack.c.bf16 %v3658, %v3654
    %v3879 = vpack.c.bf16 %v3659, %v3655
    %v3880 = vpack.c.bf16 %v3660, %v3656
    %v3881 = vpack.c.bf16 %v3665, %v3661
    %v3882 = vpack.c.bf16 %v3666, %v3662
    %v3883 = vpack.c.bf16 %v3667, %v3663
    %v3884 = vpack.c.bf16 %v3668, %v3664
    %v3885 = vpack.c.bf16 %v3673, %v3669
    %v3886 = vpack.c.bf16 %v3674, %v3670
    %v3887 = vpack.c.bf16 %v3675, %v3671
    %v3888 = vpack.c.bf16 %v3676, %v3672
    %v3889 = vpack.c.bf16 %v3681, %v3677
    %v3890 = vpack.c.bf16 %v3682, %v3678
    %v3891 = vpack.c.bf16 %v3683, %v3679
    %v3892 = vpack.c.bf16 %v3684, %v3680
    %v3893 = vpack.c.bf16 %v3689, %v3685
    %v3894 = vpack.c.bf16 %v3690, %v3686
    %v3895 = vpack.c.bf16 %v3691, %v3687
    %v3896 = vpack.c.bf16 %v3692, %v3688
    %v3897 = vpack.c.bf16 %v3697, %v3693
    %v3898 = vpack.c.bf16 %v3698, %v3694
    %v3899 = vpack.c.bf16 %v3699, %v3695
    %v3900 = vpack.c.bf16 %v3700, %v3696
    %v3901 = vpack.c.bf16 %v3705, %v3701
    %v3902 = vpack.c.bf16 %v3706, %v3702
    %v3903 = vpack.c.bf16 %v3707, %v3703
    %v3904 = vpack.c.bf16 %v3708, %v3704
    %v3905 = vpack.c.bf16 %v3713, %v3709
    %v3906 = vpack.c.bf16 %v3714, %v3710
    %v3907 = vpack.c.bf16 %v3715, %v3711
    %v3908 = vpack.c.bf16 %v3716, %v3712
    %v3909 = vpack.c.bf16 %v3721, %v3717
    %v3910 = vpack.c.bf16 %v3722, %v3718
    %v3911 = vpack.c.bf16 %v3723, %v3719
    %v3912 = vpack.c.bf16 %v3724, %v3720
    %v3913 = vpack.c.bf16 %v3729, %v3725
    %v3914 = vpack.c.bf16 %v3730, %v3726
    %v3915 = vpack.c.bf16 %v3731, %v3727
    %v3916 = vpack.c.bf16 %v3732, %v3728
    %v3917 = vpack.c.bf16 %v3737, %v3733
    %v3918 = vpack.c.bf16 %v3738, %v3734
    %v3919 = vpack.c.bf16 %v3739, %v3735
    %v3920 = vpack.c.bf16 %v3740, %v3736
    %v3921 = vpack.c.bf16 %v3745, %v3741
    %v3922 = vpack.c.bf16 %v3746, %v3742
    %v3923 = vpack.c.bf16 %v3747, %v3743
    %v3924 = vpack.c.bf16 %v3748, %v3744
    %v3925 = vpack.c.bf16 %v3753, %v3749
    %v3926 = vpack.c.bf16 %v3754, %v3750
    %v3927 = vpack.c.bf16 %v3755, %v3751
    %v3928 = vpack.c.bf16 %v3756, %v3752
    %v3929 = vpack.c.bf16 %v3761, %v3757
    %v3930 = vpack.c.bf16 %v3762, %v3758
    %v3931 = vpack.c.bf16 %v3763, %v3759
    %v3932 = vpack.c.bf16 %v3764, %v3760
    %v3933 = vpack.c.bf16 %v3769, %v3765
    %v3934 = vpack.c.bf16 %v3770, %v3766
    %v3935 = vpack.c.bf16 %v3771, %v3767
    %v3936 = vpack.c.bf16 %v3772, %v3768
    %v3937 = vpack.c.bf16 %v3777, %v3773
    %v3938 = vpack.c.bf16 %v3778, %v3774
    %v3939 = vpack.c.bf16 %v3779, %v3775
    %v3940 = vpack.c.bf16 %v3780, %v3776
    %v3941 = vpack.c.bf16 %v3785, %v3781
    %v3942 = vpack.c.bf16 %v3786, %v3782
    %v3943 = vpack.c.bf16 %v3787, %v3783
    %v3944 = vpack.c.bf16 %v3788, %v3784
    %v3945 = vpack.c.bf16 %v3793, %v3789
    %v3946 = vpack.c.bf16 %v3794, %v3790
    %v3947 = vpack.c.bf16 %v3795, %v3791
    %v3948 = vpack.c.bf16 %v3796, %v3792
    %v3949 = vpack.c.bf16 %v3801, %v3797
    %v3950 = vpack.c.bf16 %v3802, %v3798
    %v3951 = vpack.c.bf16 %v3803, %v3799
    %v3952 = vpack.c.bf16 %v3804, %v3800
    %v3953 = vpack.c.bf16 %v3809, %v3805
    %v3954 = vpack.c.bf16 %v3810, %v3806
    %v3955 = vpack.c.bf16 %v3811, %v3807
    %v3956 = vpack.c.bf16 %v3812, %v3808
    %v3957 = vpack.c.bf16 %v3817, %v3813
    %v3958 = vpack.c.bf16 %v3818, %v3814
    %v3959 = vpack.c.bf16 %v3819, %v3815
    %v3960 = vpack.c.bf16 %v3820, %v3816
    %v3961 = vpack.c.bf16 %v3825, %v3821
    %v3962 = vpack.c.bf16 %v3826, %v3822
    %v3963 = vpack.c.bf16 %v3827, %v3823
    %v3964 = vpack.c.bf16 %v3828, %v3824
    %v3965 = vpack.c.bf16 %v3833, %v3829
    %v3966 = vpack.c.bf16 %v3834, %v3830
    %v3967 = vpack.c.bf16 %v3835, %v3831
    %v3968 = vpack.c.bf16 %v3836, %v3832
    %v3969 = vpack.c.bf16 %v3841, %v3837
    %v3970 = vpack.c.bf16 %v3842, %v3838
    %v3971 = vpack.c.bf16 %v3843, %v3839
    %v3972 = vpack.c.bf16 %v3844, %v3840
    %v3973 = vld [vmem:[%s5] sm:$0xf]
    %v3974 = vld [vmem:[%s5 + $0x4] sm:$0xf]
    %v3975 = vld [vmem:[%s5 + $0x8] sm:$0xf]
    %v3976 = vld [vmem:[%s5 + $0xc] sm:$0xf]
    %v3977 = vld [vmem:[%s5 + $0x10] sm:$0xf]
    %v3978 = vld [vmem:[%s5 + $0x14] sm:$0xf]
    %v3979 = vld [vmem:[%s5 + $0x18] sm:$0xf]
    %v3980 = vld [vmem:[%s5 + $0x1c] sm:$0xf]
    %v3981 = vld [vmem:[%s5 + $0x20] sm:$0xf]
    %v3982 = vld [vmem:[%s5 + $0x24] sm:$0xf]
    %v3983 = vld [vmem:[%s5 + $0x28] sm:$0xf]
    %v3984 = vld [vmem:[%s5 + $0x2c] sm:$0xf]
    %v3985 = vld [vmem:[%s5 + $0x30] sm:$0xf]
    %v3986 = vld [vmem:[%s5 + $0x34] sm:$0xf]
    %v3987 = vld [vmem:[%s5 + $0x38] sm:$0xf]
    %v3988 = vld [vmem:[%s5 + $0x3c] sm:$0xf]
    %v3989 = vld [vmem:[%s5 + $0x40] sm:$0xf]
    %v3990 = vld [vmem:[%s5 + $0x44] sm:$0xf]
    %v3991 = vld [vmem:[%s5 + $0x48] sm:$0xf]
    %v3992 = vld [vmem:[%s5 + $0x4c] sm:$0xf]
    %v3993 = vld [vmem:[%s5 + $0x50] sm:$0xf]
    %v3994 = vld [vmem:[%s5 + $0x54] sm:$0xf]
    %v3995 = vld [vmem:[%s5 + $0x58] sm:$0xf]
    %v3996 = vld [vmem:[%s5 + $0x5c] sm:$0xf]
    %v3997 = vld [vmem:[%s5 + $0x60] sm:$0xf]
    %v3998 = vld [vmem:[%s5 + $0x64] sm:$0xf]
    %v3999 = vld [vmem:[%s5 + $0x68] sm:$0xf]
    %v4000 = vld [vmem:[%s5 + $0x6c] sm:$0xf]
    %v4001 = vld [vmem:[%s5 + $0x70] sm:$0xf]
    %v4002 = vld [vmem:[%s5 + $0x74] sm:$0xf]
    %v4003 = vld [vmem:[%s5 + $0x78] sm:$0xf]
    %v4004 = vld [vmem:[%s5 + $0x7c] sm:$0xf]
    %v4005 = vld [vmem:[%s5 + $0x80] sm:$0xf]
    %v4006 = vld [vmem:[%s5 + $0x84] sm:$0xf]
    %v4007 = vld [vmem:[%s5 + $0x88] sm:$0xf]
    %v4008 = vld [vmem:[%s5 + $0x8c] sm:$0xf]
    %v4009 = vld [vmem:[%s5 + $0x90] sm:$0xf]
    %v4010 = vld [vmem:[%s5 + $0x94] sm:$0xf]
    %v4011 = vld [vmem:[%s5 + $0x98] sm:$0xf]
    %v4012 = vld [vmem:[%s5 + $0x9c] sm:$0xf]
    %v4013 = vld [vmem:[%s5 + $0xa0] sm:$0xf]
    %v4014 = vld [vmem:[%s5 + $0xa4] sm:$0xf]
    %v4015 = vld [vmem:[%s5 + $0xa8] sm:$0xf]
    %v4016 = vld [vmem:[%s5 + $0xac] sm:$0xf]
    %v4017 = vld [vmem:[%s5 + $0xb0] sm:$0xf]
    %v4018 = vld [vmem:[%s5 + $0xb4] sm:$0xf]
    %v4019 = vld [vmem:[%s5 + $0xb8] sm:$0xf]
    %v4020 = vld [vmem:[%s5 + $0xbc] sm:$0xf]
    %v4021 = vld [vmem:[%s5 + $0xc0] sm:$0xf]
    %v4022 = vld [vmem:[%s5 + $0xc4] sm:$0xf]
    %v4023 = vld [vmem:[%s5 + $0xc8] sm:$0xf]
    %v4024 = vld [vmem:[%s5 + $0xcc] sm:$0xf]
    %v4025 = vld [vmem:[%s5 + $0xd0] sm:$0xf]
    %v4026 = vld [vmem:[%s5 + $0xd4] sm:$0xf]
    %v4027 = vld [vmem:[%s5 + $0xd8] sm:$0xf]
    %v4028 = vld [vmem:[%s5 + $0xdc] sm:$0xf]
    %v4029 = vld [vmem:[%s5 + $0xe0] sm:$0xf]
    %v4030 = vld [vmem:[%s5 + $0xe4] sm:$0xf]
    %v4031 = vld [vmem:[%s5 + $0xe8] sm:$0xf]
    %v4032 = vld [vmem:[%s5 + $0xec] sm:$0xf]
    %v4033 = vld [vmem:[%s5 + $0xf0] sm:$0xf]
    %v4034 = vld [vmem:[%s5 + $0xf4] sm:$0xf]
    %v4035 = vld [vmem:[%s5 + $0xf8] sm:$0xf]
    %v4036 = vld [vmem:[%s5 + $0xfc] sm:$0xf]
    %v4037 = vld [vmem:[%s6] sm:$0x1]
    %v4039 = vlaneseq
    %v4040 = vshrl.u32 %v4039, 7
    %v4041 = vsub.s32 0, %v4040
    %v4042 = vrot.slane %v4037, %v4041
    %v4108 = vunpack.c.l.b16 %v3973
    %v4109 = vunpack.c.l.b16 %v3974
    %v4110 = vunpack.c.l.b16 %v3975
    %v4111 = vunpack.c.l.b16 %v3976
    %v4112 = vunpack.c.l.b16 %v3977
    %v4113 = vunpack.c.l.b16 %v3978
    %v4114 = vunpack.c.l.b16 %v3979
    %v4115 = vunpack.c.l.b16 %v3980
    %v4116 = vunpack.c.l.b16 %v3981
    %v4117 = vunpack.c.l.b16 %v3982
    %v4118 = vunpack.c.l.b16 %v3983
    %v4119 = vunpack.c.l.b16 %v3984
    %v4120 = vunpack.c.l.b16 %v3985
    %v4121 = vunpack.c.l.b16 %v3986
    %v4122 = vunpack.c.l.b16 %v3987
    %v4123 = vunpack.c.l.b16 %v3988
    %v4124 = vunpack.c.l.b16 %v3989
    %v4125 = vunpack.c.l.b16 %v3990
    %v4126 = vunpack.c.l.b16 %v3991
    %v4127 = vunpack.c.l.b16 %v3992
    %v4128 = vunpack.c.l.b16 %v3993
    %v4129 = vunpack.c.l.b16 %v3994
    %v4130 = vunpack.c.l.b16 %v3995
    %v4131 = vunpack.c.l.b16 %v3996
    %v4132 = vunpack.c.l.b16 %v3997
    %v4133 = vunpack.c.l.b16 %v3998
    %v4134 = vunpack.c.l.b16 %v3999
    %v4135 = vunpack.c.l.b16 %v4000
    %v4136 = vunpack.c.l.b16 %v4001
    %v4137 = vunpack.c.l.b16 %v4002
    %v4138 = vunpack.c.l.b16 %v4003
    %v4139 = vunpack.c.l.b16 %v4004
    %v4140 = vunpack.c.l.b16 %v4005
    %v4141 = vunpack.c.l.b16 %v4006
    %v4142 = vunpack.c.l.b16 %v4007
    %v4143 = vunpack.c.l.b16 %v4008
    %v4144 = vunpack.c.l.b16 %v4009
    %v4145 = vunpack.c.l.b16 %v4010
    %v4146 = vunpack.c.l.b16 %v4011
    %v4147 = vunpack.c.l.b16 %v4012
    %v4148 = vunpack.c.l.b16 %v4013
    %v4149 = vunpack.c.l.b16 %v4014
    %v4150 = vunpack.c.l.b16 %v4015
    %v4151 = vunpack.c.l.b16 %v4016
    %v4152 = vunpack.c.l.b16 %v4017
    %v4153 = vunpack.c.l.b16 %v4018
    %v4154 = vunpack.c.l.b16 %v4019
    %v4155 = vunpack.c.l.b16 %v4020
    %v4156 = vunpack.c.l.b16 %v4021
    %v4157 = vunpack.c.l.b16 %v4022
    %v4158 = vunpack.c.l.b16 %v4023
    %v4159 = vunpack.c.l.b16 %v4024
    %v4160 = vunpack.c.l.b16 %v4025
    %v4161 = vunpack.c.l.b16 %v4026
    %v4162 = vunpack.c.l.b16 %v4027
    %v4163 = vunpack.c.l.b16 %v4028
    %v4164 = vunpack.c.l.b16 %v4029
    %v4165 = vunpack.c.l.b16 %v4030
    %v4166 = vunpack.c.l.b16 %v4031
    %v4167 = vunpack.c.l.b16 %v4032
    %v4168 = vunpack.c.l.b16 %v4033
    %v4169 = vunpack.c.l.b16 %v4034
    %v4170 = vunpack.c.l.b16 %v4035
    %v4171 = vunpack.c.l.b16 %v4036
    %v4172 = vpack.c.b16 %v4109, %v4108
    %v4173 = vpack.c.b16 %v4111, %v4110
    %v4174 = vpack.c.b16 %v4113, %v4112
    %v4175 = vpack.c.b16 %v4115, %v4114
    %v4176 = vpack.c.b16 %v4117, %v4116
    %v4177 = vpack.c.b16 %v4119, %v4118
    %v4178 = vpack.c.b16 %v4121, %v4120
    %v4179 = vpack.c.b16 %v4123, %v4122
    %v4180 = vpack.c.b16 %v4125, %v4124
    %v4181 = vpack.c.b16 %v4127, %v4126
    %v4182 = vpack.c.b16 %v4129, %v4128
    %v4183 = vpack.c.b16 %v4131, %v4130
    %v4184 = vpack.c.b16 %v4133, %v4132
    %v4185 = vpack.c.b16 %v4135, %v4134
    %v4186 = vpack.c.b16 %v4137, %v4136
    %v4187 = vpack.c.b16 %v4139, %v4138
    %v4188 = vpack.c.b16 %v4141, %v4140
    %v4189 = vpack.c.b16 %v4143, %v4142
    %v4190 = vpack.c.b16 %v4145, %v4144
    %v4191 = vpack.c.b16 %v4147, %v4146
    %v4192 = vpack.c.b16 %v4149, %v4148
    %v4193 = vpack.c.b16 %v4151, %v4150
    %v4194 = vpack.c.b16 %v4153, %v4152
    %v4195 = vpack.c.b16 %v4155, %v4154
    %v4196 = vpack.c.b16 %v4157, %v4156
    %v4197 = vpack.c.b16 %v4159, %v4158
    %v4198 = vpack.c.b16 %v4161, %v4160
    %v4199 = vpack.c.b16 %v4163, %v4162
    %v4200 = vpack.c.b16 %v4165, %v4164
    %v4201 = vpack.c.b16 %v4167, %v4166
    %v4202 = vpack.c.b16 %v4169, %v4168
    %v4203 = vpack.c.b16 %v4171, %v4170
    %4236 = vmatprep.subr.bf16.mxu0 0
    %4237 = vmatpush1.bf16.msra.mxu0 %v4172
    %4238 = vmatprep.subr.bf16.mxu0 0
    %4239 = vmatpush1.bf16.msra.mxu0 %v4173
    %4240 = vmatprep.subr.bf16.mxu0 0
    %4241 = vmatpush1.bf16.msra.mxu0 %v4174
    %4242 = vmatprep.subr.bf16.mxu0 0
    %4243 = vmatpush1.bf16.msra.mxu0 %v4175
    %4244 = vmatprep.subr.bf16.mxu0 0
    %4245 = vmatpush1.bf16.msra.mxu0 %v4176
    %4246 = vmatprep.subr.bf16.mxu0 0
    %4247 = vmatpush1.bf16.msra.mxu0 %v4177
    %4248 = vmatprep.subr.bf16.mxu0 0
    %4249 = vmatpush1.bf16.msra.mxu0 %v4178
    %4250 = vmatprep.subr.bf16.mxu0 0
    %4251 = vmatpush1.bf16.msra.mxu0 %v4179
    %4252 = vmatprep.subr.bf16.mxu0 0
    %4253 = vmatpush1.bf16.msra.mxu0 %v4180
    %4254 = vmatprep.subr.bf16.mxu0 0
    %4255 = vmatpush1.bf16.msra.mxu0 %v4181
    %4256 = vmatprep.subr.bf16.mxu0 0
    %4257 = vmatpush1.bf16.msra.mxu0 %v4182
    %4258 = vmatprep.subr.bf16.mxu0 0
    %4259 = vmatpush1.bf16.msra.mxu0 %v4183
    %4260 = vmatprep.subr.bf16.mxu0 0
    %4261 = vmatpush1.bf16.msra.mxu0 %v4184
    %4262 = vmatprep.subr.bf16.mxu0 0
    %4263 = vmatpush1.bf16.msra.mxu0 %v4185
    %4264 = vmatprep.subr.bf16.mxu0 0
    %4265 = vmatpush1.bf16.msra.mxu0 %v4186
    %4266 = vmatprep.subr.bf16.mxu0 0
    %4267 = vmatpush1.bf16.msra.mxu0 %v4187
    %4268 = vmatprep.mubr.bf16.mxu0 %v3846
    %4269 = vmatmul.mubr.bf16.gmra.mrb[0].mxu0 %v3845
    %v4270 = vpop.f32.mrb[0].mxu0
    %v4271 = vadd.f32 %v4042, %v4270
    %v4272 = vpop.f32.mrb[0].mxu0
    %v4273 = vpop.f32.mrb[0].mxu0
    %v4274 = vadd.f32 %v4042, %v4273
    %v4275 = vpop.f32.mrb[0].mxu0
    %4276 = vmatprep.mubr.bf16.mxu0 %v3850
    %4277 = vmatmul.mubr.bf16.gmra.mrb[0].mxu0 %v3849
    %v4278 = vpop.f32.mrb[0].mxu0
    %v4279 = vadd.f32 %v4042, %v4278
    %v4280 = vpop.f32.mrb[0].mxu0
    %v4281 = vpop.f32.mrb[0].mxu0
    %v4282 = vadd.f32 %v4042, %v4281
    %v4283 = vpop.f32.mrb[0].mxu0
    %4284 = vmatprep.mubr.bf16.mxu0 %v3854
    %4285 = vmatmul.mubr.bf16.gmra.mrb[0].mxu0 %v3853
    %v4286 = vpop.f32.mrb[0].mxu0
    %v4287 = vadd.f32 %v4042, %v4286
    %v4288 = vpop.f32.mrb[0].mxu0
    %v4289 = vpop.f32.mrb[0].mxu0
    %v4290 = vadd.f32 %v4042, %v4289
    %v4291 = vpop.f32.mrb[0].mxu0
    %4292 = vmatprep.mubr.bf16.mxu0 %v3858
    %4293 = vmatmul.mubr.bf16.gmra.mrb[0].mxu0 %v3857
    %v4294 = vpop.f32.mrb[0].mxu0
    %v4295 = vadd.f32 %v4042, %v4294
    %v4296 = vpop.f32.mrb[0].mxu0
    %v4297 = vpop.f32.mrb[0].mxu0
    %v4298 = vadd.f32 %v4042, %v4297
    %v4299 = vpop.f32.mrb[0].mxu0
    %4300 = vmatprep.mubr.bf16.mxu0 %v3862
    %4301 = vmatmul.mubr.bf16.gmra.mrb[0].mxu0 %v3861
    %v4302 = vpop.f32.mrb[0].mxu0
    %v4303 = vadd.f32 %v4042, %v4302
    %v4304 = vpop.f32.mrb[0].mxu0
    %v4305 = vpop.f32.mrb[0].mxu0
    %v4306 = vadd.f32 %v4042, %v4305
    %v4307 = vpop.f32.mrb[0].mxu0
    %4308 = vmatprep.mubr.bf16.mxu0 %v3866
    %4309 = vmatmul.mubr.bf16.gmra.mrb[0].mxu0 %v3865
    %v4310 = vpop.f32.mrb[0].mxu0
    %v4311 = vadd.f32 %v4042, %v4310
    %v4312 = vpop.f32.mrb[0].mxu0
    %v4313 = vpop.f32.mrb[0].mxu0
    %v4314 = vadd.f32 %v4042, %v4313
    %v4315 = vpop.f32.mrb[0].mxu0
    %4316 = vmatprep.mubr.bf16.mxu0 %v3870
    %4317 = vmatmul.mubr.bf16.gmra.mrb[0].mxu0 %v3869
    %v4318 = vpop.f32.mrb[0].mxu0
    %v4319 = vadd.f32 %v4042, %v4318
    %v4320 = vpop.f32.mrb[0].mxu0
    %v4321 = vpop.f32.mrb[0].mxu0
    %v4322 = vadd.f32 %v4042, %v4321
    %v4323 = vpop.f32.mrb[0].mxu0
    %4324 = vmatprep.mubr.bf16.mxu0 %v3874
    %4325 = vmatmul.mubr.bf16.gmra.mrb[0].mxu0 %v3873
    %v4326 = vpop.f32.mrb[0].mxu0
    %v4327 = vadd.f32 %v4042, %v4326
    %v4328 = vpop.f32.mrb[0].mxu0
    %v4329 = vpop.f32.mrb[0].mxu0
    %v4330 = vadd.f32 %v4042, %v4329
    %v4331 = vpop.f32.mrb[0].mxu0
    %4332 = vmatprep.mubr.bf16.mxu0 %v3878
    %4333 = vmatmul.mubr.bf16.gmra.mrb[0].mxu0 %v3877
    %v4334 = vpop.f32.mrb[0].mxu0
    %v4335 = vadd.f32 %v4042, %v4334
    %v4336 = vpop.f32.mrb[0].mxu0
    %v4337 = vpop.f32.mrb[0].mxu0
    %v4338 = vadd.f32 %v4042, %v4337
    %v4339 = vpop.f32.mrb[0].mxu0
    %4340 = vmatprep.mubr.bf16.mxu0 %v3882
    %4341 = vmatmul.mubr.bf16.gmra.mrb[0].mxu0 %v3881
    %v4342 = vpop.f32.mrb[0].mxu0
    %v4343 = vadd.f32 %v4042, %v4342
    %v4344 = vpop.f32.mrb[0].mxu0
    %v4345 = vpop.f32.mrb[0].mxu0
    %v4346 = vadd.f32 %v4042, %v4345
    %v4347 = vpop.f32.mrb[0].mxu0
    %4348 = vmatprep.mubr.bf16.mxu0 %v3886
    %4349 = vmatmul.mubr.bf16.gmra.mrb[0].mxu0 %v3885
    %v4350 = vpop.f32.mrb[0].mxu0
    %v4351 = vadd.f32 %v4042, %v4350
    %v4352 = vpop.f32.mrb[0].mxu0
    %v4353 = vpop.f32.mrb[0].mxu0
    %v4354 = vadd.f32 %v4042, %v4353
    %v4355 = vpop.f32.mrb[0].mxu0
    %4356 = vmatprep.mubr.bf16.mxu0 %v3890
    %4357 = vmatmul.mubr.bf16.gmra.mrb[0].mxu0 %v3889
    %v4358 = vpop.f32.mrb[0].mxu0
    %v4359 = vadd.f32 %v4042, %v4358
    %v4360 = vpop.f32.mrb[0].mxu0
    %v4361 = vpop.f32.mrb[0].mxu0
    %v4362 = vadd.f32 %v4042, %v4361
    %v4363 = vpop.f32.mrb[0].mxu0
    %4364 = vmatprep.mubr.bf16.mxu0 %v3894
    %4365 = vmatmul.mubr.bf16.gmra.mrb[0].mxu0 %v3893
    %v4366 = vpop.f32.mrb[0].mxu0
    %v4367 = vadd.f32 %v4042, %v4366
    %v4368 = vpop.f32.mrb[0].mxu0
    %v4369 = vpop.f32.mrb[0].mxu0
    %v4370 = vadd.f32 %v4042, %v4369
    %v4371 = vpop.f32.mrb[0].mxu0
    %4372 = vmatprep.mubr.bf16.mxu0 %v3898
    %4373 = vmatmul.mubr.bf16.gmra.mrb[0].mxu0 %v3897
    %v4374 = vpop.f32.mrb[0].mxu0
    %v4375 = vadd.f32 %v4042, %v4374
    %v4376 = vpop.f32.mrb[0].mxu0
    %v4377 = vpop.f32.mrb[0].mxu0
    %v4378 = vadd.f32 %v4042, %v4377
    %v4379 = vpop.f32.mrb[0].mxu0
    %4380 = vmatprep.mubr.bf16.mxu0 %v3902
    %4381 = vmatmul.mubr.bf16.gmra.mrb[0].mxu0 %v3901
    %v4382 = vpop.f32.mrb[0].mxu0
    %v4383 = vadd.f32 %v4042, %v4382
    %v4384 = vpop.f32.mrb[0].mxu0
    %v4385 = vpop.f32.mrb[0].mxu0
    %v4386 = vadd.f32 %v4042, %v4385
    %v4387 = vpop.f32.mrb[0].mxu0
    %4388 = vmatprep.mubr.bf16.mxu0 %v3906
    %4389 = vmatmul.mubr.bf16.gmra.mrb[0].mxu0 %v3905
    %v4390 = vpop.f32.mrb[0].mxu0
    %v4391 = vadd.f32 %v4042, %v4390
    %v4392 = vpop.f32.mrb[0].mxu0
    %v4393 = vpop.f32.mrb[0].mxu0
    %v4394 = vadd.f32 %v4042, %v4393
    %v4395 = vpop.f32.mrb[0].mxu0
    %4396 = vmatprep.mubr.bf16.mxu0 %v3910
    %4397 = vmatmul.mubr.bf16.gmra.mrb[0].mxu0 %v3909
    %v4398 = vpop.f32.mrb[0].mxu0
    %v4399 = vadd.f32 %v4042, %v4398
    %v4400 = vpop.f32.mrb[0].mxu0
    %v4401 = vpop.f32.mrb[0].mxu0
    %v4402 = vadd.f32 %v4042, %v4401
    %v4403 = vpop.f32.mrb[0].mxu0
    %4404 = vmatprep.mubr.bf16.mxu0 %v3914
    %4405 = vmatmul.mubr.bf16.gmra.mrb[0].mxu0 %v3913
    %v4406 = vpop.f32.mrb[0].mxu0
    %v4407 = vadd.f32 %v4042, %v4406
    %v4408 = vpop.f32.mrb[0].mxu0
    %v4409 = vpop.f32.mrb[0].mxu0
    %v4410 = vadd.f32 %v4042, %v4409
    %v4411 = vpop.f32.mrb[0].mxu0
    %4412 = vmatprep.mubr.bf16.mxu0 %v3918
    %4413 = vmatmul.mubr.bf16.gmra.mrb[0].mxu0 %v3917
    %v4414 = vpop.f32.mrb[0].mxu0
    %v4415 = vadd.f32 %v4042, %v4414
    %v4416 = vpop.f32.mrb[0].mxu0
    %v4417 = vpop.f32.mrb[0].mxu0
    %v4418 = vadd.f32 %v4042, %v4417
    %v4419 = vpop.f32.mrb[0].mxu0
    %4420 = vmatprep.mubr.bf16.mxu0 %v3922
    %4421 = vmatmul.mubr.bf16.gmra.mrb[0].mxu0 %v3921
    %v4422 = vpop.f32.mrb[0].mxu0
    %v4423 = vadd.f32 %v4042, %v4422
    %v4424 = vpop.f32.mrb[0].mxu0
    %v4425 = vpop.f32.mrb[0].mxu0
    %v4426 = vadd.f32 %v4042, %v4425
    %v4427 = vpop.f32.mrb[0].mxu0
    %4428 = vmatprep.mubr.bf16.mxu0 %v3926
    %4429 = vmatmul.mubr.bf16.gmra.mrb[0].mxu0 %v3925
    %v4430 = vpop.f32.mrb[0].mxu0
    %v4431 = vadd.f32 %v4042, %v4430
    %v4432 = vpop.f32.mrb[0].mxu0
    %v4433 = vpop.f32.mrb[0].mxu0
    %v4434 = vadd.f32 %v4042, %v4433
    %v4435 = vpop.f32.mrb[0].mxu0
    %4436 = vmatprep.mubr.bf16.mxu0 %v3930
    %4437 = vmatmul.mubr.bf16.gmra.mrb[0].mxu0 %v3929
    %v4438 = vpop.f32.mrb[0].mxu0
    %v4439 = vadd.f32 %v4042, %v4438
    %v4440 = vpop.f32.mrb[0].mxu0
    %v4441 = vpop.f32.mrb[0].mxu0
    %v4442 = vadd.f32 %v4042, %v4441
    %v4443 = vpop.f32.mrb[0].mxu0
    %4444 = vmatprep.mubr.bf16.mxu0 %v3934
    %4445 = vmatmul.mubr.bf16.gmra.mrb[0].mxu0 %v3933
    %v4446 = vpop.f32.mrb[0].mxu0
    %v4447 = vadd.f32 %v4042, %v4446
    %v4448 = vpop.f32.mrb[0].mxu0
    %v4449 = vpop.f32.mrb[0].mxu0
    %v4450 = vadd.f32 %v4042, %v4449
    %v4451 = vpop.f32.mrb[0].mxu0
    %4452 = vmatprep.mubr.bf16.mxu0 %v3938
    %4453 = vmatmul.mubr.bf16.gmra.mrb[0].mxu0 %v3937
    %v4454 = vpop.f32.mrb[0].mxu0
    %v4455 = vadd.f32 %v4042, %v4454
    %v4456 = vpop.f32.mrb[0].mxu0
    %v4457 = vpop.f32.mrb[0].mxu0
    %v4458 = vadd.f32 %v4042, %v4457
    %v4459 = vpop.f32.mrb[0].mxu0
    %4460 = vmatprep.mubr.bf16.mxu0 %v3942
    %4461 = vmatmul.mubr.bf16.gmra.mrb[0].mxu0 %v3941
    %v4462 = vpop.f32.mrb[0].mxu0
    %v4463 = vadd.f32 %v4042, %v4462
    %v4464 = vpop.f32.mrb[0].mxu0
    %v4465 = vpop.f32.mrb[0].mxu0
    %v4466 = vadd.f32 %v4042, %v4465
    %v4467 = vpop.f32.mrb[0].mxu0
    %4468 = vmatprep.mubr.bf16.mxu0 %v3946
    %4469 = vmatmul.mubr.bf16.gmra.mrb[0].mxu0 %v3945
    %v4470 = vpop.f32.mrb[0].mxu0
    %v4471 = vadd.f32 %v4042, %v4470
    %v4472 = vpop.f32.mrb[0].mxu0
    %v4473 = vpop.f32.mrb[0].mxu0
    %v4474 = vadd.f32 %v4042, %v4473
    %v4475 = vpop.f32.mrb[0].mxu0
    %4476 = vmatprep.mubr.bf16.mxu0 %v3950
    %4477 = vmatmul.mubr.bf16.gmra.mrb[0].mxu0 %v3949
    %v4478 = vpop.f32.mrb[0].mxu0
    %v4479 = vadd.f32 %v4042, %v4478
    %v4480 = vpop.f32.mrb[0].mxu0
    %v4481 = vpop.f32.mrb[0].mxu0
    %v4482 = vadd.f32 %v4042, %v4481
    %v4483 = vpop.f32.mrb[0].mxu0
    %4484 = vmatprep.mubr.bf16.mxu0 %v3954
    %4485 = vmatmul.mubr.bf16.gmra.mrb[0].mxu0 %v3953
    %v4486 = vpop.f32.mrb[0].mxu0
    %v4487 = vadd.f32 %v4042, %v4486
    %v4488 = vpop.f32.mrb[0].mxu0
    %v4489 = vpop.f32.mrb[0].mxu0
    %v4490 = vadd.f32 %v4042, %v4489
    %v4491 = vpop.f32.mrb[0].mxu0
    %4492 = vmatprep.mubr.bf16.mxu0 %v3958
    %4493 = vmatmul.mubr.bf16.gmra.mrb[0].mxu0 %v3957
    %v4494 = vpop.f32.mrb[0].mxu0
    %v4495 = vadd.f32 %v4042, %v4494
    %v4496 = vpop.f32.mrb[0].mxu0
    %v4497 = vpop.f32.mrb[0].mxu0
    %v4498 = vadd.f32 %v4042, %v4497
    %v4499 = vpop.f32.mrb[0].mxu0
    %4500 = vmatprep.mubr.bf16.mxu0 %v3962
    %4501 = vmatmul.mubr.bf16.gmra.mrb[0].mxu0 %v3961
    %v4502 = vpop.f32.mrb[0].mxu0
    %v4503 = vadd.f32 %v4042, %v4502
    %v4504 = vpop.f32.mrb[0].mxu0
    %v4505 = vpop.f32.mrb[0].mxu0
    %v4506 = vadd.f32 %v4042, %v4505
    %v4507 = vpop.f32.mrb[0].mxu0
    %4508 = vmatprep.mubr.bf16.mxu0 %v3966
    %4509 = vmatmul.mubr.bf16.gmra.mrb[0].mxu0 %v3965
    %v4510 = vpop.f32.mrb[0].mxu0
    %v4511 = vadd.f32 %v4042, %v4510
    %v4512 = vpop.f32.mrb[0].mxu0
    %v4513 = vpop.f32.mrb[0].mxu0
    %v4514 = vadd.f32 %v4042, %v4513
    %v4515 = vpop.f32.mrb[0].mxu0
    %4516 = vmatprep.mubr.bf16.mxu0 %v3970
    %4517 = vmatmul.mubr.bf16.gmra.mrb[0].mxu0 %v3969
    %v4518 = vpop.f32.mrb[0].mxu0
    %v4519 = vadd.f32 %v4042, %v4518
    %v4520 = vpop.f32.mrb[0].mxu0
    %v4521 = vpop.f32.mrb[0].mxu0
    %v4522 = vadd.f32 %v4042, %v4521
    %v4523 = vpop.f32.mrb[0].mxu0
    %4524 = vdwg.mxu0
    %4525 = vmatprep.subr.bf16.mxu0 0
    %4526 = vmatpush1.bf16.msra.mxu0 %v4188
    %4527 = vmatprep.subr.bf16.mxu0 0
    %4528 = vmatpush1.bf16.msra.mxu0 %v4189
    %4529 = vmatprep.subr.bf16.mxu0 0
    %4530 = vmatpush1.bf16.msra.mxu0 %v4190
    %4531 = vmatprep.subr.bf16.mxu0 0
    %4532 = vmatpush1.bf16.msra.mxu0 %v4191
    %4533 = vmatprep.subr.bf16.mxu0 0
    %4534 = vmatpush1.bf16.msra.mxu0 %v4192
    %4535 = vmatprep.subr.bf16.mxu0 0
    %4536 = vmatpush1.bf16.msra.mxu0 %v4193
    %4537 = vmatprep.subr.bf16.mxu0 0
    %4538 = vmatpush1.bf16.msra.mxu0 %v4194
    %4539 = vmatprep.subr.bf16.mxu0 0
    %4540 = vmatpush1.bf16.msra.mxu0 %v4195
    %4541 = vmatprep.subr.bf16.mxu0 0
    %4542 = vmatpush1.bf16.msra.mxu0 %v4196
    %4543 = vmatprep.subr.bf16.mxu0 0
    %4544 = vmatpush1.bf16.msra.mxu0 %v4197
    %4545 = vmatprep.subr.bf16.mxu0 0
    %4546 = vmatpush1.bf16.msra.mxu0 %v4198
    %4547 = vmatprep.subr.bf16.mxu0 0
    %4548 = vmatpush1.bf16.msra.mxu0 %v4199
    %4549 = vmatprep.subr.bf16.mxu0 0
    %4550 = vmatpush1.bf16.msra.mxu0 %v4200
    %4551 = vmatprep.subr.bf16.mxu0 0
    %4552 = vmatpush1.bf16.msra.mxu0 %v4201
    %4553 = vmatprep.subr.bf16.mxu0 0
    %4554 = vmatpush1.bf16.msra.mxu0 %v4202
    %4555 = vmatprep.subr.bf16.mxu0 0
    %4556 = vmatpush1.bf16.msra.mxu0 %v4203
    %4557 = vmatprep.mubr.bf16.mxu0 %v3848
    %4558 = vmatmul.mubr.bf16.gmra.mrb[0].mxu0 %v3847
    %v4559 = vpop.f32.mrb[0].mxu0
    %v4560 = vadd.f32 %v4271, %v4559
    %v4561 = vpop.f32.mrb[0].mxu0
    %v4562 = vpop.f32.mrb[0].mxu0
    %v4563 = vadd.f32 %v4274, %v4562
    %v4564 = vpop.f32.mrb[0].mxu0
    %4565 = vmatprep.mubr.bf16.mxu0 %v3852
    %4566 = vmatmul.mubr.bf16.gmra.mrb[0].mxu0 %v3851
    %v4567 = vpop.f32.mrb[0].mxu0
    %v4568 = vadd.f32 %v4279, %v4567
    %v4569 = vpop.f32.mrb[0].mxu0
    %v4570 = vpop.f32.mrb[0].mxu0
    %v4571 = vadd.f32 %v4282, %v4570
    %v4572 = vpop.f32.mrb[0].mxu0
    %4573 = vmatprep.mubr.bf16.mxu0 %v3856
    %4574 = vmatmul.mubr.bf16.gmra.mrb[0].mxu0 %v3855
    %v4575 = vpop.f32.mrb[0].mxu0
    %v4576 = vadd.f32 %v4287, %v4575
    %v4577 = vpop.f32.mrb[0].mxu0
    %v4578 = vpop.f32.mrb[0].mxu0
    %v4579 = vadd.f32 %v4290, %v4578
    %v4580 = vpop.f32.mrb[0].mxu0
    %4581 = vmatprep.mubr.bf16.mxu0 %v3860
    %4582 = vmatmul.mubr.bf16.gmra.mrb[0].mxu0 %v3859
    %v4583 = vpop.f32.mrb[0].mxu0
    %v4584 = vadd.f32 %v4295, %v4583
    %v4585 = vpop.f32.mrb[0].mxu0
    %v4586 = vpop.f32.mrb[0].mxu0
    %v4587 = vadd.f32 %v4298, %v4586
    %v4588 = vpop.f32.mrb[0].mxu0
    %4589 = vmatprep.mubr.bf16.mxu0 %v3864
    %4590 = vmatmul.mubr.bf16.gmra.mrb[0].mxu0 %v3863
    %v4591 = vpop.f32.mrb[0].mxu0
    %v4592 = vadd.f32 %v4303, %v4591
    %v4593 = vpop.f32.mrb[0].mxu0
    %v4594 = vpop.f32.mrb[0].mxu0
    %v4595 = vadd.f32 %v4306, %v4594
    %v4596 = vpop.f32.mrb[0].mxu0
    %4597 = vmatprep.mubr.bf16.mxu0 %v3868
    %4598 = vmatmul.mubr.bf16.gmra.mrb[0].mxu0 %v3867
    %v4599 = vpop.f32.mrb[0].mxu0
    %v4600 = vadd.f32 %v4311, %v4599
    %v4601 = vpop.f32.mrb[0].mxu0
    %v4602 = vpop.f32.mrb[0].mxu0
    %v4603 = vadd.f32 %v4314, %v4602
    %v4604 = vpop.f32.mrb[0].mxu0
    %4605 = vmatprep.mubr.bf16.mxu0 %v3872
    %4606 = vmatmul.mubr.bf16.gmra.mrb[0].mxu0 %v3871
    %v4607 = vpop.f32.mrb[0].mxu0
    %v4608 = vadd.f32 %v4319, %v4607
    %v4609 = vpop.f32.mrb[0].mxu0
    %v4610 = vpop.f32.mrb[0].mxu0
    %v4611 = vadd.f32 %v4322, %v4610
    %v4612 = vpop.f32.mrb[0].mxu0
    %4613 = vmatprep.mubr.bf16.mxu0 %v3876
    %4614 = vmatmul.mubr.bf16.gmra.mrb[0].mxu0 %v3875
    %v4615 = vpop.f32.mrb[0].mxu0
    %v4616 = vadd.f32 %v4327, %v4615
    %v4617 = vpop.f32.mrb[0].mxu0
    %v4618 = vpop.f32.mrb[0].mxu0
    %v4619 = vadd.f32 %v4330, %v4618
    %v4620 = vpop.f32.mrb[0].mxu0
    %4621 = vmatprep.mubr.bf16.mxu0 %v3880
    %4622 = vmatmul.mubr.bf16.gmra.mrb[0].mxu0 %v3879
    %v4623 = vpop.f32.mrb[0].mxu0
    %v4624 = vadd.f32 %v4335, %v4623
    %v4625 = vpop.f32.mrb[0].mxu0
    %v4626 = vpop.f32.mrb[0].mxu0
    %v4627 = vadd.f32 %v4338, %v4626
    %v4628 = vpop.f32.mrb[0].mxu0
    %4629 = vmatprep.mubr.bf16.mxu0 %v3884
    %4630 = vmatmul.mubr.bf16.gmra.mrb[0].mxu0 %v3883
    %v4631 = vpop.f32.mrb[0].mxu0
    %v4632 = vadd.f32 %v4343, %v4631
    %v4633 = vpop.f32.mrb[0].mxu0
    %v4634 = vpop.f32.mrb[0].mxu0
    %v4635 = vadd.f32 %v4346, %v4634
    %v4636 = vpop.f32.mrb[0].mxu0
    %4637 = vmatprep.mubr.bf16.mxu0 %v3888
    %4638 = vmatmul.mubr.bf16.gmra.mrb[0].mxu0 %v3887
    %v4639 = vpop.f32.mrb[0].mxu0
    %v4640 = vadd.f32 %v4351, %v4639
    %v4641 = vpop.f32.mrb[0].mxu0
    %v4642 = vpop.f32.mrb[0].mxu0
    %v4643 = vadd.f32 %v4354, %v4642
    %v4644 = vpop.f32.mrb[0].mxu0
    %4645 = vmatprep.mubr.bf16.mxu0 %v3892
    %4646 = vmatmul.mubr.bf16.gmra.mrb[0].mxu0 %v3891
    %v4647 = vpop.f32.mrb[0].mxu0
    %v4648 = vadd.f32 %v4359, %v4647
    %v4649 = vpop.f32.mrb[0].mxu0
    %v4650 = vpop.f32.mrb[0].mxu0
    %v4651 = vadd.f32 %v4362, %v4650
    %v4652 = vpop.f32.mrb[0].mxu0
    %4653 = vmatprep.mubr.bf16.mxu0 %v3896
    %4654 = vmatmul.mubr.bf16.gmra.mrb[0].mxu0 %v3895
    %v4655 = vpop.f32.mrb[0].mxu0
    %v4656 = vadd.f32 %v4367, %v4655
    %v4657 = vpop.f32.mrb[0].mxu0
    %v4658 = vpop.f32.mrb[0].mxu0
    %v4659 = vadd.f32 %v4370, %v4658
    %v4660 = vpop.f32.mrb[0].mxu0
    %4661 = vmatprep.mubr.bf16.mxu0 %v3900
    %4662 = vmatmul.mubr.bf16.gmra.mrb[0].mxu0 %v3899
    %v4663 = vpop.f32.mrb[0].mxu0
    %v4664 = vadd.f32 %v4375, %v4663
    %v4665 = vpop.f32.mrb[0].mxu0
    %v4666 = vpop.f32.mrb[0].mxu0
    %v4667 = vadd.f32 %v4378, %v4666
    %v4668 = vpop.f32.mrb[0].mxu0
    %4669 = vmatprep.mubr.bf16.mxu0 %v3904
    %4670 = vmatmul.mubr.bf16.gmra.mrb[0].mxu0 %v3903
    %v4671 = vpop.f32.mrb[0].mxu0
    %v4672 = vadd.f32 %v4383, %v4671
    %v4673 = vpop.f32.mrb[0].mxu0
    %v4674 = vpop.f32.mrb[0].mxu0
    %v4675 = vadd.f32 %v4386, %v4674
    %v4676 = vpop.f32.mrb[0].mxu0
    %4677 = vmatprep.mubr.bf16.mxu0 %v3908
    %4678 = vmatmul.mubr.bf16.gmra.mrb[0].mxu0 %v3907
    %v4679 = vpop.f32.mrb[0].mxu0
    %v4680 = vadd.f32 %v4391, %v4679
    %v4681 = vpop.f32.mrb[0].mxu0
    %v4682 = vpop.f32.mrb[0].mxu0
    %v4683 = vadd.f32 %v4394, %v4682
    %v4684 = vpop.f32.mrb[0].mxu0
    %4685 = vmatprep.mubr.bf16.mxu0 %v3912
    %4686 = vmatmul.mubr.bf16.gmra.mrb[0].mxu0 %v3911
    %v4687 = vpop.f32.mrb[0].mxu0
    %v4688 = vadd.f32 %v4399, %v4687
    %v4689 = vpop.f32.mrb[0].mxu0
    %v4690 = vpop.f32.mrb[0].mxu0
    %v4691 = vadd.f32 %v4402, %v4690
    %v4692 = vpop.f32.mrb[0].mxu0
    %4693 = vmatprep.mubr.bf16.mxu0 %v3916
    %4694 = vmatmul.mubr.bf16.gmra.mrb[0].mxu0 %v3915
    %v4695 = vpop.f32.mrb[0].mxu0
    %v4696 = vadd.f32 %v4407, %v4695
    %v4697 = vpop.f32.mrb[0].mxu0
    %v4698 = vpop.f32.mrb[0].mxu0
    %v4699 = vadd.f32 %v4410, %v4698
    %v4700 = vpop.f32.mrb[0].mxu0
    %4701 = vmatprep.mubr.bf16.mxu0 %v3920
    %4702 = vmatmul.mubr.bf16.gmra.mrb[0].mxu0 %v3919
    %v4703 = vpop.f32.mrb[0].mxu0
    %v4704 = vadd.f32 %v4415, %v4703
    %v4705 = vpop.f32.mrb[0].mxu0
    %v4706 = vpop.f32.mrb[0].mxu0
    %v4707 = vadd.f32 %v4418, %v4706
    %v4708 = vpop.f32.mrb[0].mxu0
    %4709 = vmatprep.mubr.bf16.mxu0 %v3924
    %4710 = vmatmul.mubr.bf16.gmra.mrb[0].mxu0 %v3923
    %v4711 = vpop.f32.mrb[0].mxu0
    %v4712 = vadd.f32 %v4423, %v4711
    %v4713 = vpop.f32.mrb[0].mxu0
    %v4714 = vpop.f32.mrb[0].mxu0
    %v4715 = vadd.f32 %v4426, %v4714
    %v4716 = vpop.f32.mrb[0].mxu0
    %4717 = vmatprep.mubr.bf16.mxu0 %v3928
    %4718 = vmatmul.mubr.bf16.gmra.mrb[0].mxu0 %v3927
    %v4719 = vpop.f32.mrb[0].mxu0
    %v4720 = vadd.f32 %v4431, %v4719
    %v4721 = vpop.f32.mrb[0].mxu0
    %v4722 = vpop.f32.mrb[0].mxu0
    %v4723 = vadd.f32 %v4434, %v4722
    %v4724 = vpop.f32.mrb[0].mxu0
    %4725 = vmatprep.mubr.bf16.mxu0 %v3932
    %4726 = vmatmul.mubr.bf16.gmra.mrb[0].mxu0 %v3931
    %v4727 = vpop.f32.mrb[0].mxu0
    %v4728 = vadd.f32 %v4439, %v4727
    %v4729 = vpop.f32.mrb[0].mxu0
    %v4730 = vpop.f32.mrb[0].mxu0
    %v4731 = vadd.f32 %v4442, %v4730
    %v4732 = vpop.f32.mrb[0].mxu0
    %4733 = vmatprep.mubr.bf16.mxu0 %v3936
    %4734 = vmatmul.mubr.bf16.gmra.mrb[0].mxu0 %v3935
    %v4735 = vpop.f32.mrb[0].mxu0
    %v4736 = vadd.f32 %v4447, %v4735
    %v4737 = vpop.f32.mrb[0].mxu0
    %v4738 = vpop.f32.mrb[0].mxu0
    %v4739 = vadd.f32 %v4450, %v4738
    %v4740 = vpop.f32.mrb[0].mxu0
    %4741 = vmatprep.mubr.bf16.mxu0 %v3940
    %4742 = vmatmul.mubr.bf16.gmra.mrb[0].mxu0 %v3939
    %v4743 = vpop.f32.mrb[0].mxu0
    %v4744 = vadd.f32 %v4455, %v4743
    %v4745 = vpop.f32.mrb[0].mxu0
    %v4746 = vpop.f32.mrb[0].mxu0
    %v4747 = vadd.f32 %v4458, %v4746
    %v4748 = vpop.f32.mrb[0].mxu0
    %4749 = vmatprep.mubr.bf16.mxu0 %v3944
    %4750 = vmatmul.mubr.bf16.gmra.mrb[0].mxu0 %v3943
    %v4751 = vpop.f32.mrb[0].mxu0
    %v4752 = vadd.f32 %v4463, %v4751
    %v4753 = vpop.f32.mrb[0].mxu0
    %v4754 = vpop.f32.mrb[0].mxu0
    %v4755 = vadd.f32 %v4466, %v4754
    %v4756 = vpop.f32.mrb[0].mxu0
    %4757 = vmatprep.mubr.bf16.mxu0 %v3948
    %4758 = vmatmul.mubr.bf16.gmra.mrb[0].mxu0 %v3947
    %v4759 = vpop.f32.mrb[0].mxu0
    %v4760 = vadd.f32 %v4471, %v4759
    %v4761 = vpop.f32.mrb[0].mxu0
    %v4762 = vpop.f32.mrb[0].mxu0
    %v4763 = vadd.f32 %v4474, %v4762
    %v4764 = vpop.f32.mrb[0].mxu0
    %4765 = vmatprep.mubr.bf16.mxu0 %v3952
    %4766 = vmatmul.mubr.bf16.gmra.mrb[0].mxu0 %v3951
    %v4767 = vpop.f32.mrb[0].mxu0
    %v4768 = vadd.f32 %v4479, %v4767
    %v4769 = vpop.f32.mrb[0].mxu0
    %v4770 = vpop.f32.mrb[0].mxu0
    %v4771 = vadd.f32 %v4482, %v4770
    %v4772 = vpop.f32.mrb[0].mxu0
    %4773 = vmatprep.mubr.bf16.mxu0 %v3956
    %4774 = vmatmul.mubr.bf16.gmra.mrb[0].mxu0 %v3955
    %v4775 = vpop.f32.mrb[0].mxu0
    %v4776 = vadd.f32 %v4487, %v4775
    %v4777 = vpop.f32.mrb[0].mxu0
    %v4778 = vpop.f32.mrb[0].mxu0
    %v4779 = vadd.f32 %v4490, %v4778
    %v4780 = vpop.f32.mrb[0].mxu0
    %4781 = vmatprep.mubr.bf16.mxu0 %v3960
    %4782 = vmatmul.mubr.bf16.gmra.mrb[0].mxu0 %v3959
    %v4783 = vpop.f32.mrb[0].mxu0
    %v4784 = vadd.f32 %v4495, %v4783
    %v4785 = vpop.f32.mrb[0].mxu0
    %v4786 = vpop.f32.mrb[0].mxu0
    %v4787 = vadd.f32 %v4498, %v4786
    %v4788 = vpop.f32.mrb[0].mxu0
    %4789 = vmatprep.mubr.bf16.mxu0 %v3964
    %4790 = vmatmul.mubr.bf16.gmra.mrb[0].mxu0 %v3963
    %v4791 = vpop.f32.mrb[0].mxu0
    %v4792 = vadd.f32 %v4503, %v4791
    %v4793 = vpop.f32.mrb[0].mxu0
    %v4794 = vpop.f32.mrb[0].mxu0
    %v4795 = vadd.f32 %v4506, %v4794
    %v4796 = vpop.f32.mrb[0].mxu0
    %4797 = vmatprep.mubr.bf16.mxu0 %v3968
    %4798 = vmatmul.mubr.bf16.gmra.mrb[0].mxu0 %v3967
    %v4799 = vpop.f32.mrb[0].mxu0
    %v4800 = vadd.f32 %v4511, %v4799
    %v4801 = vpop.f32.mrb[0].mxu0
    %v4802 = vpop.f32.mrb[0].mxu0
    %v4803 = vadd.f32 %v4514, %v4802
    %v4804 = vpop.f32.mrb[0].mxu0
    %4805 = vmatprep.mubr.bf16.mxu0 %v3972
    %4806 = vmatmul.mubr.bf16.gmra.mrb[0].mxu0 %v3971
    %v4807 = vpop.f32.mrb[0].mxu0
    %v4808 = vadd.f32 %v4519, %v4807
    %v4809 = vpop.f32.mrb[0].mxu0
    %v4810 = vpop.f32.mrb[0].mxu0
    %v4811 = vadd.f32 %v4522, %v4810
    %v4812 = vpop.f32.mrb[0].mxu0
    %4813 = vdwg.mxu0
    %v4814 = vmax.f32 %v4560, 0.0
    %v4815 = vmax.f32 %v4563, 0.0
    %v4816 = vmax.f32 %v4568, 0.0
    %v4817 = vmax.f32 %v4571, 0.0
    %v4818 = vmax.f32 %v4576, 0.0
    %v4819 = vmax.f32 %v4579, 0.0
    %v4820 = vmax.f32 %v4584, 0.0
    %v4821 = vmax.f32 %v4587, 0.0
    %v4822 = vmax.f32 %v4592, 0.0
    %v4823 = vmax.f32 %v4595, 0.0
    %v4824 = vmax.f32 %v4600, 0.0
    %v4825 = vmax.f32 %v4603, 0.0
    %v4826 = vmax.f32 %v4608, 0.0
    %v4827 = vmax.f32 %v4611, 0.0
    %v4828 = vmax.f32 %v4616, 0.0
    %v4829 = vmax.f32 %v4619, 0.0
    %v4830 = vmax.f32 %v4624, 0.0
    %v4831 = vmax.f32 %v4627, 0.0
    %v4832 = vmax.f32 %v4632, 0.0
    %v4833 = vmax.f32 %v4635, 0.0
    %v4834 = vmax.f32 %v4640, 0.0
    %v4835 = vmax.f32 %v4643, 0.0
    %v4836 = vmax.f32 %v4648, 0.0
    %v4837 = vmax.f32 %v4651, 0.0
    %v4838 = vmax.f32 %v4656, 0.0
    %v4839 = vmax.f32 %v4659, 0.0
    %v4840 = vmax.f32 %v4664, 0.0
    %v4841 = vmax.f32 %v4667, 0.0
    %v4842 = vmax.f32 %v4672, 0.0
    %v4843 = vmax.f32 %v4675, 0.0
    %v4844 = vmax.f32 %v4680, 0.0
    %v4845 = vmax.f32 %v4683, 0.0
    %v4846 = vmax.f32 %v4688, 0.0
    %v4847 = vmax.f32 %v4691, 0.0
    %v4848 = vmax.f32 %v4696, 0.0
    %v4849 = vmax.f32 %v4699, 0.0
    %v4850 = vmax.f32 %v4704, 0.0
    %v4851 = vmax.f32 %v4707, 0.0
    %v4852 = vmax.f32 %v4712, 0.0
    %v4853 = vmax.f32 %v4715, 0.0
    %v4854 = vmax.f32 %v4720, 0.0
    %v4855 = vmax.f32 %v4723, 0.0
    %v4856 = vmax.f32 %v4728, 0.0
    %v4857 = vmax.f32 %v4731, 0.0
    %v4858 = vmax.f32 %v4736, 0.0
    %v4859 = vmax.f32 %v4739, 0.0
    %v4860 = vmax.f32 %v4744, 0.0
    %v4861 = vmax.f32 %v4747, 0.0
    %v4862 = vmax.f32 %v4752, 0.0
    %v4863 = vmax.f32 %v4755, 0.0
    %v4864 = vmax.f32 %v4760, 0.0
    %v4865 = vmax.f32 %v4763, 0.0
    %v4866 = vmax.f32 %v4768, 0.0
    %v4867 = vmax.f32 %v4771, 0.0
    %v4868 = vmax.f32 %v4776, 0.0
    %v4869 = vmax.f32 %v4779, 0.0
    %v4870 = vmax.f32 %v4784, 0.0
    %v4871 = vmax.f32 %v4787, 0.0
    %v4872 = vmax.f32 %v4792, 0.0
    %v4873 = vmax.f32 %v4795, 0.0
    %v4874 = vmax.f32 %v4800, 0.0
    %v4875 = vmax.f32 %v4803, 0.0
    %v4876 = vmax.f32 %v4808, 0.0
    %v4877 = vmax.f32 %v4811, 0.0
    %v4878 = vld [vmem:[%s7] sm:$0x1]
    %v4879 = vunpack.c.l.bf16 %v4878
    %v4880 = vlaneseq
    %v4881 = vshrl.u32 %v4880, 7
    %v4882 = vsub.s32 0, %v4881
    %v4883 = vrot.slane %v4879, %v4882
    %v4884 = vmul.f32 %v4814, %v4883
    %v4885 = vmul.f32 %v4815, %v4883
    %v4886 = vmul.f32 %v4816, %v4883
    %v4887 = vmul.f32 %v4817, %v4883
    %v4888 = vmul.f32 %v4818, %v4883
    %v4889 = vmul.f32 %v4819, %v4883
    %v4890 = vmul.f32 %v4820, %v4883
    %v4891 = vmul.f32 %v4821, %v4883
    %v4892 = vmul.f32 %v4822, %v4883
    %v4893 = vmul.f32 %v4823, %v4883
    %v4894 = vmul.f32 %v4824, %v4883
    %v4895 = vmul.f32 %v4825, %v4883
    %v4896 = vmul.f32 %v4826, %v4883
    %v4897 = vmul.f32 %v4827, %v4883
    %v4898 = vmul.f32 %v4828, %v4883
    %v4899 = vmul.f32 %v4829, %v4883
    %v4900 = vmul.f32 %v4830, %v4883
    %v4901 = vmul.f32 %v4831, %v4883
    %v4902 = vmul.f32 %v4832, %v4883
    %v4903 = vmul.f32 %v4833, %v4883
    %v4904 = vmul.f32 %v4834, %v4883
    %v4905 = vmul.f32 %v4835, %v4883
    %v4906 = vmul.f32 %v4836, %v4883
    %v4907 = vmul.f32 %v4837, %v4883
    %v4908 = vmul.f32 %v4838, %v4883
    %v4909 = vmul.f32 %v4839, %v4883
    %v4910 = vmul.f32 %v4840, %v4883
    %v4911 = vmul.f32 %v4841, %v4883
    %v4912 = vmul.f32 %v4842, %v4883
    %v4913 = vmul.f32 %v4843, %v4883
    %v4914 = vmul.f32 %v4844, %v4883
    %v4915 = vmul.f32 %v4845, %v4883
    %v4916 = vmul.f32 %v4846, %v4883
    %v4917 = vmul.f32 %v4847, %v4883
    %v4918 = vmul.f32 %v4848, %v4883
    %v4919 = vmul.f32 %v4849, %v4883
    %v4920 = vmul.f32 %v4850, %v4883
    %v4921 = vmul.f32 %v4851, %v4883
    %v4922 = vmul.f32 %v4852, %v4883
    %v4923 = vmul.f32 %v4853, %v4883
    %v4924 = vmul.f32 %v4854, %v4883
    %v4925 = vmul.f32 %v4855, %v4883
    %v4926 = vmul.f32 %v4856, %v4883
    %v4927 = vmul.f32 %v4857, %v4883
    %v4928 = vmul.f32 %v4858, %v4883
    %v4929 = vmul.f32 %v4859, %v4883
    %v4930 = vmul.f32 %v4860, %v4883
    %v4931 = vmul.f32 %v4861, %v4883
    %v4932 = vmul.f32 %v4862, %v4883
    %v4933 = vmul.f32 %v4863, %v4883
    %v4934 = vmul.f32 %v4864, %v4883
    %v4935 = vmul.f32 %v4865, %v4883
    %v4936 = vmul.f32 %v4866, %v4883
    %v4937 = vmul.f32 %v4867, %v4883
    %v4938 = vmul.f32 %v4868, %v4883
    %v4939 = vmul.f32 %v4869, %v4883
    %v4940 = vmul.f32 %v4870, %v4883
    %v4941 = vmul.f32 %v4871, %v4883
    %v4942 = vmul.f32 %v4872, %v4883
    %v4943 = vmul.f32 %v4873, %v4883
    %v4944 = vmul.f32 %v4874, %v4883
    %v4945 = vmul.f32 %v4875, %v4883
    %v4946 = vmul.f32 %v4876, %v4883
    %v4947 = vmul.f32 %v4877, %v4883
    %4948 = vadd.xlane.f32.xlu0 %v4884
    %v4949 = vpop.xlane.xlu0 %4948
    %4950 = vadd.xlane.f32.xlu0 %v4885
    %v4951 = vpop.xlane.xlu0 %4950
    %4952 = vadd.xlane.f32.xlu0 %v4886
    %v4953 = vpop.xlane.xlu0 %4952
    %4954 = vadd.xlane.f32.xlu0 %v4887
    %v4955 = vpop.xlane.xlu0 %4954
    %4956 = vadd.xlane.f32.xlu0 %v4888
    %v4957 = vpop.xlane.xlu0 %4956
    %4958 = vadd.xlane.f32.xlu0 %v4889
    %v4959 = vpop.xlane.xlu0 %4958
    %4960 = vadd.xlane.f32.xlu0 %v4890
    %v4961 = vpop.xlane.xlu0 %4960
    %4962 = vadd.xlane.f32.xlu0 %v4891
    %v4963 = vpop.xlane.xlu0 %4962
    %4964 = vadd.xlane.f32.xlu0 %v4892
    %v4965 = vpop.xlane.xlu0 %4964
    %4966 = vadd.xlane.f32.xlu0 %v4893
    %v4967 = vpop.xlane.xlu0 %4966
    %4968 = vadd.xlane.f32.xlu0 %v4894
    %v4969 = vpop.xlane.xlu0 %4968
    %4970 = vadd.xlane.f32.xlu0 %v4895
    %v4971 = vpop.xlane.xlu0 %4970
    %4972 = vadd.xlane.f32.xlu0 %v4896
    %v4973 = vpop.xlane.xlu0 %4972
    %4974 = vadd.xlane.f32.xlu0 %v4897
    %v4975 = vpop.xlane.xlu0 %4974
    %4976 = vadd.xlane.f32.xlu0 %v4898
    %v4977 = vpop.xlane.xlu0 %4976
    %4978 = vadd.xlane.f32.xlu0 %v4899
    %v4979 = vpop.xlane.xlu0 %4978
    %4980 = vadd.xlane.f32.xlu0 %v4900
    %v4981 = vpop.xlane.xlu0 %4980
    %4982 = vadd.xlane.f32.xlu0 %v4901
    %v4983 = vpop.xlane.xlu0 %4982
    %4984 = vadd.xlane.f32.xlu0 %v4902
    %v4985 = vpop.xlane.xlu0 %4984
    %4986 = vadd.xlane.f32.xlu0 %v4903
    %v4987 = vpop.xlane.xlu0 %4986
    %4988 = vadd.xlane.f32.xlu0 %v4904
    %v4989 = vpop.xlane.xlu0 %4988
    %4990 = vadd.xlane.f32.xlu0 %v4905
    %v4991 = vpop.xlane.xlu0 %4990
    %4992 = vadd.xlane.f32.xlu0 %v4906
    %v4993 = vpop.xlane.xlu0 %4992
    %4994 = vadd.xlane.f32.xlu0 %v4907
    %v4995 = vpop.xlane.xlu0 %4994
    %4996 = vadd.xlane.f32.xlu0 %v4908
    %v4997 = vpop.xlane.xlu0 %4996
    %4998 = vadd.xlane.f32.xlu0 %v4909
    %v4999 = vpop.xlane.xlu0 %4998
    %5000 = vadd.xlane.f32.xlu0 %v4910
    %v5001 = vpop.xlane.xlu0 %5000
    %5002 = vadd.xlane.f32.xlu0 %v4911
    %v5003 = vpop.xlane.xlu0 %5002
    %5004 = vadd.xlane.f32.xlu0 %v4912
    %v5005 = vpop.xlane.xlu0 %5004
    %5006 = vadd.xlane.f32.xlu0 %v4913
    %v5007 = vpop.xlane.xlu0 %5006
    %5008 = vadd.xlane.f32.xlu0 %v4914
    %v5009 = vpop.xlane.xlu0 %5008
    %5010 = vadd.xlane.f32.xlu0 %v4915
    %v5011 = vpop.xlane.xlu0 %5010
    %5012 = vadd.xlane.f32.xlu0 %v4916
    %v5013 = vpop.xlane.xlu0 %5012
    %5014 = vadd.xlane.f32.xlu0 %v4917
    %v5015 = vpop.xlane.xlu0 %5014
    %5016 = vadd.xlane.f32.xlu0 %v4918
    %v5017 = vpop.xlane.xlu0 %5016
    %5018 = vadd.xlane.f32.xlu0 %v4919
    %v5019 = vpop.xlane.xlu0 %5018
    %5020 = vadd.xlane.f32.xlu0 %v4920
    %v5021 = vpop.xlane.xlu0 %5020
    %5022 = vadd.xlane.f32.xlu0 %v4921
    %v5023 = vpop.xlane.xlu0 %5022
    %5024 = vadd.xlane.f32.xlu0 %v4922
    %v5025 = vpop.xlane.xlu0 %5024
    %5026 = vadd.xlane.f32.xlu0 %v4923
    %v5027 = vpop.xlane.xlu0 %5026
    %5028 = vadd.xlane.f32.xlu0 %v4924
    %v5029 = vpop.xlane.xlu0 %5028
    %5030 = vadd.xlane.f32.xlu0 %v4925
    %v5031 = vpop.xlane.xlu0 %5030
    %5032 = vadd.xlane.f32.xlu0 %v4926
    %v5033 = vpop.xlane.xlu0 %5032
    %5034 = vadd.xlane.f32.xlu0 %v4927
    %v5035 = vpop.xlane.xlu0 %5034
    %5036 = vadd.xlane.f32.xlu0 %v4928
    %v5037 = vpop.xlane.xlu0 %5036
    %5038 = vadd.xlane.f32.xlu0 %v4929
    %v5039 = vpop.xlane.xlu0 %5038
    %5040 = vadd.xlane.f32.xlu0 %v4930
    %v5041 = vpop.xlane.xlu0 %5040
    %5042 = vadd.xlane.f32.xlu0 %v4931
    %v5043 = vpop.xlane.xlu0 %5042
    %5044 = vadd.xlane.f32.xlu0 %v4932
    %v5045 = vpop.xlane.xlu0 %5044
    %5046 = vadd.xlane.f32.xlu0 %v4933
    %v5047 = vpop.xlane.xlu0 %5046
    %5048 = vadd.xlane.f32.xlu0 %v4934
    %v5049 = vpop.xlane.xlu0 %5048
    %5050 = vadd.xlane.f32.xlu0 %v4935
    %v5051 = vpop.xlane.xlu0 %5050
    %5052 = vadd.xlane.f32.xlu0 %v4936
    %v5053 = vpop.xlane.xlu0 %5052
    %5054 = vadd.xlane.f32.xlu0 %v4937
    %v5055 = vpop.xlane.xlu0 %5054
    %5056 = vadd.xlane.f32.xlu0 %v4938
    %v5057 = vpop.xlane.xlu0 %5056
    %5058 = vadd.xlane.f32.xlu0 %v4939
    %v5059 = vpop.xlane.xlu0 %5058
    %5060 = vadd.xlane.f32.xlu0 %v4940
    %v5061 = vpop.xlane.xlu0 %5060
    %5062 = vadd.xlane.f32.xlu0 %v4941
    %v5063 = vpop.xlane.xlu0 %5062
    %5064 = vadd.xlane.f32.xlu0 %v4942
    %v5065 = vpop.xlane.xlu0 %5064
    %5066 = vadd.xlane.f32.xlu0 %v4943
    %v5067 = vpop.xlane.xlu0 %5066
    %5068 = vadd.xlane.f32.xlu0 %v4944
    %v5069 = vpop.xlane.xlu0 %5068
    %5070 = vadd.xlane.f32.xlu0 %v4945
    %v5071 = vpop.xlane.xlu0 %5070
    %5072 = vadd.xlane.f32.xlu0 %v4946
    %v5073 = vpop.xlane.xlu0 %5072
    %5074 = vadd.xlane.f32.xlu0 %v4947
    %v5075 = vpop.xlane.xlu0 %5074
    %v5076 = vld [vmem:[#allocation2] sm:$0x1]
    %v5078 = vlaneseq
    %v5079 = vshrl.u32 %v5078, 7
    %v5080 = vsub.s32 0, %v5079
    %v5081 = vrot.slane %v5076, %v5080
    %v5083 = vadd.f32 %v4949, %v5081
    %v5084 = vadd.f32 %v4951, %v5081
    %v5085 = vadd.f32 %v4953, %v5081
    %v5086 = vadd.f32 %v4955, %v5081
    %v5087 = vadd.f32 %v4957, %v5081
    %v5088 = vadd.f32 %v4959, %v5081
    %v5089 = vadd.f32 %v4961, %v5081
    %v5090 = vadd.f32 %v4963, %v5081
    %v5091 = vadd.f32 %v4965, %v5081
    %v5092 = vadd.f32 %v4967, %v5081
    %v5093 = vadd.f32 %v4969, %v5081
    %v5094 = vadd.f32 %v4971, %v5081
    %v5095 = vadd.f32 %v4973, %v5081
    %v5096 = vadd.f32 %v4975, %v5081
    %v5097 = vadd.f32 %v4977, %v5081
    %v5098 = vadd.f32 %v4979, %v5081
    %v5099 = vadd.f32 %v4981, %v5081
    %v5100 = vadd.f32 %v4983, %v5081
    %v5101 = vadd.f32 %v4985, %v5081
    %v5102 = vadd.f32 %v4987, %v5081
    %v5103 = vadd.f32 %v4989, %v5081
    %v5104 = vadd.f32 %v4991, %v5081
    %v5105 = vadd.f32 %v4993, %v5081
    %v5106 = vadd.f32 %v4995, %v5081
    %v5107 = vadd.f32 %v4997, %v5081
    %v5108 = vadd.f32 %v4999, %v5081
    %v5109 = vadd.f32 %v5001, %v5081
    %v5110 = vadd.f32 %v5003, %v5081
    %v5111 = vadd.f32 %v5005, %v5081
    %v5112 = vadd.f32 %v5007, %v5081
    %v5113 = vadd.f32 %v5009, %v5081
    %v5114 = vadd.f32 %v5011, %v5081
    %v5115 = vadd.f32 %v5013, %v5081
    %v5116 = vadd.f32 %v5015, %v5081
    %v5117 = vadd.f32 %v5017, %v5081
    %v5118 = vadd.f32 %v5019, %v5081
    %v5119 = vadd.f32 %v5021, %v5081
    %v5120 = vadd.f32 %v5023, %v5081
    %v5121 = vadd.f32 %v5025, %v5081
    %v5122 = vadd.f32 %v5027, %v5081
    %v5123 = vadd.f32 %v5029, %v5081
    %v5124 = vadd.f32 %v5031, %v5081
    %v5125 = vadd.f32 %v5033, %v5081
    %v5126 = vadd.f32 %v5035, %v5081
    %v5127 = vadd.f32 %v5037, %v5081
    %v5128 = vadd.f32 %v5039, %v5081
    %v5129 = vadd.f32 %v5041, %v5081
    %v5130 = vadd.f32 %v5043, %v5081
    %v5131 = vadd.f32 %v5045, %v5081
    %v5132 = vadd.f32 %v5047, %v5081
    %v5133 = vadd.f32 %v5049, %v5081
    %v5134 = vadd.f32 %v5051, %v5081
    %v5135 = vadd.f32 %v5053, %v5081
    %v5136 = vadd.f32 %v5055, %v5081
    %v5137 = vadd.f32 %v5057, %v5081
    %v5138 = vadd.f32 %v5059, %v5081
    %v5139 = vadd.f32 %v5061, %v5081
    %v5140 = vadd.f32 %v5063, %v5081
    %v5141 = vadd.f32 %v5065, %v5081
    %v5142 = vadd.f32 %v5067, %v5081
    %v5143 = vadd.f32 %v5069, %v5081
    %v5144 = vadd.f32 %v5071, %v5081
    %v5145 = vadd.f32 %v5073, %v5081
    %v5146 = vadd.f32 %v5075, %v5081
    %v5147 = vtanh.pop %v5083
    %v5148 = vtanh.pop %v5084
    %v5149 = vtanh.pop %v5085
    %v5150 = vtanh.pop %v5086
    %v5151 = vtanh.pop %v5087
    %v5152 = vtanh.pop %v5088
    %v5153 = vtanh.pop %v5089
    %v5154 = vtanh.pop %v5090
    %v5155 = vtanh.pop %v5091
    %v5156 = vtanh.pop %v5092
    %v5157 = vtanh.pop %v5093
    %v5158 = vtanh.pop %v5094
    %v5159 = vtanh.pop %v5095
    %v5160 = vtanh.pop %v5096
    %v5161 = vtanh.pop %v5097
    %v5162 = vtanh.pop %v5098
    %v5163 = vtanh.pop %v5099
    %v5164 = vtanh.pop %v5100
    %v5165 = vtanh.pop %v5101
    %v5166 = vtanh.pop %v5102
    %v5167 = vtanh.pop %v5103
    %v5168 = vtanh.pop %v5104
    %v5169 = vtanh.pop %v5105
    %v5170 = vtanh.pop %v5106
    %v5171 = vtanh.pop %v5107
    %v5172 = vtanh.pop %v5108
    %v5173 = vtanh.pop %v5109
    %v5174 = vtanh.pop %v5110
    %v5175 = vtanh.pop %v5111
    %v5176 = vtanh.pop %v5112
    %v5177 = vtanh.pop %v5113
    %v5178 = vtanh.pop %v5114
    %v5179 = vtanh.pop %v5115
    %v5180 = vtanh.pop %v5116
    %v5181 = vtanh.pop %v5117
    %v5182 = vtanh.pop %v5118
    %v5183 = vtanh.pop %v5119
    %v5184 = vtanh.pop %v5120
    %v5185 = vtanh.pop %v5121
    %v5186 = vtanh.pop %v5122
    %v5187 = vtanh.pop %v5123
    %v5188 = vtanh.pop %v5124
    %v5189 = vtanh.pop %v5125
    %v5190 = vtanh.pop %v5126
    %v5191 = vtanh.pop %v5127
    %v5192 = vtanh.pop %v5128
    %v5193 = vtanh.pop %v5129
    %v5194 = vtanh.pop %v5130
    %v5195 = vtanh.pop %v5131
    %v5196 = vtanh.pop %v5132
    %v5197 = vtanh.pop %v5133
    %v5198 = vtanh.pop %v5134
    %v5199 = vtanh.pop %v5135
    %v5200 = vtanh.pop %v5136
    %v5201 = vtanh.pop %v5137
    %v5202 = vtanh.pop %v5138
    %v5203 = vtanh.pop %v5139
    %v5204 = vtanh.pop %v5140
    %v5205 = vtanh.pop %v5141
    %v5206 = vtanh.pop %v5142
    %v5207 = vtanh.pop %v5143
    %v5208 = vtanh.pop %v5144
    %v5209 = vtanh.pop %v5145
    %v5210 = vtanh.pop %v5146
    %vm5211 = vcmask 7168
    %5212 = vst.msk [vmem:[%s9] sm:$0xff] %vm5211, %v5147
    %5213 = vst.msk [vmem:[%s9 + $0x8] sm:$0xff] %vm5211, %v5148
    %5214 = vst.msk [vmem:[%s9 + $0x10] sm:$0xff] %vm5211, %v5149
    %5215 = vst.msk [vmem:[%s9 + $0x18] sm:$0xff] %vm5211, %v5150
    %5216 = vst.msk [vmem:[%s9 + $0x20] sm:$0xff] %vm5211, %v5151
    %5217 = vst.msk [vmem:[%s9 + $0x28] sm:$0xff] %vm5211, %v5152
    %5218 = vst.msk [vmem:[%s9 + $0x30] sm:$0xff] %vm5211, %v5153
    %5219 = vst.msk [vmem:[%s9 + $0x38] sm:$0xff] %vm5211, %v5154
    %5220 = vst.msk [vmem:[%s9 + $0x40] sm:$0xff] %vm5211, %v5155
    %5221 = vst.msk [vmem:[%s9 + $0x48] sm:$0xff] %vm5211, %v5156
    %5222 = vst.msk [vmem:[%s9 + $0x50] sm:$0xff] %vm5211, %v5157
    %5223 = vst.msk [vmem:[%s9 + $0x58] sm:$0xff] %vm5211, %v5158
    %5224 = vst.msk [vmem:[%s9 + $0x60] sm:$0xff] %vm5211, %v5159
    %5225 = vst.msk [vmem:[%s9 + $0x68] sm:$0xff] %vm5211, %v5160
    %5226 = vst.msk [vmem:[%s9 + $0x70] sm:$0xff] %vm5211, %v5161
    %5227 = vst.msk [vmem:[%s9 + $0x78] sm:$0xff] %vm5211, %v5162
    %5228 = vst.msk [vmem:[%s9 + $0x80] sm:$0xff] %vm5211, %v5163
    %5229 = vst.msk [vmem:[%s9 + $0x88] sm:$0xff] %vm5211, %v5164
    %5230 = vst.msk [vmem:[%s9 + $0x90] sm:$0xff] %vm5211, %v5165
    %5231 = vst.msk [vmem:[%s9 + $0x98] sm:$0xff] %vm5211, %v5166
    %5232 = vst.msk [vmem:[%s9 + $0xa0] sm:$0xff] %vm5211, %v5167
    %5233 = vst.msk [vmem:[%s9 + $0xa8] sm:$0xff] %vm5211, %v5168
    %5234 = vst.msk [vmem:[%s9 + $0xb0] sm:$0xff] %vm5211, %v5169
    %5235 = vst.msk [vmem:[%s9 + $0xb8] sm:$0xff] %vm5211, %v5170
    %5236 = vst.msk [vmem:[%s9 + $0xc0] sm:$0xff] %vm5211, %v5171
    %5237 = vst.msk [vmem:[%s9 + $0xc8] sm:$0xff] %vm5211, %v5172
    %5238 = vst.msk [vmem:[%s9 + $0xd0] sm:$0xff] %vm5211, %v5173
    %5239 = vst.msk [vmem:[%s9 + $0xd8] sm:$0xff] %vm5211, %v5174
    %5240 = vst.msk [vmem:[%s9 + $0xe0] sm:$0xff] %vm5211, %v5175
    %5241 = vst.msk [vmem:[%s9 + $0xe8] sm:$0xff] %vm5211, %v5176
    %5242 = vst.msk [vmem:[%s9 + $0xf0] sm:$0xff] %vm5211, %v5177
    %5243 = vst.msk [vmem:[%s9 + $0xf8] sm:$0xff] %vm5211, %v5178
    %5244 = vst.msk [vmem:[%s9 + $0x100] sm:$0xff] %vm5211, %v5179
    %5245 = vst.msk [vmem:[%s9 + $0x108] sm:$0xff] %vm5211, %v5180
    %5246 = vst.msk [vmem:[%s9 + $0x110] sm:$0xff] %vm5211, %v5181
    %5247 = vst.msk [vmem:[%s9 + $0x118] sm:$0xff] %vm5211, %v5182
    %5248 = vst.msk [vmem:[%s9 + $0x120] sm:$0xff] %vm5211, %v5183
    %5249 = vst.msk [vmem:[%s9 + $0x128] sm:$0xff] %vm5211, %v5184
    %5250 = vst.msk [vmem:[%s9 + $0x130] sm:$0xff] %vm5211, %v5185
    %5251 = vst.msk [vmem:[%s9 + $0x138] sm:$0xff] %vm5211, %v5186
    %5252 = vst.msk [vmem:[%s9 + $0x140] sm:$0xff] %vm5211, %v5187
    %5253 = vst.msk [vmem:[%s9 + $0x148] sm:$0xff] %vm5211, %v5188
    %5254 = vst.msk [vmem:[%s9 + $0x150] sm:$0xff] %vm5211, %v5189
    %5255 = vst.msk [vmem:[%s9 + $0x158] sm:$0xff] %vm5211, %v5190
    %5256 = vst.msk [vmem:[%s9 + $0x160] sm:$0xff] %vm5211, %v5191
    %5257 = vst.msk [vmem:[%s9 + $0x168] sm:$0xff] %vm5211, %v5192
    %5258 = vst.msk [vmem:[%s9 + $0x170] sm:$0xff] %vm5211, %v5193
    %5259 = vst.msk [vmem:[%s9 + $0x178] sm:$0xff] %vm5211, %v5194
    %5260 = vst.msk [vmem:[%s9 + $0x180] sm:$0xff] %vm5211, %v5195
    %5261 = vst.msk [vmem:[%s9 + $0x188] sm:$0xff] %vm5211, %v5196
    %5262 = vst.msk [vmem:[%s9 + $0x190] sm:$0xff] %vm5211, %v5197
    %5263 = vst.msk [vmem:[%s9 + $0x198] sm:$0xff] %vm5211, %v5198
    %5264 = vst.msk [vmem:[%s9 + $0x1a0] sm:$0xff] %vm5211, %v5199
    %5265 = vst.msk [vmem:[%s9 + $0x1a8] sm:$0xff] %vm5211, %v5200
    %5266 = vst.msk [vmem:[%s9 + $0x1b0] sm:$0xff] %vm5211, %v5201
    %5267 = vst.msk [vmem:[%s9 + $0x1b8] sm:$0xff] %vm5211, %v5202
    %5268 = vst.msk [vmem:[%s9 + $0x1c0] sm:$0xff] %vm5211, %v5203
    %5269 = vst.msk [vmem:[%s9 + $0x1c8] sm:$0xff] %vm5211, %v5204
    %5270 = vst.msk [vmem:[%s9 + $0x1d0] sm:$0xff] %vm5211, %v5205
    %5271 = vst.msk [vmem:[%s9 + $0x1d8] sm:$0xff] %vm5211, %v5206
    %5272 = vst.msk [vmem:[%s9 + $0x1e0] sm:$0xff] %vm5211, %v5207
    %5273 = vst.msk [vmem:[%s9 + $0x1e8] sm:$0xff] %vm5211, %v5208
    %5274 = vst.msk [vmem:[%s9 + $0x1f0] sm:$0xff] %vm5211, %v5209
    %5275 = vst.msk [vmem:[%s9 + $0x1f8] sm:$0xff] %vm5211, %v5210
    // Predicated region
    $region42: #{tpu_custom_call.1} parent=1 // pred_check
      _
    $region43: #{tpu_custom_call.1} parent=1 // pred_check_branch
      %5277 = sbr.rel (0) target = $region45
    $region44: #{tpu_custom_call.1} parent=1 // pred_region
      _
    $region45: #{tpu_custom_call.1} parent=1 // pred_fallthru
      _
    // Predicated region
    $region46: #{tpu_custom_call.1} parent=1 // pred_check
      _
    $region47: #{tpu_custom_call.1} parent=1 // pred_check_branch
      %5279 = sbr.rel (0) target = $region49
    $region48: #{tpu_custom_call.1} parent=1 // pred_region
      _
    $region49: #{tpu_custom_call.1} parent=1 // pred_fallthru
      _
    %5280 = vsyncpa [#allocation4], 1

</llo_original>
